<compile_context>
chip_gen: v6e
topology: v6e:2x2x1
jax: 0.10.0
libtpu: 0.0.40
codegen_flags: <defaults>
</compile_context>

<pallas_src>
import jax
import jax.numpy as jnp
import numpy as np
from jax.experimental import pallas as pl
from jax.experimental.pallas import tpu as pltpu

EPS = 1e-5      # PyTorch BatchNorm2d default eps
LANE = 128      # TPU lane width


def _round_up(x, m):
    return (x + m - 1) // m * m


# ----------------------------------------------------------------------------
# Fused BasicBlock kernel body:
#   conv1(3x3,stride s)+BN1+ReLU -> VMEM scratch -> conv2(3x3)+BN2
#   + residual (identity add OR fused 1x1 downsample conv+BN) + ReLU
# ----------------------------------------------------------------------------
def _basic_block_kernel(n_inputs, plan1, Ho, Wo, residual_mode):
    """plan1: 9 entries (input_ref_index, row_off, col_off) for conv1 taps.
    residual_mode: 'add' (identity, separate padded residual input) or
                   'matmul' (1x1 downsample conv, weights as an extra input,
                   activations taken from the (1,1)-parity conv1 input)."""

    def kernel(*refs):
        i = 0
        x_refs = refs[i:i + n_inputs]; i += n_inputs
        w1_ref = refs[i]; i += 1         # (9, Cin,  Cpad) bf16, BN1 folded
        b1_ref = refs[i]; i += 1         # (1, Cpad) f32 folded BN1 bias
        w2_ref = refs[i]; i += 1         # (9, Cpad, Cpad) bf16, BN2 folded
        b2_ref = refs[i]; i += 1         # (1, Cpad) f32 folded BN2(+BNd) bias
        res_ref = wd_ref = None
        if residual_mode == "add":
            res_ref = refs[i]; i += 1    # (Ho, Wo, Cpad) bf16 identity residual
        else:
            wd_ref = refs[i]; i += 1     # (Cin, Cpad) bf16 1x1 conv + BN folded
        o_ref = refs[i]; i += 1          # (Ho, Wo, Cpad) f32
        mid_ref = refs[i]                # VMEM scratch (Ho+2, Wo+2, Cpad) bf16

        cpad = o_ref.shape[-1]

        # ---- conv1: 9 shifted bf16 MXU dots, f32 accumulation --------------
        acc1 = jnp.zeros((Ho * Wo, cpad), jnp.float32)
        for t, (ri, oi, oj) in enumerate(plan1):
            slab = x_refs[ri][oi:oi + Ho, oj:oj + Wo, :]
            acc1 = acc1 + jnp.dot(slab.reshape(Ho * Wo, slab.shape[-1]),
                                  w1_ref[t],
                                  preferred_element_type=jnp.float32)
        acc1 = jnp.maximum(acc1 + b1_ref[...], 0.0)     # BN1 bias + ReLU

        # Stash conv1 result spatially padded in VMEM (never leaves the chip).
        # Zero the whole buffer (cheap, a few hundred cycles) so the halo is
        # valid on every grid step / every core.
        mid_ref[...] = jnp.zeros_like(mid_ref)
        mid_ref[1:Ho + 1, 1:Wo + 1, :] = (
            acc1.reshape(Ho, Wo, cpad).astype(mid_ref.dtype))

        # ---- conv2 (3x3, stride 1) ------------------------------------------
        acc2 = jnp.zeros((Ho * Wo, cpad), jnp.float32)
        for ki in range(3):
            for kj in range(3):
                slab = mid_ref[ki:ki + Ho, kj:kj + Wo, :]
                acc2 = acc2 + jnp.dot(slab.reshape(Ho * Wo, cpad),
                                      w2_ref[3 * ki + kj],
                                      preferred_element_type=jnp.float32)
        acc2 = acc2 + b2_ref[...]                        # folded BN2 (+BNd) bias

        # ---- residual ---------------------------------------------------------
        if residual_mode == "matmul":
            # x[::2, ::2, :] == (1,1)-parity slice already resident in VMEM.
            xs = x_refs[3][0:Ho, 0:Wo, :]
            acc2 = acc2 + jnp.dot(xs.reshape(Ho * Wo, xs.shape[-1]),
                                  wd_ref[...],
                                  preferred_element_type=jnp.float32)
        else:
            acc2 = acc2 + (res_ref[...]
                           .reshape(Ho * Wo, cpad).astype(jnp.float32))

        o_ref[...] = jnp.maximum(acc2, 0.0).reshape(Ho, Wo, cpad)

    return kernel


# ----------------------------------------------------------------------------
# BasicBlock forward (Pallas)
# ----------------------------------------------------------------------------
def basic_block_pallas(x_nchw, params, stride):
    x = jnp.transpose(x_nchw, (0, 2, 3, 1)).astype(jnp.float32)   # NHWC
    N, H, W, Cin = x.shape
    Cout = params["w1"].shape[0]
    Cpad = _round_up(Cout, LANE)

    Ho = (H + 2 - 3) // stride + 1
    Wo = (W + 2 - 3) // stride + 1

    # ---- fold BN (eval mode) into conv weights / bias ----------------------
    def fold(w_oihw, bn):
        scale = bn["gamma"] * jax.lax.rsqrt(bn["rvar"] + EPS)
        bias = bn["beta"] - bn["rmean"] * scale
        return w_oihw * scale[:, None, None, None], bias

    def taps_3x3(w_oihw, cin_pad=None):
        cout_, cin_ = w_oihw.shape[:2]
        wt = jnp.transpose(w_oihw, (2, 3, 1, 0)).reshape(9, cin_, cout_)
        if cin_pad is not None and cin_pad > cin_:
            wt = jnp.pad(wt, ((0, 0), (0, cin_pad - cin_), (0, 0)))
        wt = jnp.pad(wt, ((0, 0), (0, 0), (0, Cpad - cout_)))
        return wt.astype(jnp.bfloat16)

    def pad_bias(b):
        return (jnp.pad(b, (0, Cpad - b.shape[0]))
                .astype(jnp.float32).reshape(1, Cpad))

    w1f, b1 = fold(params["w1"], params["bn1"])
    w2f, b2 = fold(params["w2"], params["bn2"])
    w1_taps = taps_3x3(w1f)                       # (9, Cin,  Cpad) bf16
    w2_taps = taps_3x3(w2f, cin_pad=Cpad)         # (9, Cpad, Cpad) bf16
    bias1 = pad_bias(b1)

    x_pad = jnp.pad(x, ((0, 0), (1, 1), (1, 1), (0, 0))).astype(jnp.bfloat16)

    extra_args = []
    extra_specs = []
    if stride == 1:
        assert Cin == Cout, "stride=1 requires in_channels == out_channels"
        conv1_inputs = [x_pad]
        plan1 = [(0, ki, kj) for ki in range(3) for kj in range(3)]
        residual_mode = "add"
        bias2 = pad_bias(b2)
        # identity residual, channel-padded so the add stays lane-dense
        res = jnp.pad(x, ((0, 0), (0, 0), (0, 0),
                          (0, Cpad - Cout))).astype(jnp.bfloat16)
        extra_args = [res]
        extra_specs = [pl.BlockSpec((None, Ho, Wo, Cpad),
                                    lambda n: (n, 0, 0, 0))]
    elif stride == 2:
        assert H % 2 == 0 and W % 2 == 0, "stride=2 path assumes even H, W"
        # Parity decomposition: total HBM bytes == padded input, no duplication.
        conv1_inputs = [x_pad[:, p::2, q::2, :]
                        for p in range(2) for q in range(2)]
        plan1 = [((ki % 2) * 2 + (kj % 2), ki // 2, kj // 2)
                 for ki in range(3) for kj in range(3)]
        residual_mode = "matmul"
        wdf, bd = fold(params["wd"], params["bnd"])
        wd_mm = jnp.pad(wdf[:, :, 0, 0].T,
                        ((0, 0), (0, Cpad - Cout))).astype(jnp.bfloat16)
        bias2 = pad_bias(b2 + bd)                 # combine bn2 + bnd biases
        extra_args = [wd_mm]
        extra_specs = [pl.BlockSpec(wd_mm.shape, lambda n: (0, 0))]
    else:
        raise NotImplementedError("BasicBlock strides are 1 or 2")

    in_specs = []
    args = []
    for xi in conv1_inputs:
        _, Hi, Wi, Ci = xi.shape
        in_specs.append(pl.BlockSpec((None, Hi, Wi, Ci),
                                     lambda n: (n, 0, 0, 0)))
        args.append(xi)
    in_specs.append(pl.BlockSpec(w1_taps.shape, lambda n: (0, 0, 0)))
    args.append(w1_taps)
    in_specs.append(pl.BlockSpec(bias1.shape, lambda n: (0, 0)))
    args.append(bias1)
    in_specs.append(pl.BlockSpec(w2_taps.shape, lambda n: (0, 0, 0)))
    args.append(w2_taps)
    in_specs.append(pl.BlockSpec(bias2.shape, lambda n: (0, 0)))
    args.append(bias2)
    in_specs.extend(extra_specs)
    args.extend(extra_args)

    kernel = _basic_block_kernel(len(conv1_inputs), plan1, Ho, Wo,
                                 residual_mode)

    out = pl.pallas_call(
        kernel,
        out_shape=jax.ShapeDtypeStruct((N, Ho, Wo, Cpad), jnp.float32),
        grid=(N,),
        in_specs=in_specs,
        out_specs=pl.BlockSpec((None, Ho, Wo, Cpad), lambda n: (n, 0, 0, 0)),
        scratch_shapes=[pltpu.VMEM((Ho + 2, Wo + 2, Cpad), jnp.bfloat16)],
        compiler_params=pltpu.CompilerParams(
            dimension_semantics=("parallel",),      # batch shards across TCs
            vmem_limit_bytes=48 * 1024 * 1024,      # safe on v5e/v6e/v7x
        ),
    )(*args)

    out = out[..., :Cout]                           # drop lane padding (zeros)
    return jnp.transpose(out, (0, 3, 1, 2))         # back to NCHW


# ----------------------------------------------------------------------------
# Plain-JAX reference (NCHW, eval-mode BN) for correctness checking
# ----------------------------------------------------------------------------
def _conv_ref(x, w, stride, pad):
    return jax.lax.conv_general_dilated(
        x, w, (stride, stride), [(pad, pad), (pad, pad)],
        dimension_numbers=("NCHW", "OIHW", "NCHW"))


def _bn_ref(x, gamma, beta, rmean, rvar):
    s = (gamma / jnp.sqrt(rvar + EPS))[None, :, None, None]
    return (x - rmean[None, :, None, None]) * s + beta[None, :, None, None]


def basic_block_ref(x, params, stride):
    out = _conv_ref(x, params["w1"], stride, 1)
    out = jax.nn.relu(_bn_ref(out, **params["bn1"]))
    out = _conv_ref(out, params["w2"], 1, 1)
    out = _bn_ref(out, **params["bn2"])
    if stride > 1:
        res = _conv_ref(x, params["wd"], stride, 0)
        res = _bn_ref(res, **params["bnd"])
    else:
        res = x
    return jax.nn.relu(out + res)


# ----------------------------------------------------------------------------
# Deterministic parameter initialization
# ----------------------------------------------------------------------------
def init_basic_block_params(key, cin, cout, stride):
    ks = jax.random.split(key, 16)

    def bn_params(k0, k1, k2, k3, c):
        return dict(
            gamma=jax.random.uniform(k0, (c,), jnp.float32, 0.5, 1.5),
            beta=jax.random.normal(k1, (c,), jnp.float32) * 0.1,
            rmean=jax.random.normal(k2, (c,), jnp.float32) * 0.1,
            rvar=jax.random.uniform(k3, (c,), jnp.float32, 0.5, 1.5),
        )

    p = {
        "w1": jax.random.normal(ks[0], (cout, cin, 3, 3), jnp.float32) * 0.1,
        "bn1": bn_params(ks[1], ks[2], ks[3], ks[4], cout),
        "w2": jax.random.normal(ks[5], (cout, cout, 3, 3), jnp.float32) * 0.1,
        "bn2": bn_params(ks[6], ks[7], ks[8], ks[9], cout),
    }
    if stride > 1:
        p["wd"] = jax.random.normal(ks[10], (cout, cin, 1, 1), jnp.float32) * 0.1
        p["bnd"] = bn_params(ks[11], ks[12], ks[13], ks[14], cout)
    return p


def _round_params_to_bf16(params):
    # Round conv weights to bf16 (and back) so the f32 reference sees the same
    # operand rounding as the bf16 MXU path; remaining differences are purely
    # accumulation-order / intermediate-storage effects.
    p = dict(params)
    for k in ("w1", "w2", "wd"):
        if k in p:
            p[k] = p[k].astype(jnp.bfloat16).astype(jnp.float32)
    return p


if __name__ == "__main__":
    fwd = jax.jit(basic_block_pallas, static_argnums=(2,))

    # Case 1: stride=2 with fused 1x1 downsample residual (the "hard" path).
    key = jax.random.PRNGKey(0)
    kx, kp1, kp2 = jax.random.split(key, 3)
    N, Cin, H, W = 2, 4, 16, 16
    Cout, stride = 8, 2
    x = jax.random.normal(kx, (N, Cin, H, W), jnp.float32)
    x = x.astype(jnp.bfloat16).astype(jnp.float32)
    params = _round_params_to_bf16(init_basic_block_params(kp1, Cin, Cout, stride))

    out = jax.block_until_ready(fwd(x, params, stride))
    ref = jax.block_until_ready(basic_block_ref(x, params, stride))
    assert out.shape == (N, Cout, H // stride, W // stride)
    np.testing.assert_allclose(np.asarray(out), np.asarray(ref),
                               rtol=1e-2, atol=1e-2)

    # Case 2: stride=1 identity residual.
    C2 = 8
    x2 = jax.random.normal(jax.random.PRNGKey(1), (N, C2, H, W), jnp.float32)
    x2 = x2.astype(jnp.bfloat16).astype(jnp.float32)
    params2 = _round_params_to_bf16(init_basic_block_params(kp2, C2, C2, 1))

    out2 = jax.block_until_ready(fwd(x2, params2, 1))
    ref2 = jax.block_until_ready(basic_block_ref(x2, params2, 1))
    assert out2.shape == (N, C2, H, W)
    np.testing.assert_allclose(np.asarray(out2), np.asarray(ref2),
                               rtol=1e-2, atol=1e-2)

    print("KERNEL_OK")
</pallas_src>

<mosaic_0001>
module attributes {stable_mosaic.version = 11 : i64} {
  func.func @kernel(%arg0: i32, %arg1: memref<1x9x9x4xbf16, #tpu.memory_space<vmem>>, %arg2: memref<1x9x9x4xbf16, #tpu.memory_space<vmem>>, %arg3: memref<1x9x9x4xbf16, #tpu.memory_space<vmem>>, %arg4: memref<1x9x9x4xbf16, #tpu.memory_space<vmem>>, %arg5: memref<9x4x128xbf16, #tpu.memory_space<vmem>>, %arg6: memref<1x128xf32, #tpu.memory_space<vmem>>, %arg7: memref<9x128x128xbf16, #tpu.memory_space<vmem>>, %arg8: memref<1x128xf32, #tpu.memory_space<vmem>>, %arg9: memref<4x128xbf16, #tpu.memory_space<vmem>>, %arg10: memref<1x8x8x128xf32, #tpu.memory_space<vmem>>, %arg11: memref<10x10x128xbf16, #tpu.memory_space<vmem>>) attributes {dimension_semantics = [#tpu.dimension_semantics<parallel>], iteration_bounds = array<i64: 2>, scalar_prefetch = 0 : i64, scratch_operands = 1 : i64, tpu.core_type = #tpu.core_type<tc>, window_params = [{transform_indices = @transform_0, window_bounds = array<i64: 1, 9, 9, 4>}, {transform_indices = @transform_1, window_bounds = array<i64: 1, 9, 9, 4>}, {transform_indices = @transform_2, window_bounds = array<i64: 1, 9, 9, 4>}, {transform_indices = @transform_3, window_bounds = array<i64: 1, 9, 9, 4>}, {pipeline_mode = #tpu.pipeline_mode<synchronous>, transform_indices = @transform_4, window_bounds = array<i64: 9, 4, 128>}, {pipeline_mode = #tpu.pipeline_mode<synchronous>, transform_indices = @transform_5, window_bounds = array<i64: 1, 128>}, {pipeline_mode = #tpu.pipeline_mode<synchronous>, transform_indices = @transform_6, window_bounds = array<i64: 9, 128, 128>}, {pipeline_mode = #tpu.pipeline_mode<synchronous>, transform_indices = @transform_7, window_bounds = array<i64: 1, 128>}, {pipeline_mode = #tpu.pipeline_mode<synchronous>, transform_indices = @transform_8, window_bounds = array<i64: 4, 128>}, {transform_indices = @transform_9, window_bounds = array<i64: 1, 8, 8, 128>}]} {
    %cst = arith.constant 0.000000e+00 : f32
    %0 = vector.broadcast %cst : f32 to vector<64x128xf32>
    %c0 = arith.constant 0 : index
    %c0_0 = arith.constant 0 : index
    %c0_1 = arith.constant 0 : index
    %c0_2 = arith.constant 0 : index
    %1 = vector.load %arg1[%c0, %c0_0, %c0_1, %c0_2] : memref<1x9x9x4xbf16, #tpu.memory_space<vmem>>, vector<1x8x8x4xbf16>
    %2 = vector.shape_cast %1 : vector<1x8x8x4xbf16> to vector<8x8x4xbf16>
    %3 = vector.shape_cast %2 : vector<8x8x4xbf16> to vector<64x4xbf16>
    %c0_3 = arith.constant 0 : index
    %c0_4 = arith.constant 0 : index
    %c0_5 = arith.constant 0 : index
    %4 = vector.load %arg5[%c0_3, %c0_4, %c0_5] : memref<9x4x128xbf16, #tpu.memory_space<vmem>>, vector<1x4x128xbf16>
    %5 = vector.shape_cast %4 : vector<1x4x128xbf16> to vector<4x128xbf16>
    %cst_6 = arith.constant dense<0.000000e+00> : vector<64x128xf32>
    %6 = tpu.matmul %3, %5, %cst_6 {dimension_numbers = #tpu.dot_dimension_numbers<[1], [0], [0], [1], [0, 0, 1, 1], [], []>} : vector<64x4xbf16>, vector<4x128xbf16>, vector<64x128xf32> -> vector<64x128xf32>
    %7 = arith.addf %0, %6 : vector<64x128xf32>
    %c0_7 = arith.constant 0 : index
    %c0_8 = arith.constant 0 : index
    %c0_9 = arith.constant 0 : index
    %c0_10 = arith.constant 0 : index
    %8 = vector.load %arg2[%c0_7, %c0_8, %c0_9, %c0_10] : memref<1x9x9x4xbf16, #tpu.memory_space<vmem>>, vector<1x8x8x4xbf16>
    %9 = vector.shape_cast %8 : vector<1x8x8x4xbf16> to vector<8x8x4xbf16>
    %10 = vector.shape_cast %9 : vector<8x8x4xbf16> to vector<64x4xbf16>
    %c1 = arith.constant 1 : index
    %c0_11 = arith.constant 0 : index
    %c0_12 = arith.constant 0 : index
    %11 = vector.load %arg5[%c1, %c0_11, %c0_12] : memref<9x4x128xbf16, #tpu.memory_space<vmem>>, vector<1x4x128xbf16>
    %12 = vector.shape_cast %11 : vector<1x4x128xbf16> to vector<4x128xbf16>
    %cst_13 = arith.constant dense<0.000000e+00> : vector<64x128xf32>
    %13 = tpu.matmul %10, %12, %cst_13 {dimension_numbers = #tpu.dot_dimension_numbers<[1], [0], [0], [1], [0, 0, 1, 1], [], []>} : vector<64x4xbf16>, vector<4x128xbf16>, vector<64x128xf32> -> vector<64x128xf32>
    %14 = arith.addf %7, %13 : vector<64x128xf32>
    %c0_14 = arith.constant 0 : index
    %c0_15 = arith.constant 0 : index
    %c1_16 = arith.constant 1 : index
    %c0_17 = arith.constant 0 : index
    %15 = vector.load %arg1[%c0_14, %c0_15, %c1_16, %c0_17] : memref<1x9x9x4xbf16, #tpu.memory_space<vmem>>, vector<1x8x8x4xbf16>
    %16 = vector.shape_cast %15 : vector<1x8x8x4xbf16> to vector<8x8x4xbf16>
    %17 = vector.shape_cast %16 : vector<8x8x4xbf16> to vector<64x4xbf16>
    %c2 = arith.constant 2 : index
    %c0_18 = arith.constant 0 : index
    %c0_19 = arith.constant 0 : index
    %18 = vector.load %arg5[%c2, %c0_18, %c0_19] : memref<9x4x128xbf16, #tpu.memory_space<vmem>>, vector<1x4x128xbf16>
    %19 = vector.shape_cast %18 : vector<1x4x128xbf16> to vector<4x128xbf16>
    %cst_20 = arith.constant dense<0.000000e+00> : vector<64x128xf32>
    %20 = tpu.matmul %17, %19, %cst_20 {dimension_numbers = #tpu.dot_dimension_numbers<[1], [0], [0], [1], [0, 0, 1, 1], [], []>} : vector<64x4xbf16>, vector<4x128xbf16>, vector<64x128xf32> -> vector<64x128xf32>
    %21 = arith.addf %14, %20 : vector<64x128xf32>
    %c0_21 = arith.constant 0 : index
    %c0_22 = arith.constant 0 : index
    %c0_23 = arith.constant 0 : index
    %c0_24 = arith.constant 0 : index
    %22 = vector.load %arg3[%c0_21, %c0_22, %c0_23, %c0_24] : memref<1x9x9x4xbf16, #tpu.memory_space<vmem>>, vector<1x8x8x4xbf16>
    %23 = vector.shape_cast %22 : vector<1x8x8x4xbf16> to vector<8x8x4xbf16>
    %24 = vector.shape_cast %23 : vector<8x8x4xbf16> to vector<64x4xbf16>
    %c3 = arith.constant 3 : index
    %c0_25 = arith.constant 0 : index
    %c0_26 = arith.constant 0 : index
    %25 = vector.load %arg5[%c3, %c0_25, %c0_26] : memref<9x4x128xbf16, #tpu.memory_space<vmem>>, vector<1x4x128xbf16>
    %26 = vector.shape_cast %25 : vector<1x4x128xbf16> to vector<4x128xbf16>
    %cst_27 = arith.constant dense<0.000000e+00> : vector<64x128xf32>
    %27 = tpu.matmul %24, %26, %cst_27 {dimension_numbers = #tpu.dot_dimension_numbers<[1], [0], [0], [1], [0, 0, 1, 1], [], []>} : vector<64x4xbf16>, vector<4x128xbf16>, vector<64x128xf32> -> vector<64x128xf32>
    %28 = arith.addf %21, %27 : vector<64x128xf32>
    %c0_28 = arith.constant 0 : index
    %c0_29 = arith.constant 0 : index
    %c0_30 = arith.constant 0 : index
    %c0_31 = arith.constant 0 : index
    %29 = vector.load %arg4[%c0_28, %c0_29, %c0_30, %c0_31] : memref<1x9x9x4xbf16, #tpu.memory_space<vmem>>, vector<1x8x8x4xbf16>
    %30 = vector.shape_cast %29 : vector<1x8x8x4xbf16> to vector<8x8x4xbf16>
    %31 = vector.shape_cast %30 : vector<8x8x4xbf16> to vector<64x4xbf16>
    %c4 = arith.constant 4 : index
    %c0_32 = arith.constant 0 : index
    %c0_33 = arith.constant 0 : index
    %32 = vector.load %arg5[%c4, %c0_32, %c0_33] : memref<9x4x128xbf16, #tpu.memory_space<vmem>>, vector<1x4x128xbf16>
    %33 = vector.shape_cast %32 : vector<1x4x128xbf16> to vector<4x128xbf16>
    %cst_34 = arith.constant dense<0.000000e+00> : vector<64x128xf32>
    %34 = tpu.matmul %31, %33, %cst_34 {dimension_numbers = #tpu.dot_dimension_numbers<[1], [0], [0], [1], [0, 0, 1, 1], [], []>} : vector<64x4xbf16>, vector<4x128xbf16>, vector<64x128xf32> -> vector<64x128xf32>
    %35 = arith.addf %28, %34 : vector<64x128xf32>
    %c0_35 = arith.constant 0 : index
    %c0_36 = arith.constant 0 : index
    %c1_37 = arith.constant 1 : index
    %c0_38 = arith.constant 0 : index
    %36 = vector.load %arg3[%c0_35, %c0_36, %c1_37, %c0_38] : memref<1x9x9x4xbf16, #tpu.memory_space<vmem>>, vector<1x8x8x4xbf16>
    %37 = vector.shape_cast %36 : vector<1x8x8x4xbf16> to vector<8x8x4xbf16>
    %38 = vector.shape_cast %37 : vector<8x8x4xbf16> to vector<64x4xbf16>
    %c5 = arith.constant 5 : index
    %c0_39 = arith.constant 0 : index
    %c0_40 = arith.constant 0 : index
    %39 = vector.load %arg5[%c5, %c0_39, %c0_40] : memref<9x4x128xbf16, #tpu.memory_space<vmem>>, vector<1x4x128xbf16>
    %40 = vector.shape_cast %39 : vector<1x4x128xbf16> to vector<4x128xbf16>
    %cst_41 = arith.constant dense<0.000000e+00> : vector<64x128xf32>
    %41 = tpu.matmul %38, %40, %cst_41 {dimension_numbers = #tpu.dot_dimension_numbers<[1], [0], [0], [1], [0, 0, 1, 1], [], []>} : vector<64x4xbf16>, vector<4x128xbf16>, vector<64x128xf32> -> vector<64x128xf32>
    %42 = arith.addf %35, %41 : vector<64x128xf32>
    %c0_42 = arith.constant 0 : index
    %c1_43 = arith.constant 1 : index
    %c0_44 = arith.constant 0 : index
    %c0_45 = arith.constant 0 : index
    %43 = vector.load %arg1[%c0_42, %c1_43, %c0_44, %c0_45] : memref<1x9x9x4xbf16, #tpu.memory_space<vmem>>, vector<1x8x8x4xbf16>
    %44 = vector.shape_cast %43 : vector<1x8x8x4xbf16> to vector<8x8x4xbf16>
    %45 = vector.shape_cast %44 : vector<8x8x4xbf16> to vector<64x4xbf16>
    %c6 = arith.constant 6 : index
    %c0_46 = arith.constant 0 : index
    %c0_47 = arith.constant 0 : index
    %46 = vector.load %arg5[%c6, %c0_46, %c0_47] : memref<9x4x128xbf16, #tpu.memory_space<vmem>>, vector<1x4x128xbf16>
    %47 = vector.shape_cast %46 : vector<1x4x128xbf16> to vector<4x128xbf16>
    %cst_48 = arith.constant dense<0.000000e+00> : vector<64x128xf32>
    %48 = tpu.matmul %45, %47, %cst_48 {dimension_numbers = #tpu.dot_dimension_numbers<[1], [0], [0], [1], [0, 0, 1, 1], [], []>} : vector<64x4xbf16>, vector<4x128xbf16>, vector<64x128xf32> -> vector<64x128xf32>
    %49 = arith.addf %42, %48 : vector<64x128xf32>
    %c0_49 = arith.constant 0 : index
    %c1_50 = arith.constant 1 : index
    %c0_51 = arith.constant 0 : index
    %c0_52 = arith.constant 0 : index
    %50 = vector.load %arg2[%c0_49, %c1_50, %c0_51, %c0_52] : memref<1x9x9x4xbf16, #tpu.memory_space<vmem>>, vector<1x8x8x4xbf16>
    %51 = vector.shape_cast %50 : vector<1x8x8x4xbf16> to vector<8x8x4xbf16>
    %52 = vector.shape_cast %51 : vector<8x8x4xbf16> to vector<64x4xbf16>
    %c7 = arith.constant 7 : index
    %c0_53 = arith.constant 0 : index
    %c0_54 = arith.constant 0 : index
    %53 = vector.load %arg5[%c7, %c0_53, %c0_54] : memref<9x4x128xbf16, #tpu.memory_space<vmem>>, vector<1x4x128xbf16>
    %54 = vector.shape_cast %53 : vector<1x4x128xbf16> to vector<4x128xbf16>
    %cst_55 = arith.constant dense<0.000000e+00> : vector<64x128xf32>
    %55 = tpu.matmul %52, %54, %cst_55 {dimension_numbers = #tpu.dot_dimension_numbers<[1], [0], [0], [1], [0, 0, 1, 1], [], []>} : vector<64x4xbf16>, vector<4x128xbf16>, vector<64x128xf32> -> vector<64x128xf32>
    %56 = arith.addf %49, %55 : vector<64x128xf32>
    %c0_56 = arith.constant 0 : index
    %c1_57 = arith.constant 1 : index
    %c1_58 = arith.constant 1 : index
    %c0_59 = arith.constant 0 : index
    %57 = vector.load %arg1[%c0_56, %c1_57, %c1_58, %c0_59] : memref<1x9x9x4xbf16, #tpu.memory_space<vmem>>, vector<1x8x8x4xbf16>
    %58 = vector.shape_cast %57 : vector<1x8x8x4xbf16> to vector<8x8x4xbf16>
    %59 = vector.shape_cast %58 : vector<8x8x4xbf16> to vector<64x4xbf16>
    %c8 = arith.constant 8 : index
    %c0_60 = arith.constant 0 : index
    %c0_61 = arith.constant 0 : index
    %60 = vector.load %arg5[%c8, %c0_60, %c0_61] : memref<9x4x128xbf16, #tpu.memory_space<vmem>>, vector<1x4x128xbf16>
    %61 = vector.shape_cast %60 : vector<1x4x128xbf16> to vector<4x128xbf16>
    %cst_62 = arith.constant dense<0.000000e+00> : vector<64x128xf32>
    %62 = tpu.matmul %59, %61, %cst_62 {dimension_numbers = #tpu.dot_dimension_numbers<[1], [0], [0], [1], [0, 0, 1, 1], [], []>} : vector<64x4xbf16>, vector<4x128xbf16>, vector<64x128xf32> -> vector<64x128xf32>
    %63 = arith.addf %56, %62 : vector<64x128xf32>
    %c0_63 = arith.constant 0 : index
    %c0_64 = arith.constant 0 : index
    %64 = vector.load %arg6[%c0_63, %c0_64] : memref<1x128xf32, #tpu.memory_space<vmem>>, vector<1x128xf32>
    %65 = vector.broadcast %64 : vector<1x128xf32> to vector<64x128xf32>
    %66 = arith.addf %63, %65 : vector<64x128xf32>
    %cst_65 = arith.constant 0.000000e+00 : f32
    %67 = vector.broadcast %cst_65 : f32 to vector<64x128xf32>
    %68 = arith.maximumf %66, %67 : vector<64x128xf32>
    %cst_66 = arith.constant 0.000000e+00 : bf16
    %69 = vector.broadcast %cst_66 : bf16 to vector<10x10x128xbf16>
    %c0_67 = arith.constant 0 : index
    %c0_68 = arith.constant 0 : index
    %c0_69 = arith.constant 0 : index
    %70 = vector.load %arg11[%c0_67, %c0_68, %c0_69] : memref<10x10x128xbf16, #tpu.memory_space<vmem>>, vector<10x10x128xbf16>
    tpu.vector_store %arg11[%c0_67, %c0_68, %c0_69], %69 {strides = array<i32>} : memref<10x10x128xbf16, #tpu.memory_space<vmem>>, vector<10x10x128xbf16>,
    %71 = vector.shape_cast %68 : vector<64x128xf32> to vector<8x8x128xf32>
    %72 = arith.truncf %71 : vector<8x8x128xf32> to vector<8x8x128xbf16>
    %c1_70 = arith.constant 1 : index
    %c1_71 = arith.constant 1 : index
    %c0_72 = arith.constant 0 : index
    %73 = vector.load %arg11[%c1_70, %c1_71, %c0_72] : memref<10x10x128xbf16, #tpu.memory_space<vmem>>, vector<8x8x128xbf16>
    tpu.vector_store %arg11[%c1_70, %c1_71, %c0_72], %72 {strides = array<i32>} : memref<10x10x128xbf16, #tpu.memory_space<vmem>>, vector<8x8x128xbf16>,
    %cst_73 = arith.constant 0.000000e+00 : f32
    %74 = vector.broadcast %cst_73 : f32 to vector<64x128xf32>
    %c0_74 = arith.constant 0 : index
    %c0_75 = arith.constant 0 : index
    %c0_76 = arith.constant 0 : index
    %75 = vector.load %arg11[%c0_74, %c0_75, %c0_76] : memref<10x10x128xbf16, #tpu.memory_space<vmem>>, vector<8x8x128xbf16>
    %76 = vector.shape_cast %75 : vector<8x8x128xbf16> to vector<64x128xbf16>
    %c0_77 = arith.constant 0 : index
    %c0_78 = arith.constant 0 : index
    %c0_79 = arith.constant 0 : index
    %77 = vector.load %arg7[%c0_77, %c0_78, %c0_79] : memref<9x128x128xbf16, #tpu.memory_space<vmem>>, vector<1x128x128xbf16>
    %78 = vector.shape_cast %77 : vector<1x128x128xbf16> to vector<128x128xbf16>
    %cst_80 = arith.constant dense<0.000000e+00> : vector<64x128xf32>
    %79 = tpu.matmul %76, %78, %cst_80 {dimension_numbers = #tpu.dot_dimension_numbers<[1], [0], [0], [1], [0, 0, 1, 1], [], []>} : vector<64x128xbf16>, vector<128x128xbf16>, vector<64x128xf32> -> vector<64x128xf32>
    %80 = arith.addf %74, %79 : vector<64x128xf32>
    %c0_81 = arith.constant 0 : index
    %c1_82 = arith.constant 1 : index
    %c0_83 = arith.constant 0 : index
    %81 = vector.load %arg11[%c0_81, %c1_82, %c0_83] : memref<10x10x128xbf16, #tpu.memory_space<vmem>>, vector<8x8x128xbf16>
    %82 = vector.shape_cast %81 : vector<8x8x128xbf16> to vector<64x128xbf16>
    %c1_84 = arith.constant 1 : index
    %c0_85 = arith.constant 0 : index
    %c0_86 = arith.constant 0 : index
    %83 = vector.load %arg7[%c1_84, %c0_85, %c0_86] : memref<9x128x128xbf16, #tpu.memory_space<vmem>>, vector<1x128x128xbf16>
    %84 = vector.shape_cast %83 : vector<1x128x128xbf16> to vector<128x128xbf16>
    %cst_87 = arith.constant dense<0.000000e+00> : vector<64x128xf32>
    %85 = tpu.matmul %82, %84, %cst_87 {dimension_numbers = #tpu.dot_dimension_numbers<[1], [0], [0], [1], [0, 0, 1, 1], [], []>} : vector<64x128xbf16>, vector<128x128xbf16>, vector<64x128xf32> -> vector<64x128xf32>
    %86 = arith.addf %80, %85 : vector<64x128xf32>
    %c0_88 = arith.constant 0 : index
    %c2_89 = arith.constant 2 : index
    %c0_90 = arith.constant 0 : index
    %87 = vector.load %arg11[%c0_88, %c2_89, %c0_90] : memref<10x10x128xbf16, #tpu.memory_space<vmem>>, vector<8x8x128xbf16>
    %88 = vector.shape_cast %87 : vector<8x8x128xbf16> to vector<64x128xbf16>
    %c2_91 = arith.constant 2 : index
    %c0_92 = arith.constant 0 : index
    %c0_93 = arith.constant 0 : index
    %89 = vector.load %arg7[%c2_91, %c0_92, %c0_93] : memref<9x128x128xbf16, #tpu.memory_space<vmem>>, vector<1x128x128xbf16>
    %90 = vector.shape_cast %89 : vector<1x128x128xbf16> to vector<128x128xbf16>
    %cst_94 = arith.constant dense<0.000000e+00> : vector<64x128xf32>
    %91 = tpu.matmul %88, %90, %cst_94 {dimension_numbers = #tpu.dot_dimension_numbers<[1], [0], [0], [1], [0, 0, 1, 1], [], []>} : vector<64x128xbf16>, vector<128x128xbf16>, vector<64x128xf32> -> vector<64x128xf32>
    %92 = arith.addf %86, %91 : vector<64x128xf32>
    %c1_95 = arith.constant 1 : index
    %c0_96 = arith.constant 0 : index
    %c0_97 = arith.constant 0 : index
    %93 = vector.load %arg11[%c1_95, %c0_96, %c0_97] : memref<10x10x128xbf16, #tpu.memory_space<vmem>>, vector<8x8x128xbf16>
    %94 = vector.shape_cast %93 : vector<8x8x128xbf16> to vector<64x128xbf16>
    %c3_98 = arith.constant 3 : index
    %c0_99 = arith.constant 0 : index
    %c0_100 = arith.constant 0 : index
    %95 = vector.load %arg7[%c3_98, %c0_99, %c0_100] : memref<9x128x128xbf16, #tpu.memory_space<vmem>>, vector<1x128x128xbf16>
    %96 = vector.shape_cast %95 : vector<1x128x128xbf16> to vector<128x128xbf16>
    %cst_101 = arith.constant dense<0.000000e+00> : vector<64x128xf32>
    %97 = tpu.matmul %94, %96, %cst_101 {dimension_numbers = #tpu.dot_dimension_numbers<[1], [0], [0], [1], [0, 0, 1, 1], [], []>} : vector<64x128xbf16>, vector<128x128xbf16>, vector<64x128xf32> -> vector<64x128xf32>
    %98 = arith.addf %92, %97 : vector<64x128xf32>
    %c1_102 = arith.constant 1 : index
    %c1_103 = arith.constant 1 : index
    %c0_104 = arith.constant 0 : index
    %99 = vector.load %arg11[%c1_102, %c1_103, %c0_104] : memref<10x10x128xbf16, #tpu.memory_space<vmem>>, vector<8x8x128xbf16>
    %100 = vector.shape_cast %99 : vector<8x8x128xbf16> to vector<64x128xbf16>
    %c4_105 = arith.constant 4 : index
    %c0_106 = arith.constant 0 : index
    %c0_107 = arith.constant 0 : index
    %101 = vector.load %arg7[%c4_105, %c0_106, %c0_107] : memref<9x128x128xbf16, #tpu.memory_space<vmem>>, vector<1x128x128xbf16>
    %102 = vector.shape_cast %101 : vector<1x128x128xbf16> to vector<128x128xbf16>
    %cst_108 = arith.constant dense<0.000000e+00> : vector<64x128xf32>
    %103 = tpu.matmul %100, %102, %cst_108 {dimension_numbers = #tpu.dot_dimension_numbers<[1], [0], [0], [1], [0, 0, 1, 1], [], []>} : vector<64x128xbf16>, vector<128x128xbf16>, vector<64x128xf32> -> vector<64x128xf32>
    %104 = arith.addf %98, %103 : vector<64x128xf32>
    %c1_109 = arith.constant 1 : index
    %c2_110 = arith.constant 2 : index
    %c0_111 = arith.constant 0 : index
    %105 = vector.load %arg11[%c1_109, %c2_110, %c0_111] : memref<10x10x128xbf16, #tpu.memory_space<vmem>>, vector<8x8x128xbf16>
    %106 = vector.shape_cast %105 : vector<8x8x128xbf16> to vector<64x128xbf16>
    %c5_112 = arith.constant 5 : index
    %c0_113 = arith.constant 0 : index
    %c0_114 = arith.constant 0 : index
    %107 = vector.load %arg7[%c5_112, %c0_113, %c0_114] : memref<9x128x128xbf16, #tpu.memory_space<vmem>>, vector<1x128x128xbf16>
    %108 = vector.shape_cast %107 : vector<1x128x128xbf16> to vector<128x128xbf16>
    %cst_115 = arith.constant dense<0.000000e+00> : vector<64x128xf32>
    %109 = tpu.matmul %106, %108, %cst_115 {dimension_numbers = #tpu.dot_dimension_numbers<[1], [0], [0], [1], [0, 0, 1, 1], [], []>} : vector<64x128xbf16>, vector<128x128xbf16>, vector<64x128xf32> -> vector<64x128xf32>
    %110 = arith.addf %104, %109 : vector<64x128xf32>
    %c2_116 = arith.constant 2 : index
    %c0_117 = arith.constant 0 : index
    %c0_118 = arith.constant 0 : index
    %111 = vector.load %arg11[%c2_116, %c0_117, %c0_118] : memref<10x10x128xbf16, #tpu.memory_space<vmem>>, vector<8x8x128xbf16>
    %112 = vector.shape_cast %111 : vector<8x8x128xbf16> to vector<64x128xbf16>
    %c6_119 = arith.constant 6 : index
    %c0_120 = arith.constant 0 : index
    %c0_121 = arith.constant 0 : index
    %113 = vector.load %arg7[%c6_119, %c0_120, %c0_121] : memref<9x128x128xbf16, #tpu.memory_space<vmem>>, vector<1x128x128xbf16>
    %114 = vector.shape_cast %113 : vector<1x128x128xbf16> to vector<128x128xbf16>
    %cst_122 = arith.constant dense<0.000000e+00> : vector<64x128xf32>
    %115 = tpu.matmul %112, %114, %cst_122 {dimension_numbers = #tpu.dot_dimension_numbers<[1], [0], [0], [1], [0, 0, 1, 1], [], []>} : vector<64x128xbf16>, vector<128x128xbf16>, vector<64x128xf32> -> vector<64x128xf32>
    %116 = arith.addf %110, %115 : vector<64x128xf32>
    %c2_123 = arith.constant 2 : index
    %c1_124 = arith.constant 1 : index
    %c0_125 = arith.constant 0 : index
    %117 = vector.load %arg11[%c2_123, %c1_124, %c0_125] : memref<10x10x128xbf16, #tpu.memory_space<vmem>>, vector<8x8x128xbf16>
    %118 = vector.shape_cast %117 : vector<8x8x128xbf16> to vector<64x128xbf16>
    %c7_126 = arith.constant 7 : index
    %c0_127 = arith.constant 0 : index
    %c0_128 = arith.constant 0 : index
    %119 = vector.load %arg7[%c7_126, %c0_127, %c0_128] : memref<9x128x128xbf16, #tpu.memory_space<vmem>>, vector<1x128x128xbf16>
    %120 = vector.shape_cast %119 : vector<1x128x128xbf16> to vector<128x128xbf16>
    %cst_129 = arith.constant dense<0.000000e+00> : vector<64x128xf32>
    %121 = tpu.matmul %118, %120, %cst_129 {dimension_numbers = #tpu.dot_dimension_numbers<[1], [0], [0], [1], [0, 0, 1, 1], [], []>} : vector<64x128xbf16>, vector<128x128xbf16>, vector<64x128xf32> -> vector<64x128xf32>
    %122 = arith.addf %116, %121 : vector<64x128xf32>
    %c2_130 = arith.constant 2 : index
    %c2_131 = arith.constant 2 : index
    %c0_132 = arith.constant 0 : index
    %123 = vector.load %arg11[%c2_130, %c2_131, %c0_132] : memref<10x10x128xbf16, #tpu.memory_space<vmem>>, vector<8x8x128xbf16>
    %124 = vector.shape_cast %123 : vector<8x8x128xbf16> to vector<64x128xbf16>
    %c8_133 = arith.constant 8 : index
    %c0_134 = arith.constant 0 : index
    %c0_135 = arith.constant 0 : index
    %125 = vector.load %arg7[%c8_133, %c0_134, %c0_135] : memref<9x128x128xbf16, #tpu.memory_space<vmem>>, vector<1x128x128xbf16>
    %126 = vector.shape_cast %125 : vector<1x128x128xbf16> to vector<128x128xbf16>
    %cst_136 = arith.constant dense<0.000000e+00> : vector<64x128xf32>
    %127 = tpu.matmul %124, %126, %cst_136 {dimension_numbers = #tpu.dot_dimension_numbers<[1], [0], [0], [1], [0, 0, 1, 1], [], []>} : vector<64x128xbf16>, vector<128x128xbf16>, vector<64x128xf32> -> vector<64x128xf32>
    %128 = arith.addf %122, %127 : vector<64x128xf32>
    %c0_137 = arith.constant 0 : index
    %c0_138 = arith.constant 0 : index
    %129 = vector.load %arg8[%c0_137, %c0_138] : memref<1x128xf32, #tpu.memory_space<vmem>>, vector<1x128xf32>
    %130 = vector.broadcast %129 : vector<1x128xf32> to vector<64x128xf32>
    %131 = arith.addf %128, %130 : vector<64x128xf32>
    %c0_139 = arith.constant 0 : index
    %c0_140 = arith.constant 0 : index
    %c0_141 = arith.constant 0 : index
    %c0_142 = arith.constant 0 : index
    %132 = vector.load %arg4[%c0_139, %c0_140, %c0_141, %c0_142] : memref<1x9x9x4xbf16, #tpu.memory_space<vmem>>, vector<1x8x8x4xbf16>
    %133 = vector.shape_cast %132 : vector<1x8x8x4xbf16> to vector<8x8x4xbf16>
    %134 = vector.shape_cast %133 : vector<8x8x4xbf16> to vector<64x4xbf16>
    %c0_143 = arith.constant 0 : index
    %c0_144 = arith.constant 0 : index
    %135 = vector.load %arg9[%c0_143, %c0_144] : memref<4x128xbf16, #tpu.memory_space<vmem>>, vector<4x128xbf16>
    %cst_145 = arith.constant dense<0.000000e+00> : vector<64x128xf32>
    %136 = tpu.matmul %134, %135, %cst_145 {dimension_numbers = #tpu.dot_dimension_numbers<[1], [0], [0], [1], [0, 0, 1, 1], [], []>} : vector<64x4xbf16>, vector<4x128xbf16>, vector<64x128xf32> -> vector<64x128xf32>
    %137 = arith.addf %131, %136 : vector<64x128xf32>
    %cst_146 = arith.constant 0.000000e+00 : f32
    %138 = vector.broadcast %cst_146 : f32 to vector<64x128xf32>
    %139 = arith.maximumf %137, %138 : vector<64x128xf32>
    %140 = vector.shape_cast %139 : vector<64x128xf32> to vector<8x8x128xf32>
    %c0_147 = arith.constant 0 : index
    %c0_148 = arith.constant 0 : index
    %c0_149 = arith.constant 0 : index
    %c0_150 = arith.constant 0 : index
    %141 = vector.load %arg10[%c0_147, %c0_148, %c0_149, %c0_150] : memref<1x8x8x128xf32, #tpu.memory_space<vmem>>, vector<1x8x8x128xf32>
    %142 = vector.shape_cast %141 : vector<1x8x8x128xf32> to vector<8x8x128xf32>
    %143 = vector.shape_cast %140 : vector<8x8x128xf32> to vector<1x8x8x128xf32>
    tpu.vector_store %arg10[%c0_147, %c0_148, %c0_149, %c0_150], %143 {strides = array<i32>} : memref<1x8x8x128xf32, #tpu.memory_space<vmem>>, vector<1x8x8x128xf32>,
    return
  }
  func.func @transform_0(%arg0: i32) -> (i32, i32, i32, i32) {
    %c0_i32 = arith.constant 0 : i32
    %c0_i32_0 = arith.constant 0 : i32
    %c0_i32_1 = arith.constant 0 : i32
    %c0_i32_2 = arith.constant 0 : i32
    return %arg0, %c0_i32, %c0_i32_0, %c0_i32_1 : i32, i32, i32, i32
  }
  func.func @transform_1(%arg0: i32) -> (i32, i32, i32, i32) {
    %c0_i32 = arith.constant 0 : i32
    %c0_i32_0 = arith.constant 0 : i32
    %c0_i32_1 = arith.constant 0 : i32
    %c0_i32_2 = arith.constant 0 : i32
    return %arg0, %c0_i32, %c0_i32_0, %c0_i32_1 : i32, i32, i32, i32
  }
  func.func @transform_2(%arg0: i32) -> (i32, i32, i32, i32) {
    %c0_i32 = arith.constant 0 : i32
    %c0_i32_0 = arith.constant 0 : i32
    %c0_i32_1 = arith.constant 0 : i32
    %c0_i32_2 = arith.constant 0 : i32
    return %arg0, %c0_i32, %c0_i32_0, %c0_i32_1 : i32, i32, i32, i32
  }
  func.func @transform_3(%arg0: i32) -> (i32, i32, i32, i32) {
    %c0_i32 = arith.constant 0 : i32
    %c0_i32_0 = arith.constant 0 : i32
    %c0_i32_1 = arith.constant 0 : i32
    %c0_i32_2 = arith.constant 0 : i32
    return %arg0, %c0_i32, %c0_i32_0, %c0_i32_1 : i32, i32, i32, i32
  }
  func.func @transform_4(%arg0: i32) -> (i32, i32, i32) {
    %c0_i32 = arith.constant 0 : i32
    %c0_i32_0 = arith.constant 0 : i32
    %c0_i32_1 = arith.constant 0 : i32
    %c0_i32_2 = arith.constant 0 : i32
    return %c0_i32, %c0_i32_0, %c0_i32_1 : i32, i32, i32
  }
  func.func @transform_5(%arg0: i32) -> (i32, i32) {
    %c0_i32 = arith.constant 0 : i32
    %c0_i32_0 = arith.constant 0 : i32
    %c0_i32_1 = arith.constant 0 : i32
    return %c0_i32, %c0_i32_0 : i32, i32
  }
  func.func @transform_6(%arg0: i32) -> (i32, i32, i32) {
    %c0_i32 = arith.constant 0 : i32
    %c0_i32_0 = arith.constant 0 : i32
    %c0_i32_1 = arith.constant 0 : i32
    %c0_i32_2 = arith.constant 0 : i32
    return %c0_i32, %c0_i32_0, %c0_i32_1 : i32, i32, i32
  }
  func.func @transform_7(%arg0: i32) -> (i32, i32) {
    %c0_i32 = arith.constant 0 : i32
    %c0_i32_0 = arith.constant 0 : i32
    %c0_i32_1 = arith.constant 0 : i32
    return %c0_i32, %c0_i32_0 : i32, i32
  }
  func.func @transform_8(%arg0: i32) -> (i32, i32) {
    %c0_i32 = arith.constant 0 : i32
    %c0_i32_0 = arith.constant 0 : i32
    %c0_i32_1 = arith.constant 0 : i32
    return %c0_i32, %c0_i32_0 : i32, i32
  }
  func.func @transform_9(%arg0: i32) -> (i32, i32, i32, i32) {
    %c0_i32 = arith.constant 0 : i32
    %c0_i32_0 = arith.constant 0 : i32
    %c0_i32_1 = arith.constant 0 : i32
    %c0_i32_2 = arith.constant 0 : i32
    return %arg0, %c0_i32, %c0_i32_0, %c0_i32_1 : i32, i32, i32, i32
  }
}

</mosaic_0001>

<llo_original>
// kernel: basic_block_pallas.1
$region0: #{basic_block_pallas.1}
  #allocation0 [shape = 'u32[]', space=smem, size = 0x4, offset = 0x4, fixed_abs, tag = 'smem constant byte address 0x4 - core index']
  #allocation1 [shape = 'u32[144,128]{1,0:T(1,128)}', space=vmem, size = 0x12000, scoped, tag = 'internal scratch']
  #allocation2 [shape = 'bf16[10,10,128]{2,1,0:T(8,128)(2,1)}', space=vmem, size = 0xa000, scoped, tag = 'scratch operand']
  %s0 = inlined_call_operand.vmem [shape: bf16[2,9,9,4], index: 0, kind: input, shape index: {}]
  %s1 = inlined_call_operand.vmem [shape: bf16[2,9,9,4], index: 1, kind: input, shape index: {}]
  %s2 = inlined_call_operand.vmem [shape: bf16[2,9,9,4], index: 2, kind: input, shape index: {}]
  %s3 = inlined_call_operand.vmem [shape: bf16[2,9,9,4], index: 3, kind: input, shape index: {}]
  %s4 = inlined_call_operand.vmem [shape: bf16[9,4,128], index: 4, kind: input, shape index: {}]
  %s5 = inlined_call_operand.vmem [shape: f32[1,128], index: 5, kind: input, shape index: {}]
  %s6 = inlined_call_operand.vmem [shape: bf16[9,128,128], index: 6, kind: input, shape index: {}]
  %s7 = inlined_call_operand.vmem [shape: f32[1,128], index: 7, kind: input, shape index: {}]
  %s8 = inlined_call_operand.vmem [shape: bf16[4,128], index: 8, kind: input, shape index: {}]
  %s9 = inlined_call_operand.vmem [shape: f32[2,8,8,128], index: 9, kind: output, shape index: {}]
  %s10 = sld [smem:[#allocation0]]
  $region69: #{basic_block_pallas.1} parent=0
    _
  %s12 = ssub.s32 1, %s10
  %s13 = scalar_select 0, %s12, %s10
  loop: start=0, step=1, limit=4
  $region2: #{basic_block_pallas.1} parent=0 // loop_pre_header
    _
  $region3: #{basic_block_pallas.1} parent=0 // loop_header
    %s15 = sphi 0, %s19
    %p16 = scmp.ge.s32.totalorder %s15, 4
    %s25 = sphi 0, %s27
    %s28 = sphi 0, %s25
    %s29 = sphi 0, %s28
    %s45 = sphi 0, %s29
    %s51 = sphi 0, %s53
    %s54 = sphi 0, %s51
    %s55 = sphi 0, %s54
    %s71 = sphi 0, %s55
    %s77 = sphi 0, %s79
    %s80 = sphi 0, %s77
    %s81 = sphi 0, %s80
    %s97 = sphi 0, %s81
    %s103 = sphi 0, %s105
    %s106 = sphi 0, %s103
    %s107 = sphi 0, %s106
    %s123 = sphi 0, %s107
    %s127 = sphi 0, %s127
    %s129 = sphi 0, %s127
    %s130 = sphi 0, %s129
    %s144 = sphi 0, %s130
    %s148 = sphi 0, %s148
    %s150 = sphi 0, %s148
    %s151 = sphi 0, %s150
    %s165 = sphi 0, %s151
    %s169 = sphi 0, %s169
    %s171 = sphi 0, %s169
    %s172 = sphi 0, %s171
    %s186 = sphi 0, %s172
    %s190 = sphi 0, %s190
    %s192 = sphi 0, %s190
    %s193 = sphi 0, %s192
    %s207 = sphi 0, %s193
    %s211 = sphi 0, %s211
    %s213 = sphi 0, %s211
    %s214 = sphi 0, %s213
    %s228 = sphi 0, %s214
    %s234 = sphi 0, %s236
    %s237 = sphi 0, %s234
    %s238 = sphi 0, %s237
    %s254 = sphi 0, %s238
  $region4: #{basic_block_pallas.1} parent=0 // loop_header_branch
    %18 = sbr.rel (%p16) target = $region8
  $region5: #{basic_block_pallas.1} parent=0 // loop_body
    %s20 = ssub.s32 %s15, 1
    %s21 = ssub.s32 %s15, 2
    %s22 = sadd.s32 %s15, 1
    %s23 = ssub.s32 %s15, %s22
    %p24 = scmp.eq.s32.totalorder %s23, 0
    %s26 = sadd.s32 %s25, 1
    %s27 = scalar_select %p24, %s25, %s26
    %p30 = pneg %p24
    %p31 = scmp.eq.s32.totalorder %s15, 1
    %p32 = por %p30, %p31
    %p33 = scmp.ne.s32.totalorder %s25, %s28
    %p34 = scmp.eq.s32.totalorder %s15, 0
    %p35 = por %p33, %p34
    %p36 = scmp.ne.s32.totalorder %s25, %s28
    %p37 = scmp.eq.s32.totalorder %s20, 1
    %p38 = por %p36, %p37
    %p39 = scmp.ne.s32.totalorder %s28, %s29
    %p40 = scmp.eq.s32.totalorder %s20, 0
    %p41 = por %p39, %p40
    %p42 = scmp.ne.s32.totalorder %s28, %s29
    %p43 = scmp.eq.s32.totalorder %s21, 1
    %p44 = por %p42, %p43
    %p46 = scmp.ne.s32.totalorder %s29, %s45
    %p47 = scmp.eq.s32.totalorder %s21, 0
    %p48 = por %p46, %p47
    %s49 = ssub.s32 %s15, %s22
    %p50 = scmp.eq.s32.totalorder %s49, 0
    %s52 = sadd.s32 %s51, 1
    %s53 = scalar_select %p50, %s51, %s52
    %p56 = pneg %p50
    %p57 = scmp.eq.s32.totalorder %s15, 1
    %p58 = por %p56, %p57
    %p59 = scmp.ne.s32.totalorder %s51, %s54
    %p60 = scmp.eq.s32.totalorder %s15, 0
    %p61 = por %p59, %p60
    %p62 = scmp.ne.s32.totalorder %s51, %s54
    %p63 = scmp.eq.s32.totalorder %s20, 1
    %p64 = por %p62, %p63
    %p65 = scmp.ne.s32.totalorder %s54, %s55
    %p66 = scmp.eq.s32.totalorder %s20, 0
    %p67 = por %p65, %p66
    %p68 = scmp.ne.s32.totalorder %s54, %s55
    %p69 = scmp.eq.s32.totalorder %s21, 1
    %p70 = por %p68, %p69
    %p72 = scmp.ne.s32.totalorder %s55, %s71
    %p73 = scmp.eq.s32.totalorder %s21, 0
    %p74 = por %p72, %p73
    %s75 = ssub.s32 %s15, %s22
    %p76 = scmp.eq.s32.totalorder %s75, 0
    %s78 = sadd.s32 %s77, 1
    %s79 = scalar_select %p76, %s77, %s78
    %p82 = pneg %p76
    %p83 = scmp.eq.s32.totalorder %s15, 1
    %p84 = por %p82, %p83
    %p85 = scmp.ne.s32.totalorder %s77, %s80
    %p86 = scmp.eq.s32.totalorder %s15, 0
    %p87 = por %p85, %p86
    %p88 = scmp.ne.s32.totalorder %s77, %s80
    %p89 = scmp.eq.s32.totalorder %s20, 1
    %p90 = por %p88, %p89
    %p91 = scmp.ne.s32.totalorder %s80, %s81
    %p92 = scmp.eq.s32.totalorder %s20, 0
    %p93 = por %p91, %p92
    %p94 = scmp.ne.s32.totalorder %s80, %s81
    %p95 = scmp.eq.s32.totalorder %s21, 1
    %p96 = por %p94, %p95
    %p98 = scmp.ne.s32.totalorder %s81, %s97
    %p99 = scmp.eq.s32.totalorder %s21, 0
    %p100 = por %p98, %p99
    %s101 = ssub.s32 %s15, %s22
    %p102 = scmp.eq.s32.totalorder %s101, 0
    %s104 = sadd.s32 %s103, 1
    %s105 = scalar_select %p102, %s103, %s104
    %p108 = pneg %p102
    %p109 = scmp.eq.s32.totalorder %s15, 1
    %p110 = por %p108, %p109
    %p111 = scmp.ne.s32.totalorder %s103, %s106
    %p112 = scmp.eq.s32.totalorder %s15, 0
    %p113 = por %p111, %p112
    %p114 = scmp.ne.s32.totalorder %s103, %s106
    %p115 = scmp.eq.s32.totalorder %s20, 1
    %p116 = por %p114, %p115
    %p117 = scmp.ne.s32.totalorder %s106, %s107
    %p118 = scmp.eq.s32.totalorder %s20, 0
    %p119 = por %p117, %p118
    %p120 = scmp.ne.s32.totalorder %s106, %s107
    %p121 = scmp.eq.s32.totalorder %s21, 1
    %p122 = por %p120, %p121
    %p124 = scmp.ne.s32.totalorder %s107, %s123
    %p125 = scmp.eq.s32.totalorder %s21, 0
    %p126 = por %p124, %p125
    %s128 = sadd.s32 %s127, 1
    %p131 = scmp.eq.s32.totalorder %s15, 1
    %p132 = scmp.ne.s32.totalorder %s127, %s129
    %p133 = scmp.eq.s32.totalorder %s15, 0
    %p134 = por %p132, %p133
    %p135 = scmp.ne.s32.totalorder %s127, %s129
    %p136 = scmp.eq.s32.totalorder %s20, 1
    %p137 = por %p135, %p136
    %p138 = scmp.ne.s32.totalorder %s129, %s130
    %p139 = scmp.eq.s32.totalorder %s20, 0
    %p140 = por %p138, %p139
    %p141 = scmp.ne.s32.totalorder %s129, %s130
    %p142 = scmp.eq.s32.totalorder %s21, 1
    %p143 = por %p141, %p142
    %p145 = scmp.ne.s32.totalorder %s130, %s144
    %p146 = scmp.eq.s32.totalorder %s21, 0
    %p147 = por %p145, %p146
    %s149 = sadd.s32 %s148, 1
    %p152 = scmp.eq.s32.totalorder %s15, 1
    %p153 = scmp.ne.s32.totalorder %s148, %s150
    %p154 = scmp.eq.s32.totalorder %s15, 0
    %p155 = por %p153, %p154
    %p156 = scmp.ne.s32.totalorder %s148, %s150
    %p157 = scmp.eq.s32.totalorder %s20, 1
    %p158 = por %p156, %p157
    %p159 = scmp.ne.s32.totalorder %s150, %s151
    %p160 = scmp.eq.s32.totalorder %s20, 0
    %p161 = por %p159, %p160
    %p162 = scmp.ne.s32.totalorder %s150, %s151
    %p163 = scmp.eq.s32.totalorder %s21, 1
    %p164 = por %p162, %p163
    %p166 = scmp.ne.s32.totalorder %s151, %s165
    %p167 = scmp.eq.s32.totalorder %s21, 0
    %p168 = por %p166, %p167
    %s170 = sadd.s32 %s169, 1
    %p173 = scmp.eq.s32.totalorder %s15, 1
    %p174 = scmp.ne.s32.totalorder %s169, %s171
    %p175 = scmp.eq.s32.totalorder %s15, 0
    %p176 = por %p174, %p175
    %p177 = scmp.ne.s32.totalorder %s169, %s171
    %p178 = scmp.eq.s32.totalorder %s20, 1
    %p179 = por %p177, %p178
    %p180 = scmp.ne.s32.totalorder %s171, %s172
    %p181 = scmp.eq.s32.totalorder %s20, 0
    %p182 = por %p180, %p181
    %p183 = scmp.ne.s32.totalorder %s171, %s172
    %p184 = scmp.eq.s32.totalorder %s21, 1
    %p185 = por %p183, %p184
    %p187 = scmp.ne.s32.totalorder %s172, %s186
    %p188 = scmp.eq.s32.totalorder %s21, 0
    %p189 = por %p187, %p188
    %s191 = sadd.s32 %s190, 1
    %p194 = scmp.eq.s32.totalorder %s15, 1
    %p195 = scmp.ne.s32.totalorder %s190, %s192
    %p196 = scmp.eq.s32.totalorder %s15, 0
    %p197 = por %p195, %p196
    %p198 = scmp.ne.s32.totalorder %s190, %s192
    %p199 = scmp.eq.s32.totalorder %s20, 1
    %p200 = por %p198, %p199
    %p201 = scmp.ne.s32.totalorder %s192, %s193
    %p202 = scmp.eq.s32.totalorder %s20, 0
    %p203 = por %p201, %p202
    %p204 = scmp.ne.s32.totalorder %s192, %s193
    %p205 = scmp.eq.s32.totalorder %s21, 1
    %p206 = por %p204, %p205
    %p208 = scmp.ne.s32.totalorder %s193, %s207
    %p209 = scmp.eq.s32.totalorder %s21, 0
    %p210 = por %p208, %p209
    %s212 = sadd.s32 %s211, 1
    %p215 = scmp.eq.s32.totalorder %s15, 1
    %p216 = scmp.ne.s32.totalorder %s211, %s213
    %p217 = scmp.eq.s32.totalorder %s15, 0
    %p218 = por %p216, %p217
    %p219 = scmp.ne.s32.totalorder %s211, %s213
    %p220 = scmp.eq.s32.totalorder %s20, 1
    %p221 = por %p219, %p220
    %p222 = scmp.ne.s32.totalorder %s213, %s214
    %p223 = scmp.eq.s32.totalorder %s20, 0
    %p224 = por %p222, %p223
    %p225 = scmp.ne.s32.totalorder %s213, %s214
    %p226 = scmp.eq.s32.totalorder %s21, 1
    %p227 = por %p225, %p226
    %p229 = scmp.ne.s32.totalorder %s214, %s228
    %p230 = scmp.eq.s32.totalorder %s21, 0
    %p231 = por %p229, %p230
    %s232 = ssub.s32 %s15, %s22
    %p233 = scmp.eq.s32.totalorder %s232, 0
    %s235 = sadd.s32 %s234, 1
    %s236 = scalar_select %p233, %s234, %s235
    %p239 = pneg %p233
    %p240 = scmp.eq.s32.totalorder %s15, 1
    %p241 = por %p239, %p240
    %p242 = scmp.ne.s32.totalorder %s234, %s237
    %p243 = scmp.eq.s32.totalorder %s15, 0
    %p244 = por %p242, %p243
    %p245 = scmp.ne.s32.totalorder %s234, %s237
    %p246 = scmp.eq.s32.totalorder %s20, 1
    %p247 = por %p245, %p246
    %p248 = scmp.ne.s32.totalorder %s237, %s238
    %p249 = scmp.eq.s32.totalorder %s20, 0
    %p250 = por %p248, %p249
    %p251 = scmp.ne.s32.totalorder %s237, %s238
    %p252 = scmp.eq.s32.totalorder %s21, 1
    %p253 = por %p251, %p252
    %p255 = scmp.ne.s32.totalorder %s238, %s254
    %p256 = scmp.eq.s32.totalorder %s21, 0
    %p257 = por %p255, %p256
    %p258 = scmp.le.s32.totalorder 1, %s15
    %p259 = scmp.lt.s32.totalorder %s15, 3
    %p260 = pnand %p258, %p259
    %p261 = pneg %p260
    // Predicated region
    $region9: #{basic_block_pallas.1} parent=5 // pred_check
      _
    $region10: #{basic_block_pallas.1} parent=5 // pred_check_branch
      %263 = sbr.rel (%p260) target = $region12
    $region11: #{basic_block_pallas.1} parent=5 // pred_region
      %s264 = ssub.s32 %s15, 1
      // Predicated region
      $region13: #{basic_block_pallas.1} parent=11 // pred_check
        %p265 = pneg %p140
      $region14: #{basic_block_pallas.1} parent=11 // pred_check_branch
        %267 = sbr.rel (%p265) target = $region16
      $region15: #{basic_block_pallas.1} parent=11 // pred_region
        _
      $region16: #{basic_block_pallas.1} parent=11 // pred_fallthru
        _
      // Predicated region
      $region17: #{basic_block_pallas.1} parent=11 // pred_check
        %p268 = pneg %p161
      $region18: #{basic_block_pallas.1} parent=11 // pred_check_branch
        %270 = sbr.rel (%p268) target = $region20
      $region19: #{basic_block_pallas.1} parent=11 // pred_region
        _
      $region20: #{basic_block_pallas.1} parent=11 // pred_fallthru
        _
      // Predicated region
      $region21: #{basic_block_pallas.1} parent=11 // pred_check
        %p271 = pneg %p182
      $region22: #{basic_block_pallas.1} parent=11 // pred_check_branch
        %273 = sbr.rel (%p271) target = $region24
      $region23: #{basic_block_pallas.1} parent=11 // pred_region
        _
      $region24: #{basic_block_pallas.1} parent=11 // pred_fallthru
        _
      // Predicated region
      $region25: #{basic_block_pallas.1} parent=11 // pred_check
        %p274 = pneg %p203
      $region26: #{basic_block_pallas.1} parent=11 // pred_check_branch
        %276 = sbr.rel (%p274) target = $region28
      $region27: #{basic_block_pallas.1} parent=11 // pred_region
        _
      $region28: #{basic_block_pallas.1} parent=11 // pred_fallthru
        _
      // Predicated region
      $region29: #{basic_block_pallas.1} parent=11 // pred_check
        %p277 = pneg %p224
      $region30: #{basic_block_pallas.1} parent=11 // pred_check_branch
        %279 = sbr.rel (%p277) target = $region32
      $region31: #{basic_block_pallas.1} parent=11 // pred_region
        _
      $region32: #{basic_block_pallas.1} parent=11 // pred_fallthru
        _
    $region12: #{basic_block_pallas.1} parent=5 // pred_fallthru
      _
    %p280 = scmp.lt.s32.totalorder %s15, 2
    // Predicated region
    $region33: #{basic_block_pallas.1} parent=5 // pred_check
      %p281 = pneg %p280
    $region34: #{basic_block_pallas.1} parent=5 // pred_check_branch
      %283 = sbr.rel (%p281) target = $region36
    $region35: #{basic_block_pallas.1} parent=5 // pred_region
      // Predicated region
      $region37: #{basic_block_pallas.1} parent=35 // pred_check
        %p284 = pneg %p35
      $region38: #{basic_block_pallas.1} parent=35 // pred_check_branch
        %286 = sbr.rel (%p284) target = $region40
      $region39: #{basic_block_pallas.1} parent=35 // pred_region
        %p287 = scmp.lt.s32.totalorder %s15, 1
        %s288 = scalar_select %p287, %s15, 1
        %s289 = smul.addr %s288, 18
        %s290 = smul.addr %s289, 4
        %s291 = scalar_lea.vmem %s0, %s290
      $region40: #{basic_block_pallas.1} parent=35 // pred_fallthru
        _
      // Predicated region
      $region41: #{basic_block_pallas.1} parent=35 // pred_check
        %p292 = pneg %p61
      $region42: #{basic_block_pallas.1} parent=35 // pred_check_branch
        %294 = sbr.rel (%p292) target = $region44
      $region43: #{basic_block_pallas.1} parent=35 // pred_region
        %p295 = scmp.lt.s32.totalorder %s15, 1
        %s296 = scalar_select %p295, %s15, 1
        %s297 = smul.addr %s296, 18
        %s298 = smul.addr %s297, 4
        %s299 = scalar_lea.vmem %s1, %s298
      $region44: #{basic_block_pallas.1} parent=35 // pred_fallthru
        _
      // Predicated region
      $region45: #{basic_block_pallas.1} parent=35 // pred_check
        %p300 = pneg %p87
      $region46: #{basic_block_pallas.1} parent=35 // pred_check_branch
        %302 = sbr.rel (%p300) target = $region48
      $region47: #{basic_block_pallas.1} parent=35 // pred_region
        %p303 = scmp.lt.s32.totalorder %s15, 1
        %s304 = scalar_select %p303, %s15, 1
        %s305 = smul.addr %s304, 18
        %s306 = smul.addr %s305, 4
        %s307 = scalar_lea.vmem %s2, %s306
      $region48: #{basic_block_pallas.1} parent=35 // pred_fallthru
        _
      // Predicated region
      $region49: #{basic_block_pallas.1} parent=35 // pred_check
        %p308 = pneg %p113
      $region50: #{basic_block_pallas.1} parent=35 // pred_check_branch
        %310 = sbr.rel (%p308) target = $region52
      $region51: #{basic_block_pallas.1} parent=35 // pred_region
        %p311 = scmp.lt.s32.totalorder %s15, 1
        %s312 = scalar_select %p311, %s15, 1
        %s313 = smul.addr %s312, 18
        %s314 = smul.addr %s313, 4
        %s315 = scalar_lea.vmem %s3, %s314
      $region52: #{basic_block_pallas.1} parent=35 // pred_fallthru
        _
    $region36: #{basic_block_pallas.1} parent=5 // pred_fallthru
      _
    %p316 = scmp.le.s32.totalorder 1, %s15
    %p317 = scmp.lt.s32.totalorder %s15, 3
    %p318 = pnand %p316, %p317
    %p319 = pneg %p318
    // Predicated region
    $region53: #{basic_block_pallas.1} parent=5 // pred_check
      _
    $region54: #{basic_block_pallas.1} parent=5 // pred_check_branch
      %321 = sbr.rel (%p318) target = $region56
    $region55: #{basic_block_pallas.1} parent=5 // pred_region
      %s322 = ssub.s32 %s15, 1
      %p323 = scmp.lt.s32.totalorder %s20, 1
      %s324 = scalar_select %p323, %s20, 1
      %s325 = smul.addr %s324, 18
      %s326 = smul.addr %s325, 4
      %s327 = scalar_lea.vmem %s0, %s326
      %p328 = pneg %p41
      %p329 = pneg %p38
      %p330 = scmp.lt.s32.totalorder %s20, 1
      %s331 = scalar_select %p330, %s20, 1
      %s332 = smul.addr %s331, 18
      %s333 = smul.addr %s332, 4
      %s334 = scalar_lea.vmem %s1, %s333
      %p335 = pneg %p67
      %p336 = pneg %p64
      %p337 = scmp.lt.s32.totalorder %s20, 1
      %s338 = scalar_select %p337, %s20, 1
      %s339 = smul.addr %s338, 18
      %s340 = smul.addr %s339, 4
      %s341 = scalar_lea.vmem %s2, %s340
      %p342 = pneg %p93
      %p343 = pneg %p90
      %p344 = scmp.lt.s32.totalorder %s20, 1
      %s345 = scalar_select %p344, %s20, 1
      %s346 = smul.addr %s345, 18
      %s347 = smul.addr %s346, 4
      %s348 = scalar_lea.vmem %s3, %s347
      %p349 = pneg %p119
      %p350 = pneg %p116
      %p351 = pneg %p140
      %p352 = pneg %p137
      %p353 = pneg %p161
      %p354 = pneg %p158
      %p355 = pneg %p182
      %p356 = pneg %p179
      %p357 = pneg %p203
      %p358 = pneg %p200
      %p359 = pneg %p224
      %p360 = pneg %p221
      %p361 = pneg %p250
      %p362 = pneg %p247
      %p363 = scmp.lt.s32.totalorder %s20, 1
      %s364 = scalar_select %p363, %s20, 1
      %s365 = smul.addr %s364, 8
      %s366 = smul.addr %s365, 8
      %s367 = scalar_lea.vmem %s9, %s366
      %p368 = scmp.lt.s32.totalorder %s20, 1
      %s369 = scalar_select %p368, %s20, 1
      %s370 = smul.addr %s369, 18
      %s371 = smul.addr %s370, 4
      %s372 = scalar_lea.vmem %s0, %s371
      %p373 = scmp.lt.s32.totalorder %s20, 1
      %s374 = scalar_select %p373, %s20, 1
      %s375 = smul.addr %s374, 18
      %s376 = smul.addr %s375, 4
      %s377 = scalar_lea.vmem %s1, %s376
      %p378 = scmp.lt.s32.totalorder %s20, 1
      %s379 = scalar_select %p378, %s20, 1
      %s380 = smul.addr %s379, 18
      %s381 = smul.addr %s380, 4
      %s382 = scalar_lea.vmem %s2, %s381
      %p383 = scmp.lt.s32.totalorder %s20, 1
      %s384 = scalar_select %p383, %s20, 1
      %s385 = smul.addr %s384, 18
      %s386 = smul.addr %s385, 4
      %s387 = scalar_lea.vmem %s3, %s386
      %p388 = scmp.lt.s32.totalorder %s20, 1
      %s389 = scalar_select %p388, %s20, 1
      %s390 = smul.addr %s389, 8
      %s391 = smul.addr %s390, 8
      %s392 = scalar_lea.vmem %s9, %s391
      %v394 = vld [vmem:[%s372] sm:$0xf]
      %v395 = vld [vmem:[%s372 + $0x8] sm:$0xf]
      %v396 = vld [vmem:[%s372 + $0x10] sm:$0xf]
      %v397 = vld [vmem:[%s372 + $0x18] sm:$0xf]
      %v398 = vld [vmem:[%s372 + $0x20] sm:$0xf]
      %v399 = vld [vmem:[%s372 + $0x28] sm:$0xf]
      %v400 = vld [vmem:[%s372 + $0x30] sm:$0xf]
      %v401 = vld [vmem:[%s372 + $0x38] sm:$0xf]
      %v402 = vld [vmem:[%s4] sm:$0x3]
      %v403 = vld [vmem:[%s377] sm:$0xf]
      %v404 = vld [vmem:[%s377 + $0x8] sm:$0xf]
      %v405 = vld [vmem:[%s377 + $0x10] sm:$0xf]
      %v406 = vld [vmem:[%s377 + $0x18] sm:$0xf]
      %v407 = vld [vmem:[%s377 + $0x20] sm:$0xf]
      %v408 = vld [vmem:[%s377 + $0x28] sm:$0xf]
      %v409 = vld [vmem:[%s377 + $0x30] sm:$0xf]
      %v410 = vld [vmem:[%s377 + $0x38] sm:$0xf]
      %s411 = scalar_lea.vmem %s4, 2
      %v412 = vld [vmem:[%s411] sm:$0x3]
      %v421 = vunpack.c.l.b16 %v403
      %v422 = vunpack.c.l.b16 %v404
      %v423 = vunpack.c.l.b16 %v405
      %v424 = vunpack.c.l.b16 %v406
      %v425 = vunpack.c.l.b16 %v407
      %v426 = vunpack.c.l.b16 %v408
      %v427 = vunpack.c.l.b16 %v409
      %v428 = vunpack.c.l.b16 %v410
      %v429 = vpack.c.b16 %v422, %v421
      %v430 = vpack.c.b16 %v424, %v423
      %v431 = vpack.c.b16 %v426, %v425
      %v432 = vpack.c.b16 %v428, %v427
      %vm433 = vcmask 31744
      %v435 = vsel %vm433, %v429, 0
      %v438 = vsel %vm433, %v430, 0
      %v441 = vsel %vm433, %v431, 0
      %v444 = vsel %vm433, %v432, 0
      %vm446 = vcmask 1041408
      %v448 = vsel %vm446, %v412, 0
      %450 = vmatprep.subr.bf16.mxu0 0
      %451 = vmatpush1.bf16.msra.mxu0 0
      %452 = vmatprep.subr.bf16.mxu0 0
      %453 = vmatpush1.bf16.msra.mxu0 0
      %454 = vmatprep.subr.bf16.mxu0 0
      %455 = vmatpush1.bf16.msra.mxu0 0
      %456 = vmatprep.subr.bf16.mxu0 0
      %457 = vmatpush1.bf16.msra.mxu0 0
      %458 = vmatprep.subr.bf16.mxu0 0
      %459 = vmatpush1.bf16.msra.mxu0 0
      %460 = vmatprep.subr.bf16.mxu0 0
      %461 = vmatpush1.bf16.msra.mxu0 0
      %462 = vmatprep.subr.bf16.mxu0 0
      %463 = vmatpush1.bf16.msra.mxu0 0
      %464 = vmatprep.subr.bf16.mxu0 0
      %465 = vmatpush1.bf16.msra.mxu0 %v448
      %466 = vmatprep.subr.bf16.mxu0 0
      %467 = vmatpush2.bf16.msra.mxu0 0
      %468 = vmatprep.subr.bf16.mxu0 0
      %469 = vmatpush2.bf16.msra.mxu0 0
      %470 = vmatprep.subr.bf16.mxu0 0
      %471 = vmatpush2.bf16.msra.mxu0 0
      %472 = vmatprep.subr.bf16.mxu0 0
      %473 = vmatpush2.bf16.msra.mxu0 0
      %474 = vmatprep.subr.bf16.mxu0 0
      %475 = vmatpush2.bf16.msra.mxu0 0
      %476 = vmatprep.subr.bf16.mxu0 0
      %477 = vmatpush2.bf16.msra.mxu0 0
      %478 = vmatprep.subr.bf16.mxu0 0
      %479 = vmatpush2.bf16.msra.mxu0 0
      %480 = vmatprep.subr.bf16.mxu0 0
      %481 = vmatpush2.bf16.msra.mxu0 0
      %482 = vmatprep.mubr.bf16.mxu0 0
      %483 = vmatmul.mubr.bf16.gmra.mxu0 %v435
      %v484 = vpop.f32.mrf.mxu0
      %v485 = vadd.f32 0.0, %v484
      %v486 = vpop.f32.mrf.mxu0
      %v487 = vpop.f32.mrf.mxu0
      %v488 = vadd.f32 0.0, %v487
      %v489 = vpop.f32.mrf.mxu0
      %490 = vmatprep.mubr.bf16.mxu0 0
      %491 = vmatmul.mubr.bf16.gmra.mxu0 %v438
      %v492 = vpop.f32.mrf.mxu0
      %v493 = vadd.f32 0.0, %v492
      %v494 = vpop.f32.mrf.mxu0
      %v495 = vpop.f32.mrf.mxu0
      %v496 = vadd.f32 0.0, %v495
      %v497 = vpop.f32.mrf.mxu0
      %498 = vmatprep.mubr.bf16.mxu0 0
      %499 = vmatmul.mubr.bf16.gmra.mxu0 %v441
      %v500 = vpop.f32.mrf.mxu0
      %v501 = vadd.f32 0.0, %v500
      %v502 = vpop.f32.mrf.mxu0
      %v503 = vpop.f32.mrf.mxu0
      %v504 = vadd.f32 0.0, %v503
      %v505 = vpop.f32.mrf.mxu0
      %506 = vmatprep.mubr.bf16.mxu0 0
      %507 = vmatmul.mubr.bf16.gmra.mxu0 %v444
      %v508 = vpop.f32.mrf.mxu0
      %v509 = vadd.f32 0.0, %v508
      %v510 = vpop.f32.mrf.mxu0
      %v511 = vpop.f32.mrf.mxu0
      %v512 = vadd.f32 0.0, %v511
      %v513 = vpop.f32.mrf.mxu0
      %514 = vdwg.mxu0
      %v523 = vunpack.c.l.b16 %v394
      %v524 = vunpack.c.l.b16 %v395
      %v525 = vunpack.c.l.b16 %v396
      %v526 = vunpack.c.l.b16 %v397
      %v527 = vunpack.c.l.b16 %v398
      %v528 = vunpack.c.l.b16 %v399
      %v529 = vunpack.c.l.b16 %v400
      %v530 = vunpack.c.l.b16 %v401
      %v531 = vpack.c.b16 %v524, %v523
      %v532 = vpack.c.b16 %v526, %v525
      %v533 = vpack.c.b16 %v528, %v527
      %v534 = vpack.c.b16 %v530, %v529
      %v536 = vsel %vm433, %v531, 0
      %v539 = vsel %vm433, %v532, 0
      %v542 = vsel %vm433, %v533, 0
      %v545 = vsel %vm433, %v534, 0
      %v548 = vsel %vm446, %v402, 0
      %550 = vmatprep.subr.bf16.mxu0 0
      %551 = vmatpush1.bf16.msra.mxu0 0
      %552 = vmatprep.subr.bf16.mxu0 0
      %553 = vmatpush1.bf16.msra.mxu0 0
      %554 = vmatprep.subr.bf16.mxu0 0
      %555 = vmatpush1.bf16.msra.mxu0 0
      %556 = vmatprep.subr.bf16.mxu0 0
      %557 = vmatpush1.bf16.msra.mxu0 0
      %558 = vmatprep.subr.bf16.mxu0 0
      %559 = vmatpush1.bf16.msra.mxu0 0
      %560 = vmatprep.subr.bf16.mxu0 0
      %561 = vmatpush1.bf16.msra.mxu0 0
      %562 = vmatprep.subr.bf16.mxu0 0
      %563 = vmatpush1.bf16.msra.mxu0 0
      %564 = vmatprep.subr.bf16.mxu0 0
      %565 = vmatpush1.bf16.msra.mxu0 %v548
      %566 = vmatprep.subr.bf16.mxu0 0
      %567 = vmatpush2.bf16.msra.mxu0 0
      %568 = vmatprep.subr.bf16.mxu0 0
      %569 = vmatpush2.bf16.msra.mxu0 0
      %570 = vmatprep.subr.bf16.mxu0 0
      %571 = vmatpush2.bf16.msra.mxu0 0
      %572 = vmatprep.subr.bf16.mxu0 0
      %573 = vmatpush2.bf16.msra.mxu0 0
      %574 = vmatprep.subr.bf16.mxu0 0
      %575 = vmatpush2.bf16.msra.mxu0 0
      %576 = vmatprep.subr.bf16.mxu0 0
      %577 = vmatpush2.bf16.msra.mxu0 0
      %578 = vmatprep.subr.bf16.mxu0 0
      %579 = vmatpush2.bf16.msra.mxu0 0
      %580 = vmatprep.subr.bf16.mxu0 0
      %581 = vmatpush2.bf16.msra.mxu0 0
      %582 = vmatprep.mubr.bf16.mxu0 0
      %583 = vmatmul.mubr.bf16.gmra.mxu0 %v536
      %v584 = vpop.f32.mrf.mxu0
      %v585 = vadd.f32 %v485, %v584
      %v586 = vpop.f32.mrf.mxu0
      %v587 = vpop.f32.mrf.mxu0
      %v588 = vadd.f32 %v488, %v587
      %v589 = vpop.f32.mrf.mxu0
      %590 = vmatprep.mubr.bf16.mxu0 0
      %591 = vmatmul.mubr.bf16.gmra.mxu0 %v539
      %v592 = vpop.f32.mrf.mxu0
      %v593 = vadd.f32 %v493, %v592
      %v594 = vpop.f32.mrf.mxu0
      %v595 = vpop.f32.mrf.mxu0
      %v596 = vadd.f32 %v496, %v595
      %v597 = vpop.f32.mrf.mxu0
      %598 = vmatprep.mubr.bf16.mxu0 0
      %599 = vmatmul.mubr.bf16.gmra.mxu0 %v542
      %v600 = vpop.f32.mrf.mxu0
      %v601 = vadd.f32 %v501, %v600
      %v602 = vpop.f32.mrf.mxu0
      %v603 = vpop.f32.mrf.mxu0
      %v604 = vadd.f32 %v504, %v603
      %v605 = vpop.f32.mrf.mxu0
      %606 = vmatprep.mubr.bf16.mxu0 0
      %607 = vmatmul.mubr.bf16.gmra.mxu0 %v545
      %v608 = vpop.f32.mrf.mxu0
      %v609 = vadd.f32 %v509, %v608
      %v610 = vpop.f32.mrf.mxu0
      %v611 = vpop.f32.mrf.mxu0
      %v612 = vadd.f32 %v512, %v611
      %v613 = vpop.f32.mrf.mxu0
      %614 = vdwg.mxu0
      %v615 = vld [vmem:[%s372] sm:$0xf]
      %v616 = vld [vmem:[%s372 + $0x4] sm:$0x1]
      %v617 = vld [vmem:[%s372 + $0x8] sm:$0xf]
      %v618 = vld [vmem:[%s372 + $0xc] sm:$0x1]
      %v619 = vld [vmem:[%s372 + $0x10] sm:$0xf]
      %v620 = vld [vmem:[%s372 + $0x14] sm:$0x1]
      %v621 = vld [vmem:[%s372 + $0x18] sm:$0xf]
      %v622 = vld [vmem:[%s372 + $0x1c] sm:$0x1]
      %v623 = vld [vmem:[%s372 + $0x20] sm:$0xf]
      %v624 = vld [vmem:[%s372 + $0x24] sm:$0x1]
      %v625 = vld [vmem:[%s372 + $0x28] sm:$0xf]
      %v626 = vld [vmem:[%s372 + $0x2c] sm:$0x1]
      %v627 = vld [vmem:[%s372 + $0x30] sm:$0xf]
      %v628 = vld [vmem:[%s372 + $0x34] sm:$0x1]
      %v629 = vld [vmem:[%s372 + $0x38] sm:$0xf]
      %v630 = vld [vmem:[%s372 + $0x3c] sm:$0x1]
      %vm631 = vsmask.f32 3328
      %vm632 = vsmask.f32 7440
      %vm633 = vmor %vm631, %vm632
      %v635 = vshrl.u32 %v615, 16
      %v637 = vrot.slane %v635, 4
      %v638 = vshll.u32 %v615, 16
      %v640 = vrot.slane %v638, 5
      %v641 = vor.u32 %v637, %v640
      %v642 = vrot.slane %v641, 4
      %v644 = vshll.u32 %v616, 16
      %v646 = vrot.slane %v644, 5
      %v647 = vsel %vm633, %v642, %v646
      %v649 = vshrl.u32 %v617, 16
      %v651 = vrot.slane %v649, 4
      %v652 = vshll.u32 %v617, 16
      %v654 = vrot.slane %v652, 5
      %v655 = vor.u32 %v651, %v654
      %v656 = vrot.slane %v655, 4
      %v658 = vshll.u32 %v618, 16
      %v660 = vrot.slane %v658, 5
      %v661 = vsel %vm633, %v656, %v660
      %v663 = vshrl.u32 %v619, 16
      %v665 = vrot.slane %v663, 4
      %v666 = vshll.u32 %v619, 16
      %v668 = vrot.slane %v666, 5
      %v669 = vor.u32 %v665, %v668
      %v670 = vrot.slane %v669, 4
      %v672 = vshll.u32 %v620, 16
      %v674 = vrot.slane %v672, 5
      %v675 = vsel %vm633, %v670, %v674
      %v677 = vshrl.u32 %v621, 16
      %v679 = vrot.slane %v677, 4
      %v680 = vshll.u32 %v621, 16
      %v682 = vrot.slane %v680, 5
      %v683 = vor.u32 %v679, %v682
      %v684 = vrot.slane %v683, 4
      %v686 = vshll.u32 %v622, 16
      %v688 = vrot.slane %v686, 5
      %v689 = vsel %vm633, %v684, %v688
      %v691 = vshrl.u32 %v623, 16
      %v693 = vrot.slane %v691, 4
      %v694 = vshll.u32 %v623, 16
      %v696 = vrot.slane %v694, 5
      %v697 = vor.u32 %v693, %v696
      %v698 = vrot.slane %v697, 4
      %v700 = vshll.u32 %v624, 16
      %v702 = vrot.slane %v700, 5
      %v703 = vsel %vm633, %v698, %v702
      %v705 = vshrl.u32 %v625, 16
      %v707 = vrot.slane %v705, 4
      %v708 = vshll.u32 %v625, 16
      %v710 = vrot.slane %v708, 5
      %v711 = vor.u32 %v707, %v710
      %v712 = vrot.slane %v711, 4
      %v714 = vshll.u32 %v626, 16
      %v716 = vrot.slane %v714, 5
      %v717 = vsel %vm633, %v712, %v716
      %v719 = vshrl.u32 %v627, 16
      %v721 = vrot.slane %v719, 4
      %v722 = vshll.u32 %v627, 16
      %v724 = vrot.slane %v722, 5
      %v725 = vor.u32 %v721, %v724
      %v726 = vrot.slane %v725, 4
      %v728 = vshll.u32 %v628, 16
      %v730 = vrot.slane %v728, 5
      %v731 = vsel %vm633, %v726, %v730
      %v733 = vshrl.u32 %v629, 16
      %v735 = vrot.slane %v733, 4
      %v736 = vshll.u32 %v629, 16
      %v738 = vrot.slane %v736, 5
      %v739 = vor.u32 %v735, %v738
      %v740 = vrot.slane %v739, 4
      %v742 = vshll.u32 %v630, 16
      %v744 = vrot.slane %v742, 5
      %v745 = vsel %vm633, %v740, %v744
      %s746 = scalar_lea.vmem %s4, 4
      %v747 = vld [vmem:[%s746] sm:$0x3]
      %v748 = vunpack.c.l.b16 %v647
      %v749 = vunpack.c.l.b16 %v661
      %v750 = vunpack.c.l.b16 %v675
      %v751 = vunpack.c.l.b16 %v689
      %v752 = vunpack.c.l.b16 %v703
      %v753 = vunpack.c.l.b16 %v717
      %v754 = vunpack.c.l.b16 %v731
      %v755 = vunpack.c.l.b16 %v745
      %v756 = vpack.c.b16 %v749, %v748
      %v757 = vpack.c.b16 %v751, %v750
      %v758 = vpack.c.b16 %v753, %v752
      %v759 = vpack.c.b16 %v755, %v754
      %v761 = vsel %vm433, %v756, 0
      %v764 = vsel %vm433, %v757, 0
      %v767 = vsel %vm433, %v758, 0
      %v770 = vsel %vm433, %v759, 0
      %v773 = vsel %vm446, %v747, 0
      %775 = vmatprep.subr.bf16.mxu0 0
      %776 = vmatpush1.bf16.msra.mxu0 0
      %777 = vmatprep.subr.bf16.mxu0 0
      %778 = vmatpush1.bf16.msra.mxu0 0
      %779 = vmatprep.subr.bf16.mxu0 0
      %780 = vmatpush1.bf16.msra.mxu0 0
      %781 = vmatprep.subr.bf16.mxu0 0
      %782 = vmatpush1.bf16.msra.mxu0 0
      %783 = vmatprep.subr.bf16.mxu0 0
      %784 = vmatpush1.bf16.msra.mxu0 0
      %785 = vmatprep.subr.bf16.mxu0 0
      %786 = vmatpush1.bf16.msra.mxu0 0
      %787 = vmatprep.subr.bf16.mxu0 0
      %788 = vmatpush1.bf16.msra.mxu0 0
      %789 = vmatprep.subr.bf16.mxu0 0
      %790 = vmatpush1.bf16.msra.mxu0 %v773
      %791 = vmatprep.subr.bf16.mxu0 0
      %792 = vmatpush2.bf16.msra.mxu0 0
      %793 = vmatprep.subr.bf16.mxu0 0
      %794 = vmatpush2.bf16.msra.mxu0 0
      %795 = vmatprep.subr.bf16.mxu0 0
      %796 = vmatpush2.bf16.msra.mxu0 0
      %797 = vmatprep.subr.bf16.mxu0 0
      %798 = vmatpush2.bf16.msra.mxu0 0
      %799 = vmatprep.subr.bf16.mxu0 0
      %800 = vmatpush2.bf16.msra.mxu0 0
      %801 = vmatprep.subr.bf16.mxu0 0
      %802 = vmatpush2.bf16.msra.mxu0 0
      %803 = vmatprep.subr.bf16.mxu0 0
      %804 = vmatpush2.bf16.msra.mxu0 0
      %805 = vmatprep.subr.bf16.mxu0 0
      %806 = vmatpush2.bf16.msra.mxu0 0
      %807 = vmatprep.mubr.bf16.mxu0 0
      %808 = vmatmul.mubr.bf16.gmra.mxu0 %v761
      %v809 = vpop.f32.mrf.mxu0
      %v810 = vadd.f32 0.0, %v809
      %v811 = vpop.f32.mrf.mxu0
      %v812 = vpop.f32.mrf.mxu0
      %v813 = vadd.f32 0.0, %v812
      %v814 = vpop.f32.mrf.mxu0
      %815 = vmatprep.mubr.bf16.mxu0 0
      %816 = vmatmul.mubr.bf16.gmra.mxu0 %v764
      %v817 = vpop.f32.mrf.mxu0
      %v818 = vadd.f32 0.0, %v817
      %v819 = vpop.f32.mrf.mxu0
      %v820 = vpop.f32.mrf.mxu0
      %v821 = vadd.f32 0.0, %v820
      %v822 = vpop.f32.mrf.mxu0
      %823 = vmatprep.mubr.bf16.mxu0 0
      %824 = vmatmul.mubr.bf16.gmra.mxu0 %v767
      %v825 = vpop.f32.mrf.mxu0
      %v826 = vadd.f32 0.0, %v825
      %v827 = vpop.f32.mrf.mxu0
      %v828 = vpop.f32.mrf.mxu0
      %v829 = vadd.f32 0.0, %v828
      %v830 = vpop.f32.mrf.mxu0
      %831 = vmatprep.mubr.bf16.mxu0 0
      %832 = vmatmul.mubr.bf16.gmra.mxu0 %v770
      %v833 = vpop.f32.mrf.mxu0
      %v834 = vadd.f32 0.0, %v833
      %v835 = vpop.f32.mrf.mxu0
      %v836 = vpop.f32.mrf.mxu0
      %v837 = vadd.f32 0.0, %v836
      %v838 = vpop.f32.mrf.mxu0
      %839 = vdwg.mxu0
      %v840 = vadd.f32 %v585, %v810
      %v841 = vadd.f32 %v588, %v813
      %v842 = vadd.f32 %v593, %v818
      %v843 = vadd.f32 %v596, %v821
      %v844 = vadd.f32 %v601, %v826
      %v845 = vadd.f32 %v604, %v829
      %v846 = vadd.f32 %v609, %v834
      %v847 = vadd.f32 %v612, %v837
      %v848 = vld [vmem:[%s382] sm:$0xf]
      %v849 = vld [vmem:[%s382 + $0x8] sm:$0xf]
      %v850 = vld [vmem:[%s382 + $0x10] sm:$0xf]
      %v851 = vld [vmem:[%s382 + $0x18] sm:$0xf]
      %v852 = vld [vmem:[%s382 + $0x20] sm:$0xf]
      %v853 = vld [vmem:[%s382 + $0x28] sm:$0xf]
      %v854 = vld [vmem:[%s382 + $0x30] sm:$0xf]
      %v855 = vld [vmem:[%s382 + $0x38] sm:$0xf]
      %s856 = scalar_lea.vmem %s4, 6
      %v857 = vld [vmem:[%s856] sm:$0x3]
      %v866 = vunpack.c.l.b16 %v848
      %v867 = vunpack.c.l.b16 %v849
      %v868 = vunpack.c.l.b16 %v850
      %v869 = vunpack.c.l.b16 %v851
      %v870 = vunpack.c.l.b16 %v852
      %v871 = vunpack.c.l.b16 %v853
      %v872 = vunpack.c.l.b16 %v854
      %v873 = vunpack.c.l.b16 %v855
      %v874 = vpack.c.b16 %v867, %v866
      %v875 = vpack.c.b16 %v869, %v868
      %v876 = vpack.c.b16 %v871, %v870
      %v877 = vpack.c.b16 %v873, %v872
      %v879 = vsel %vm433, %v874, 0
      %v882 = vsel %vm433, %v875, 0
      %v885 = vsel %vm433, %v876, 0
      %v888 = vsel %vm433, %v877, 0
      %v891 = vsel %vm446, %v857, 0
      %893 = vmatprep.subr.bf16.mxu0 0
      %894 = vmatpush1.bf16.msra.mxu0 0
      %895 = vmatprep.subr.bf16.mxu0 0
      %896 = vmatpush1.bf16.msra.mxu0 0
      %897 = vmatprep.subr.bf16.mxu0 0
      %898 = vmatpush1.bf16.msra.mxu0 0
      %899 = vmatprep.subr.bf16.mxu0 0
      %900 = vmatpush1.bf16.msra.mxu0 0
      %901 = vmatprep.subr.bf16.mxu0 0
      %902 = vmatpush1.bf16.msra.mxu0 0
      %903 = vmatprep.subr.bf16.mxu0 0
      %904 = vmatpush1.bf16.msra.mxu0 0
      %905 = vmatprep.subr.bf16.mxu0 0
      %906 = vmatpush1.bf16.msra.mxu0 0
      %907 = vmatprep.subr.bf16.mxu0 0
      %908 = vmatpush1.bf16.msra.mxu0 %v891
      %909 = vmatprep.subr.bf16.mxu0 0
      %910 = vmatpush2.bf16.msra.mxu0 0
      %911 = vmatprep.subr.bf16.mxu0 0
      %912 = vmatpush2.bf16.msra.mxu0 0
      %913 = vmatprep.subr.bf16.mxu0 0
      %914 = vmatpush2.bf16.msra.mxu0 0
      %915 = vmatprep.subr.bf16.mxu0 0
      %916 = vmatpush2.bf16.msra.mxu0 0
      %917 = vmatprep.subr.bf16.mxu0 0
      %918 = vmatpush2.bf16.msra.mxu0 0
      %919 = vmatprep.subr.bf16.mxu0 0
      %920 = vmatpush2.bf16.msra.mxu0 0
      %921 = vmatprep.subr.bf16.mxu0 0
      %922 = vmatpush2.bf16.msra.mxu0 0
      %923 = vmatprep.subr.bf16.mxu0 0
      %924 = vmatpush2.bf16.msra.mxu0 0
      %925 = vmatprep.mubr.bf16.mxu0 0
      %926 = vmatmul.mubr.bf16.gmra.mxu0 %v879
      %v927 = vpop.f32.mrf.mxu0
      %v928 = vadd.f32 0.0, %v927
      %v929 = vpop.f32.mrf.mxu0
      %v930 = vpop.f32.mrf.mxu0
      %v931 = vadd.f32 0.0, %v930
      %v932 = vpop.f32.mrf.mxu0
      %933 = vmatprep.mubr.bf16.mxu0 0
      %934 = vmatmul.mubr.bf16.gmra.mxu0 %v882
      %v935 = vpop.f32.mrf.mxu0
      %v936 = vadd.f32 0.0, %v935
      %v937 = vpop.f32.mrf.mxu0
      %v938 = vpop.f32.mrf.mxu0
      %v939 = vadd.f32 0.0, %v938
      %v940 = vpop.f32.mrf.mxu0
      %941 = vmatprep.mubr.bf16.mxu0 0
      %942 = vmatmul.mubr.bf16.gmra.mxu0 %v885
      %v943 = vpop.f32.mrf.mxu0
      %v944 = vadd.f32 0.0, %v943
      %v945 = vpop.f32.mrf.mxu0
      %v946 = vpop.f32.mrf.mxu0
      %v947 = vadd.f32 0.0, %v946
      %v948 = vpop.f32.mrf.mxu0
      %949 = vmatprep.mubr.bf16.mxu0 0
      %950 = vmatmul.mubr.bf16.gmra.mxu0 %v888
      %v951 = vpop.f32.mrf.mxu0
      %v952 = vadd.f32 0.0, %v951
      %v953 = vpop.f32.mrf.mxu0
      %v954 = vpop.f32.mrf.mxu0
      %v955 = vadd.f32 0.0, %v954
      %v956 = vpop.f32.mrf.mxu0
      %957 = vdwg.mxu0
      %v958 = vadd.f32 %v840, %v928
      %v959 = vadd.f32 %v841, %v931
      %v960 = vadd.f32 %v842, %v936
      %v961 = vadd.f32 %v843, %v939
      %v962 = vadd.f32 %v844, %v944
      %v963 = vadd.f32 %v845, %v947
      %v964 = vadd.f32 %v846, %v952
      %v965 = vadd.f32 %v847, %v955
      %v966 = vld [vmem:[%s387] sm:$0xf]
      %v967 = vld [vmem:[%s387 + $0x8] sm:$0xf]
      %v968 = vld [vmem:[%s387 + $0x10] sm:$0xf]
      %v969 = vld [vmem:[%s387 + $0x18] sm:$0xf]
      %v970 = vld [vmem:[%s387 + $0x20] sm:$0xf]
      %v971 = vld [vmem:[%s387 + $0x28] sm:$0xf]
      %v972 = vld [vmem:[%s387 + $0x30] sm:$0xf]
      %v973 = vld [vmem:[%s387 + $0x38] sm:$0xf]
      %s974 = scalar_lea.vmem %s4, 8
      %v975 = vld [vmem:[%s974] sm:$0x3]
      %v984 = vunpack.c.l.b16 %v966
      %v985 = vunpack.c.l.b16 %v967
      %v986 = vunpack.c.l.b16 %v968
      %v987 = vunpack.c.l.b16 %v969
      %v988 = vunpack.c.l.b16 %v970
      %v989 = vunpack.c.l.b16 %v971
      %v990 = vunpack.c.l.b16 %v972
      %v991 = vunpack.c.l.b16 %v973
      %v992 = vpack.c.b16 %v985, %v984
      %v993 = vpack.c.b16 %v987, %v986
      %v994 = vpack.c.b16 %v989, %v988
      %v995 = vpack.c.b16 %v991, %v990
      %v997 = vsel %vm433, %v992, 0
      %v1000 = vsel %vm433, %v993, 0
      %v1003 = vsel %vm433, %v994, 0
      %v1006 = vsel %vm433, %v995, 0
      %v1009 = vsel %vm446, %v975, 0
      %1011 = vmatprep.subr.bf16.mxu0 0
      %1012 = vmatpush1.bf16.msra.mxu0 0
      %1013 = vmatprep.subr.bf16.mxu0 0
      %1014 = vmatpush1.bf16.msra.mxu0 0
      %1015 = vmatprep.subr.bf16.mxu0 0
      %1016 = vmatpush1.bf16.msra.mxu0 0
      %1017 = vmatprep.subr.bf16.mxu0 0
      %1018 = vmatpush1.bf16.msra.mxu0 0
      %1019 = vmatprep.subr.bf16.mxu0 0
      %1020 = vmatpush1.bf16.msra.mxu0 0
      %1021 = vmatprep.subr.bf16.mxu0 0
      %1022 = vmatpush1.bf16.msra.mxu0 0
      %1023 = vmatprep.subr.bf16.mxu0 0
      %1024 = vmatpush1.bf16.msra.mxu0 0
      %1025 = vmatprep.subr.bf16.mxu0 0
      %1026 = vmatpush1.bf16.msra.mxu0 %v1009
      %1027 = vmatprep.subr.bf16.mxu0 0
      %1028 = vmatpush2.bf16.msra.mxu0 0
      %1029 = vmatprep.subr.bf16.mxu0 0
      %1030 = vmatpush2.bf16.msra.mxu0 0
      %1031 = vmatprep.subr.bf16.mxu0 0
      %1032 = vmatpush2.bf16.msra.mxu0 0
      %1033 = vmatprep.subr.bf16.mxu0 0
      %1034 = vmatpush2.bf16.msra.mxu0 0
      %1035 = vmatprep.subr.bf16.mxu0 0
      %1036 = vmatpush2.bf16.msra.mxu0 0
      %1037 = vmatprep.subr.bf16.mxu0 0
      %1038 = vmatpush2.bf16.msra.mxu0 0
      %1039 = vmatprep.subr.bf16.mxu0 0
      %1040 = vmatpush2.bf16.msra.mxu0 0
      %1041 = vmatprep.subr.bf16.mxu0 0
      %1042 = vmatpush2.bf16.msra.mxu0 0
      %1043 = vmatprep.mubr.bf16.mxu0 0
      %1044 = vmatmul.mubr.bf16.gmra.mxu0 %v997
      %v1045 = vpop.f32.mrf.mxu0
      %v1046 = vadd.f32 0.0, %v1045
      %v1047 = vpop.f32.mrf.mxu0
      %v1048 = vpop.f32.mrf.mxu0
      %v1049 = vadd.f32 0.0, %v1048
      %v1050 = vpop.f32.mrf.mxu0
      %1051 = vmatprep.mubr.bf16.mxu0 0
      %1052 = vmatmul.mubr.bf16.gmra.mxu0 %v1000
      %v1053 = vpop.f32.mrf.mxu0
      %v1054 = vadd.f32 0.0, %v1053
      %v1055 = vpop.f32.mrf.mxu0
      %v1056 = vpop.f32.mrf.mxu0
      %v1057 = vadd.f32 0.0, %v1056
      %v1058 = vpop.f32.mrf.mxu0
      %1059 = vmatprep.mubr.bf16.mxu0 0
      %1060 = vmatmul.mubr.bf16.gmra.mxu0 %v1003
      %v1061 = vpop.f32.mrf.mxu0
      %v1062 = vadd.f32 0.0, %v1061
      %v1063 = vpop.f32.mrf.mxu0
      %v1064 = vpop.f32.mrf.mxu0
      %v1065 = vadd.f32 0.0, %v1064
      %v1066 = vpop.f32.mrf.mxu0
      %1067 = vmatprep.mubr.bf16.mxu0 0
      %1068 = vmatmul.mubr.bf16.gmra.mxu0 %v1006
      %v1069 = vpop.f32.mrf.mxu0
      %v1070 = vadd.f32 0.0, %v1069
      %v1071 = vpop.f32.mrf.mxu0
      %v1072 = vpop.f32.mrf.mxu0
      %v1073 = vadd.f32 0.0, %v1072
      %v1074 = vpop.f32.mrf.mxu0
      %1075 = vdwg.mxu0
      %v1076 = vadd.f32 %v958, %v1046
      %v1077 = vadd.f32 %v959, %v1049
      %v1078 = vadd.f32 %v960, %v1054
      %v1079 = vadd.f32 %v961, %v1057
      %v1080 = vadd.f32 %v962, %v1062
      %v1081 = vadd.f32 %v963, %v1065
      %v1082 = vadd.f32 %v964, %v1070
      %v1083 = vadd.f32 %v965, %v1073
      %v1084 = vld [vmem:[%s382] sm:$0xf]
      %v1085 = vld [vmem:[%s382 + $0x4] sm:$0x1]
      %v1086 = vld [vmem:[%s382 + $0x8] sm:$0xf]
      %v1087 = vld [vmem:[%s382 + $0xc] sm:$0x1]
      %v1088 = vld [vmem:[%s382 + $0x10] sm:$0xf]
      %v1089 = vld [vmem:[%s382 + $0x14] sm:$0x1]
      %v1090 = vld [vmem:[%s382 + $0x18] sm:$0xf]
      %v1091 = vld [vmem:[%s382 + $0x1c] sm:$0x1]
      %v1092 = vld [vmem:[%s382 + $0x20] sm:$0xf]
      %v1093 = vld [vmem:[%s382 + $0x24] sm:$0x1]
      %v1094 = vld [vmem:[%s382 + $0x28] sm:$0xf]
      %v1095 = vld [vmem:[%s382 + $0x2c] sm:$0x1]
      %v1096 = vld [vmem:[%s382 + $0x30] sm:$0xf]
      %v1097 = vld [vmem:[%s382 + $0x34] sm:$0x1]
      %v1098 = vld [vmem:[%s382 + $0x38] sm:$0xf]
      %v1099 = vld [vmem:[%s382 + $0x3c] sm:$0x1]
      %v1101 = vshrl.u32 %v1084, 16
      %v1103 = vrot.slane %v1101, 4
      %v1104 = vshll.u32 %v1084, 16
      %v1106 = vrot.slane %v1104, 5
      %v1107 = vor.u32 %v1103, %v1106
      %v1108 = vrot.slane %v1107, 4
      %v1110 = vshll.u32 %v1085, 16
      %v1112 = vrot.slane %v1110, 5
      %v1113 = vsel %vm633, %v1108, %v1112
      %v1115 = vshrl.u32 %v1086, 16
      %v1117 = vrot.slane %v1115, 4
      %v1118 = vshll.u32 %v1086, 16
      %v1120 = vrot.slane %v1118, 5
      %v1121 = vor.u32 %v1117, %v1120
      %v1122 = vrot.slane %v1121, 4
      %v1124 = vshll.u32 %v1087, 16
      %v1126 = vrot.slane %v1124, 5
      %v1127 = vsel %vm633, %v1122, %v1126
      %v1129 = vshrl.u32 %v1088, 16
      %v1131 = vrot.slane %v1129, 4
      %v1132 = vshll.u32 %v1088, 16
      %v1134 = vrot.slane %v1132, 5
      %v1135 = vor.u32 %v1131, %v1134
      %v1136 = vrot.slane %v1135, 4
      %v1138 = vshll.u32 %v1089, 16
      %v1140 = vrot.slane %v1138, 5
      %v1141 = vsel %vm633, %v1136, %v1140
      %v1143 = vshrl.u32 %v1090, 16
      %v1145 = vrot.slane %v1143, 4
      %v1146 = vshll.u32 %v1090, 16
      %v1148 = vrot.slane %v1146, 5
      %v1149 = vor.u32 %v1145, %v1148
      %v1150 = vrot.slane %v1149, 4
      %v1152 = vshll.u32 %v1091, 16
      %v1154 = vrot.slane %v1152, 5
      %v1155 = vsel %vm633, %v1150, %v1154
      %v1157 = vshrl.u32 %v1092, 16
      %v1159 = vrot.slane %v1157, 4
      %v1160 = vshll.u32 %v1092, 16
      %v1162 = vrot.slane %v1160, 5
      %v1163 = vor.u32 %v1159, %v1162
      %v1164 = vrot.slane %v1163, 4
      %v1166 = vshll.u32 %v1093, 16
      %v1168 = vrot.slane %v1166, 5
      %v1169 = vsel %vm633, %v1164, %v1168
      %v1171 = vshrl.u32 %v1094, 16
      %v1173 = vrot.slane %v1171, 4
      %v1174 = vshll.u32 %v1094, 16
      %v1176 = vrot.slane %v1174, 5
      %v1177 = vor.u32 %v1173, %v1176
      %v1178 = vrot.slane %v1177, 4
      %v1180 = vshll.u32 %v1095, 16
      %v1182 = vrot.slane %v1180, 5
      %v1183 = vsel %vm633, %v1178, %v1182
      %v1185 = vshrl.u32 %v1096, 16
      %v1187 = vrot.slane %v1185, 4
      %v1188 = vshll.u32 %v1096, 16
      %v1190 = vrot.slane %v1188, 5
      %v1191 = vor.u32 %v1187, %v1190
      %v1192 = vrot.slane %v1191, 4
      %v1194 = vshll.u32 %v1097, 16
      %v1196 = vrot.slane %v1194, 5
      %v1197 = vsel %vm633, %v1192, %v1196
      %v1199 = vshrl.u32 %v1098, 16
      %v1201 = vrot.slane %v1199, 4
      %v1202 = vshll.u32 %v1098, 16
      %v1204 = vrot.slane %v1202, 5
      %v1205 = vor.u32 %v1201, %v1204
      %v1206 = vrot.slane %v1205, 4
      %v1208 = vshll.u32 %v1099, 16
      %v1210 = vrot.slane %v1208, 5
      %v1211 = vsel %vm633, %v1206, %v1210
      %s1212 = scalar_lea.vmem %s4, 10
      %v1213 = vld [vmem:[%s1212] sm:$0x3]
      %v1214 = vunpack.c.l.b16 %v1113
      %v1215 = vunpack.c.l.b16 %v1127
      %v1216 = vunpack.c.l.b16 %v1141
      %v1217 = vunpack.c.l.b16 %v1155
      %v1218 = vunpack.c.l.b16 %v1169
      %v1219 = vunpack.c.l.b16 %v1183
      %v1220 = vunpack.c.l.b16 %v1197
      %v1221 = vunpack.c.l.b16 %v1211
      %v1222 = vpack.c.b16 %v1215, %v1214
      %v1223 = vpack.c.b16 %v1217, %v1216
      %v1224 = vpack.c.b16 %v1219, %v1218
      %v1225 = vpack.c.b16 %v1221, %v1220
      %v1227 = vsel %vm433, %v1222, 0
      %v1230 = vsel %vm433, %v1223, 0
      %v1233 = vsel %vm433, %v1224, 0
      %v1236 = vsel %vm433, %v1225, 0
      %v1239 = vsel %vm446, %v1213, 0
      %1241 = vmatprep.subr.bf16.mxu0 0
      %1242 = vmatpush1.bf16.msra.mxu0 0
      %1243 = vmatprep.subr.bf16.mxu0 0
      %1244 = vmatpush1.bf16.msra.mxu0 0
      %1245 = vmatprep.subr.bf16.mxu0 0
      %1246 = vmatpush1.bf16.msra.mxu0 0
      %1247 = vmatprep.subr.bf16.mxu0 0
      %1248 = vmatpush1.bf16.msra.mxu0 0
      %1249 = vmatprep.subr.bf16.mxu0 0
      %1250 = vmatpush1.bf16.msra.mxu0 0
      %1251 = vmatprep.subr.bf16.mxu0 0
      %1252 = vmatpush1.bf16.msra.mxu0 0
      %1253 = vmatprep.subr.bf16.mxu0 0
      %1254 = vmatpush1.bf16.msra.mxu0 0
      %1255 = vmatprep.subr.bf16.mxu0 0
      %1256 = vmatpush1.bf16.msra.mxu0 %v1239
      %1257 = vmatprep.subr.bf16.mxu0 0
      %1258 = vmatpush2.bf16.msra.mxu0 0
      %1259 = vmatprep.subr.bf16.mxu0 0
      %1260 = vmatpush2.bf16.msra.mxu0 0
      %1261 = vmatprep.subr.bf16.mxu0 0
      %1262 = vmatpush2.bf16.msra.mxu0 0
      %1263 = vmatprep.subr.bf16.mxu0 0
      %1264 = vmatpush2.bf16.msra.mxu0 0
      %1265 = vmatprep.subr.bf16.mxu0 0
      %1266 = vmatpush2.bf16.msra.mxu0 0
      %1267 = vmatprep.subr.bf16.mxu0 0
      %1268 = vmatpush2.bf16.msra.mxu0 0
      %1269 = vmatprep.subr.bf16.mxu0 0
      %1270 = vmatpush2.bf16.msra.mxu0 0
      %1271 = vmatprep.subr.bf16.mxu0 0
      %1272 = vmatpush2.bf16.msra.mxu0 0
      %1273 = vmatprep.mubr.bf16.mxu0 0
      %1274 = vmatmul.mubr.bf16.gmra.mxu0 %v1227
      %v1275 = vpop.f32.mrf.mxu0
      %v1276 = vadd.f32 0.0, %v1275
      %v1277 = vpop.f32.mrf.mxu0
      %v1278 = vpop.f32.mrf.mxu0
      %v1279 = vadd.f32 0.0, %v1278
      %v1280 = vpop.f32.mrf.mxu0
      %1281 = vmatprep.mubr.bf16.mxu0 0
      %1282 = vmatmul.mubr.bf16.gmra.mxu0 %v1230
      %v1283 = vpop.f32.mrf.mxu0
      %v1284 = vadd.f32 0.0, %v1283
      %v1285 = vpop.f32.mrf.mxu0
      %v1286 = vpop.f32.mrf.mxu0
      %v1287 = vadd.f32 0.0, %v1286
      %v1288 = vpop.f32.mrf.mxu0
      %1289 = vmatprep.mubr.bf16.mxu0 0
      %1290 = vmatmul.mubr.bf16.gmra.mxu0 %v1233
      %v1291 = vpop.f32.mrf.mxu0
      %v1292 = vadd.f32 0.0, %v1291
      %v1293 = vpop.f32.mrf.mxu0
      %v1294 = vpop.f32.mrf.mxu0
      %v1295 = vadd.f32 0.0, %v1294
      %v1296 = vpop.f32.mrf.mxu0
      %1297 = vmatprep.mubr.bf16.mxu0 0
      %1298 = vmatmul.mubr.bf16.gmra.mxu0 %v1236
      %v1299 = vpop.f32.mrf.mxu0
      %v1300 = vadd.f32 0.0, %v1299
      %v1301 = vpop.f32.mrf.mxu0
      %v1302 = vpop.f32.mrf.mxu0
      %v1303 = vadd.f32 0.0, %v1302
      %v1304 = vpop.f32.mrf.mxu0
      %1305 = vdwg.mxu0
      %v1306 = vadd.f32 %v1076, %v1276
      %v1307 = vadd.f32 %v1077, %v1279
      %v1308 = vadd.f32 %v1078, %v1284
      %v1309 = vadd.f32 %v1079, %v1287
      %v1310 = vadd.f32 %v1080, %v1292
      %v1311 = vadd.f32 %v1081, %v1295
      %v1312 = vadd.f32 %v1082, %v1300
      %v1313 = vadd.f32 %v1083, %v1303
      %s1314 = scalar_lea.vmem %s372, 8
      %v1315 = vld [vmem:[%s1314] sm:$0xf]
      %v1316 = vld [vmem:[%s1314 + $0x8] sm:$0xf]
      %v1317 = vld [vmem:[%s1314 + $0x10] sm:$0xf]
      %v1318 = vld [vmem:[%s1314 + $0x18] sm:$0xf]
      %v1319 = vld [vmem:[%s1314 + $0x20] sm:$0xf]
      %v1320 = vld [vmem:[%s1314 + $0x28] sm:$0xf]
      %v1321 = vld [vmem:[%s1314 + $0x30] sm:$0xf]
      %v1322 = vld [vmem:[%s1314 + $0x38] sm:$0xf]
      %s1323 = scalar_lea.vmem %s4, 12
      %v1324 = vld [vmem:[%s1323] sm:$0x3]
      %v1333 = vunpack.c.l.b16 %v1315
      %v1334 = vunpack.c.l.b16 %v1316
      %v1335 = vunpack.c.l.b16 %v1317
      %v1336 = vunpack.c.l.b16 %v1318
      %v1337 = vunpack.c.l.b16 %v1319
      %v1338 = vunpack.c.l.b16 %v1320
      %v1339 = vunpack.c.l.b16 %v1321
      %v1340 = vunpack.c.l.b16 %v1322
      %v1341 = vpack.c.b16 %v1334, %v1333
      %v1342 = vpack.c.b16 %v1336, %v1335
      %v1343 = vpack.c.b16 %v1338, %v1337
      %v1344 = vpack.c.b16 %v1340, %v1339
      %v1346 = vsel %vm433, %v1341, 0
      %v1349 = vsel %vm433, %v1342, 0
      %v1352 = vsel %vm433, %v1343, 0
      %v1355 = vsel %vm433, %v1344, 0
      %v1358 = vsel %vm446, %v1324, 0
      %1360 = vmatprep.subr.bf16.mxu0 0
      %1361 = vmatpush1.bf16.msra.mxu0 0
      %1362 = vmatprep.subr.bf16.mxu0 0
      %1363 = vmatpush1.bf16.msra.mxu0 0
      %1364 = vmatprep.subr.bf16.mxu0 0
      %1365 = vmatpush1.bf16.msra.mxu0 0
      %1366 = vmatprep.subr.bf16.mxu0 0
      %1367 = vmatpush1.bf16.msra.mxu0 0
      %1368 = vmatprep.subr.bf16.mxu0 0
      %1369 = vmatpush1.bf16.msra.mxu0 0
      %1370 = vmatprep.subr.bf16.mxu0 0
      %1371 = vmatpush1.bf16.msra.mxu0 0
      %1372 = vmatprep.subr.bf16.mxu0 0
      %1373 = vmatpush1.bf16.msra.mxu0 0
      %1374 = vmatprep.subr.bf16.mxu0 0
      %1375 = vmatpush1.bf16.msra.mxu0 %v1358
      %1376 = vmatprep.subr.bf16.mxu0 0
      %1377 = vmatpush2.bf16.msra.mxu0 0
      %1378 = vmatprep.subr.bf16.mxu0 0
      %1379 = vmatpush2.bf16.msra.mxu0 0
      %1380 = vmatprep.subr.bf16.mxu0 0
      %1381 = vmatpush2.bf16.msra.mxu0 0
      %1382 = vmatprep.subr.bf16.mxu0 0
      %1383 = vmatpush2.bf16.msra.mxu0 0
      %1384 = vmatprep.subr.bf16.mxu0 0
      %1385 = vmatpush2.bf16.msra.mxu0 0
      %1386 = vmatprep.subr.bf16.mxu0 0
      %1387 = vmatpush2.bf16.msra.mxu0 0
      %1388 = vmatprep.subr.bf16.mxu0 0
      %1389 = vmatpush2.bf16.msra.mxu0 0
      %1390 = vmatprep.subr.bf16.mxu0 0
      %1391 = vmatpush2.bf16.msra.mxu0 0
      %1392 = vmatprep.mubr.bf16.mxu0 0
      %1393 = vmatmul.mubr.bf16.gmra.mxu0 %v1346
      %v1394 = vpop.f32.mrf.mxu0
      %v1395 = vadd.f32 0.0, %v1394
      %v1396 = vpop.f32.mrf.mxu0
      %v1397 = vpop.f32.mrf.mxu0
      %v1398 = vadd.f32 0.0, %v1397
      %v1399 = vpop.f32.mrf.mxu0
      %1400 = vmatprep.mubr.bf16.mxu0 0
      %1401 = vmatmul.mubr.bf16.gmra.mxu0 %v1349
      %v1402 = vpop.f32.mrf.mxu0
      %v1403 = vadd.f32 0.0, %v1402
      %v1404 = vpop.f32.mrf.mxu0
      %v1405 = vpop.f32.mrf.mxu0
      %v1406 = vadd.f32 0.0, %v1405
      %v1407 = vpop.f32.mrf.mxu0
      %1408 = vmatprep.mubr.bf16.mxu0 0
      %1409 = vmatmul.mubr.bf16.gmra.mxu0 %v1352
      %v1410 = vpop.f32.mrf.mxu0
      %v1411 = vadd.f32 0.0, %v1410
      %v1412 = vpop.f32.mrf.mxu0
      %v1413 = vpop.f32.mrf.mxu0
      %v1414 = vadd.f32 0.0, %v1413
      %v1415 = vpop.f32.mrf.mxu0
      %1416 = vmatprep.mubr.bf16.mxu0 0
      %1417 = vmatmul.mubr.bf16.gmra.mxu0 %v1355
      %v1418 = vpop.f32.mrf.mxu0
      %v1419 = vadd.f32 0.0, %v1418
      %v1420 = vpop.f32.mrf.mxu0
      %v1421 = vpop.f32.mrf.mxu0
      %v1422 = vadd.f32 0.0, %v1421
      %v1423 = vpop.f32.mrf.mxu0
      %1424 = vdwg.mxu0
      %v1425 = vadd.f32 %v1306, %v1395
      %v1426 = vadd.f32 %v1307, %v1398
      %v1427 = vadd.f32 %v1308, %v1403
      %v1428 = vadd.f32 %v1309, %v1406
      %v1429 = vadd.f32 %v1310, %v1411
      %v1430 = vadd.f32 %v1311, %v1414
      %v1431 = vadd.f32 %v1312, %v1419
      %v1432 = vadd.f32 %v1313, %v1422
      %s1433 = scalar_lea.vmem %s377, 8
      %v1434 = vld [vmem:[%s1433] sm:$0xf]
      %v1435 = vld [vmem:[%s1433 + $0x8] sm:$0xf]
      %v1436 = vld [vmem:[%s1433 + $0x10] sm:$0xf]
      %v1437 = vld [vmem:[%s1433 + $0x18] sm:$0xf]
      %v1438 = vld [vmem:[%s1433 + $0x20] sm:$0xf]
      %v1439 = vld [vmem:[%s1433 + $0x28] sm:$0xf]
      %v1440 = vld [vmem:[%s1433 + $0x30] sm:$0xf]
      %v1441 = vld [vmem:[%s1433 + $0x38] sm:$0xf]
      %s1442 = scalar_lea.vmem %s4, 14
      %v1443 = vld [vmem:[%s1442] sm:$0x3]
      %v1452 = vunpack.c.l.b16 %v1434
      %v1453 = vunpack.c.l.b16 %v1435
      %v1454 = vunpack.c.l.b16 %v1436
      %v1455 = vunpack.c.l.b16 %v1437
      %v1456 = vunpack.c.l.b16 %v1438
      %v1457 = vunpack.c.l.b16 %v1439
      %v1458 = vunpack.c.l.b16 %v1440
      %v1459 = vunpack.c.l.b16 %v1441
      %v1460 = vpack.c.b16 %v1453, %v1452
      %v1461 = vpack.c.b16 %v1455, %v1454
      %v1462 = vpack.c.b16 %v1457, %v1456
      %v1463 = vpack.c.b16 %v1459, %v1458
      %v1465 = vsel %vm433, %v1460, 0
      %v1468 = vsel %vm433, %v1461, 0
      %v1471 = vsel %vm433, %v1462, 0
      %v1474 = vsel %vm433, %v1463, 0
      %v1477 = vsel %vm446, %v1443, 0
      %1479 = vmatprep.subr.bf16.mxu0 0
      %1480 = vmatpush1.bf16.msra.mxu0 0
      %1481 = vmatprep.subr.bf16.mxu0 0
      %1482 = vmatpush1.bf16.msra.mxu0 0
      %1483 = vmatprep.subr.bf16.mxu0 0
      %1484 = vmatpush1.bf16.msra.mxu0 0
      %1485 = vmatprep.subr.bf16.mxu0 0
      %1486 = vmatpush1.bf16.msra.mxu0 0
      %1487 = vmatprep.subr.bf16.mxu0 0
      %1488 = vmatpush1.bf16.msra.mxu0 0
      %1489 = vmatprep.subr.bf16.mxu0 0
      %1490 = vmatpush1.bf16.msra.mxu0 0
      %1491 = vmatprep.subr.bf16.mxu0 0
      %1492 = vmatpush1.bf16.msra.mxu0 0
      %1493 = vmatprep.subr.bf16.mxu0 0
      %1494 = vmatpush1.bf16.msra.mxu0 %v1477
      %1495 = vmatprep.subr.bf16.mxu0 0
      %1496 = vmatpush2.bf16.msra.mxu0 0
      %1497 = vmatprep.subr.bf16.mxu0 0
      %1498 = vmatpush2.bf16.msra.mxu0 0
      %1499 = vmatprep.subr.bf16.mxu0 0
      %1500 = vmatpush2.bf16.msra.mxu0 0
      %1501 = vmatprep.subr.bf16.mxu0 0
      %1502 = vmatpush2.bf16.msra.mxu0 0
      %1503 = vmatprep.subr.bf16.mxu0 0
      %1504 = vmatpush2.bf16.msra.mxu0 0
      %1505 = vmatprep.subr.bf16.mxu0 0
      %1506 = vmatpush2.bf16.msra.mxu0 0
      %1507 = vmatprep.subr.bf16.mxu0 0
      %1508 = vmatpush2.bf16.msra.mxu0 0
      %1509 = vmatprep.subr.bf16.mxu0 0
      %1510 = vmatpush2.bf16.msra.mxu0 0
      %1511 = vmatprep.mubr.bf16.mxu0 0
      %1512 = vmatmul.mubr.bf16.gmra.mxu0 %v1465
      %v1513 = vpop.f32.mrf.mxu0
      %v1514 = vadd.f32 0.0, %v1513
      %v1515 = vpop.f32.mrf.mxu0
      %v1516 = vpop.f32.mrf.mxu0
      %v1517 = vadd.f32 0.0, %v1516
      %v1518 = vpop.f32.mrf.mxu0
      %1519 = vmatprep.mubr.bf16.mxu0 0
      %1520 = vmatmul.mubr.bf16.gmra.mxu0 %v1468
      %v1521 = vpop.f32.mrf.mxu0
      %v1522 = vadd.f32 0.0, %v1521
      %v1523 = vpop.f32.mrf.mxu0
      %v1524 = vpop.f32.mrf.mxu0
      %v1525 = vadd.f32 0.0, %v1524
      %v1526 = vpop.f32.mrf.mxu0
      %1527 = vmatprep.mubr.bf16.mxu0 0
      %1528 = vmatmul.mubr.bf16.gmra.mxu0 %v1471
      %v1529 = vpop.f32.mrf.mxu0
      %v1530 = vadd.f32 0.0, %v1529
      %v1531 = vpop.f32.mrf.mxu0
      %v1532 = vpop.f32.mrf.mxu0
      %v1533 = vadd.f32 0.0, %v1532
      %v1534 = vpop.f32.mrf.mxu0
      %1535 = vmatprep.mubr.bf16.mxu0 0
      %1536 = vmatmul.mubr.bf16.gmra.mxu0 %v1474
      %v1537 = vpop.f32.mrf.mxu0
      %v1538 = vadd.f32 0.0, %v1537
      %v1539 = vpop.f32.mrf.mxu0
      %v1540 = vpop.f32.mrf.mxu0
      %v1541 = vadd.f32 0.0, %v1540
      %v1542 = vpop.f32.mrf.mxu0
      %1543 = vdwg.mxu0
      %v1544 = vadd.f32 %v1425, %v1514
      %v1545 = vadd.f32 %v1426, %v1517
      %v1546 = vadd.f32 %v1427, %v1522
      %v1547 = vadd.f32 %v1428, %v1525
      %v1548 = vadd.f32 %v1429, %v1530
      %v1549 = vadd.f32 %v1430, %v1533
      %v1550 = vadd.f32 %v1431, %v1538
      %v1551 = vadd.f32 %v1432, %v1541
      %v1552 = vld [vmem:[%s1314] sm:$0xf]
      %v1553 = vld [vmem:[%s1314 + $0x4] sm:$0x1]
      %v1554 = vld [vmem:[%s1314 + $0x8] sm:$0xf]
      %v1555 = vld [vmem:[%s1314 + $0xc] sm:$0x1]
      %v1556 = vld [vmem:[%s1314 + $0x10] sm:$0xf]
      %v1557 = vld [vmem:[%s1314 + $0x14] sm:$0x1]
      %v1558 = vld [vmem:[%s1314 + $0x18] sm:$0xf]
      %v1559 = vld [vmem:[%s1314 + $0x1c] sm:$0x1]
      %v1560 = vld [vmem:[%s1314 + $0x20] sm:$0xf]
      %v1561 = vld [vmem:[%s1314 + $0x24] sm:$0x1]
      %v1562 = vld [vmem:[%s1314 + $0x28] sm:$0xf]
      %v1563 = vld [vmem:[%s1314 + $0x2c] sm:$0x1]
      %v1564 = vld [vmem:[%s1314 + $0x30] sm:$0xf]
      %v1565 = vld [vmem:[%s1314 + $0x34] sm:$0x1]
      %v1566 = vld [vmem:[%s1314 + $0x38] sm:$0xf]
      %v1567 = vld [vmem:[%s1314 + $0x3c] sm:$0x1]
      %v1569 = vshrl.u32 %v1552, 16
      %v1571 = vrot.slane %v1569, 4
      %v1572 = vshll.u32 %v1552, 16
      %v1574 = vrot.slane %v1572, 5
      %v1575 = vor.u32 %v1571, %v1574
      %v1576 = vrot.slane %v1575, 4
      %v1578 = vshll.u32 %v1553, 16
      %v1580 = vrot.slane %v1578, 5
      %v1581 = vsel %vm633, %v1576, %v1580
      %v1583 = vshrl.u32 %v1554, 16
      %v1585 = vrot.slane %v1583, 4
      %v1586 = vshll.u32 %v1554, 16
      %v1588 = vrot.slane %v1586, 5
      %v1589 = vor.u32 %v1585, %v1588
      %v1590 = vrot.slane %v1589, 4
      %v1592 = vshll.u32 %v1555, 16
      %v1594 = vrot.slane %v1592, 5
      %v1595 = vsel %vm633, %v1590, %v1594
      %v1597 = vshrl.u32 %v1556, 16
      %v1599 = vrot.slane %v1597, 4
      %v1600 = vshll.u32 %v1556, 16
      %v1602 = vrot.slane %v1600, 5
      %v1603 = vor.u32 %v1599, %v1602
      %v1604 = vrot.slane %v1603, 4
      %v1606 = vshll.u32 %v1557, 16
      %v1608 = vrot.slane %v1606, 5
      %v1609 = vsel %vm633, %v1604, %v1608
      %v1611 = vshrl.u32 %v1558, 16
      %v1613 = vrot.slane %v1611, 4
      %v1614 = vshll.u32 %v1558, 16
      %v1616 = vrot.slane %v1614, 5
      %v1617 = vor.u32 %v1613, %v1616
      %v1618 = vrot.slane %v1617, 4
      %v1620 = vshll.u32 %v1559, 16
      %v1622 = vrot.slane %v1620, 5
      %v1623 = vsel %vm633, %v1618, %v1622
      %v1625 = vshrl.u32 %v1560, 16
      %v1627 = vrot.slane %v1625, 4
      %v1628 = vshll.u32 %v1560, 16
      %v1630 = vrot.slane %v1628, 5
      %v1631 = vor.u32 %v1627, %v1630
      %v1632 = vrot.slane %v1631, 4
      %v1634 = vshll.u32 %v1561, 16
      %v1636 = vrot.slane %v1634, 5
      %v1637 = vsel %vm633, %v1632, %v1636
      %v1639 = vshrl.u32 %v1562, 16
      %v1641 = vrot.slane %v1639, 4
      %v1642 = vshll.u32 %v1562, 16
      %v1644 = vrot.slane %v1642, 5
      %v1645 = vor.u32 %v1641, %v1644
      %v1646 = vrot.slane %v1645, 4
      %v1648 = vshll.u32 %v1563, 16
      %v1650 = vrot.slane %v1648, 5
      %v1651 = vsel %vm633, %v1646, %v1650
      %v1653 = vshrl.u32 %v1564, 16
      %v1655 = vrot.slane %v1653, 4
      %v1656 = vshll.u32 %v1564, 16
      %v1658 = vrot.slane %v1656, 5
      %v1659 = vor.u32 %v1655, %v1658
      %v1660 = vrot.slane %v1659, 4
      %v1662 = vshll.u32 %v1565, 16
      %v1664 = vrot.slane %v1662, 5
      %v1665 = vsel %vm633, %v1660, %v1664
      %v1667 = vshrl.u32 %v1566, 16
      %v1669 = vrot.slane %v1667, 4
      %v1670 = vshll.u32 %v1566, 16
      %v1672 = vrot.slane %v1670, 5
      %v1673 = vor.u32 %v1669, %v1672
      %v1674 = vrot.slane %v1673, 4
      %v1676 = vshll.u32 %v1567, 16
      %v1678 = vrot.slane %v1676, 5
      %v1679 = vsel %vm633, %v1674, %v1678
      %s1680 = scalar_lea.vmem %s4, 16
      %v1681 = vld [vmem:[%s1680] sm:$0x3]
      %v1682 = vunpack.c.l.b16 %v1581
      %v1683 = vunpack.c.l.b16 %v1595
      %v1684 = vunpack.c.l.b16 %v1609
      %v1685 = vunpack.c.l.b16 %v1623
      %v1686 = vunpack.c.l.b16 %v1637
      %v1687 = vunpack.c.l.b16 %v1651
      %v1688 = vunpack.c.l.b16 %v1665
      %v1689 = vunpack.c.l.b16 %v1679
      %v1690 = vpack.c.b16 %v1683, %v1682
      %v1691 = vpack.c.b16 %v1685, %v1684
      %v1692 = vpack.c.b16 %v1687, %v1686
      %v1693 = vpack.c.b16 %v1689, %v1688
      %v1695 = vsel %vm433, %v1690, 0
      %v1698 = vsel %vm433, %v1691, 0
      %v1701 = vsel %vm433, %v1692, 0
      %v1704 = vsel %vm433, %v1693, 0
      %v1707 = vsel %vm446, %v1681, 0
      %1709 = vmatprep.subr.bf16.mxu0 0
      %1710 = vmatpush1.bf16.msra.mxu0 0
      %1711 = vmatprep.subr.bf16.mxu0 0
      %1712 = vmatpush1.bf16.msra.mxu0 0
      %1713 = vmatprep.subr.bf16.mxu0 0
      %1714 = vmatpush1.bf16.msra.mxu0 0
      %1715 = vmatprep.subr.bf16.mxu0 0
      %1716 = vmatpush1.bf16.msra.mxu0 0
      %1717 = vmatprep.subr.bf16.mxu0 0
      %1718 = vmatpush1.bf16.msra.mxu0 0
      %1719 = vmatprep.subr.bf16.mxu0 0
      %1720 = vmatpush1.bf16.msra.mxu0 0
      %1721 = vmatprep.subr.bf16.mxu0 0
      %1722 = vmatpush1.bf16.msra.mxu0 0
      %1723 = vmatprep.subr.bf16.mxu0 0
      %1724 = vmatpush1.bf16.msra.mxu0 %v1707
      %1725 = vmatprep.subr.bf16.mxu0 0
      %1726 = vmatpush2.bf16.msra.mxu0 0
      %1727 = vmatprep.subr.bf16.mxu0 0
      %1728 = vmatpush2.bf16.msra.mxu0 0
      %1729 = vmatprep.subr.bf16.mxu0 0
      %1730 = vmatpush2.bf16.msra.mxu0 0
      %1731 = vmatprep.subr.bf16.mxu0 0
      %1732 = vmatpush2.bf16.msra.mxu0 0
      %1733 = vmatprep.subr.bf16.mxu0 0
      %1734 = vmatpush2.bf16.msra.mxu0 0
      %1735 = vmatprep.subr.bf16.mxu0 0
      %1736 = vmatpush2.bf16.msra.mxu0 0
      %1737 = vmatprep.subr.bf16.mxu0 0
      %1738 = vmatpush2.bf16.msra.mxu0 0
      %1739 = vmatprep.subr.bf16.mxu0 0
      %1740 = vmatpush2.bf16.msra.mxu0 0
      %1741 = vmatprep.mubr.bf16.mxu0 0
      %1742 = vmatmul.mubr.bf16.gmra.mxu0 %v1695
      %v1743 = vpop.f32.mrf.mxu0
      %v1744 = vadd.f32 0.0, %v1743
      %v1745 = vpop.f32.mrf.mxu0
      %v1746 = vpop.f32.mrf.mxu0
      %v1747 = vadd.f32 0.0, %v1746
      %v1748 = vpop.f32.mrf.mxu0
      %1749 = vmatprep.mubr.bf16.mxu0 0
      %1750 = vmatmul.mubr.bf16.gmra.mxu0 %v1698
      %v1751 = vpop.f32.mrf.mxu0
      %v1752 = vadd.f32 0.0, %v1751
      %v1753 = vpop.f32.mrf.mxu0
      %v1754 = vpop.f32.mrf.mxu0
      %v1755 = vadd.f32 0.0, %v1754
      %v1756 = vpop.f32.mrf.mxu0
      %1757 = vmatprep.mubr.bf16.mxu0 0
      %1758 = vmatmul.mubr.bf16.gmra.mxu0 %v1701
      %v1759 = vpop.f32.mrf.mxu0
      %v1760 = vadd.f32 0.0, %v1759
      %v1761 = vpop.f32.mrf.mxu0
      %v1762 = vpop.f32.mrf.mxu0
      %v1763 = vadd.f32 0.0, %v1762
      %v1764 = vpop.f32.mrf.mxu0
      %1765 = vmatprep.mubr.bf16.mxu0 0
      %1766 = vmatmul.mubr.bf16.gmra.mxu0 %v1704
      %v1767 = vpop.f32.mrf.mxu0
      %v1768 = vadd.f32 0.0, %v1767
      %v1769 = vpop.f32.mrf.mxu0
      %v1770 = vpop.f32.mrf.mxu0
      %v1771 = vadd.f32 0.0, %v1770
      %v1772 = vpop.f32.mrf.mxu0
      %1773 = vdwg.mxu0
      %v1774 = vadd.f32 %v1544, %v1744
      %v1775 = vadd.f32 %v1545, %v1747
      %v1776 = vadd.f32 %v1546, %v1752
      %v1777 = vadd.f32 %v1547, %v1755
      %v1778 = vadd.f32 %v1548, %v1760
      %v1779 = vadd.f32 %v1549, %v1763
      %v1780 = vadd.f32 %v1550, %v1768
      %v1781 = vadd.f32 %v1551, %v1771
      %v1782 = vld [vmem:[%s5] sm:$0x1]
      %v1784 = vlaneseq
      %v1785 = vshrl.u32 %v1784, 7
      %v1786 = vsub.s32 0, %v1785
      %v1787 = vrot.slane %v1782, %v1786
      %v1789 = vadd.f32 %v1774, %v1787
      %v1790 = vadd.f32 %v1775, %v1787
      %v1791 = vadd.f32 %v1776, %v1787
      %v1792 = vadd.f32 %v1777, %v1787
      %v1793 = vadd.f32 %v1778, %v1787
      %v1794 = vadd.f32 %v1779, %v1787
      %v1795 = vadd.f32 %v1780, %v1787
      %v1796 = vadd.f32 %v1781, %v1787
      %v1797 = vmax.f32 %v1789, 0.0
      %v1798 = vmax.f32 %v1790, 0.0
      %v1799 = vmax.f32 %v1791, 0.0
      %v1800 = vmax.f32 %v1792, 0.0
      %v1801 = vmax.f32 %v1793, 0.0
      %v1802 = vmax.f32 %v1794, 0.0
      %v1803 = vmax.f32 %v1795, 0.0
      %v1804 = vmax.f32 %v1796, 0.0
      %1805 = vst [vmem:[#allocation2] sm:$0xf] 0
      %1806 = vst [vmem:[#allocation2 + $0x4] sm:$0x1] 0
      %1807 = vst [vmem:[#allocation2 + $0x8] sm:$0xf] 0
      %1808 = vst [vmem:[#allocation2 + $0xc] sm:$0x1] 0
      %1809 = vst [vmem:[#allocation2 + $0x10] sm:$0xf] 0
      %1810 = vst [vmem:[#allocation2 + $0x14] sm:$0x1] 0
      %1811 = vst [vmem:[#allocation2 + $0x18] sm:$0xf] 0
      %1812 = vst [vmem:[#allocation2 + $0x1c] sm:$0x1] 0
      %1813 = vst [vmem:[#allocation2 + $0x20] sm:$0xf] 0
      %1814 = vst [vmem:[#allocation2 + $0x24] sm:$0x1] 0
      %1815 = vst [vmem:[#allocation2 + $0x28] sm:$0xf] 0
      %1816 = vst [vmem:[#allocation2 + $0x2c] sm:$0x1] 0
      %1817 = vst [vmem:[#allocation2 + $0x30] sm:$0xf] 0
      %1818 = vst [vmem:[#allocation2 + $0x34] sm:$0x1] 0
      %1819 = vst [vmem:[#allocation2 + $0x38] sm:$0xf] 0
      %1820 = vst [vmem:[#allocation2 + $0x3c] sm:$0x1] 0
      %1821 = vst [vmem:[#allocation2 + $0x40] sm:$0xf] 0
      %1822 = vst [vmem:[#allocation2 + $0x44] sm:$0x1] 0
      %1823 = vst [vmem:[#allocation2 + $0x48] sm:$0xf] 0
      %1824 = vst [vmem:[#allocation2 + $0x4c] sm:$0x1] 0
      %v1825 = vpack.c.bf16 %v1797, %v1797
      %v1826 = vpack.c.bf16 %v1798, %v1798
      %v1827 = vpack.c.bf16 %v1799, %v1799
      %v1828 = vpack.c.bf16 %v1800, %v1800
      %v1829 = vpack.c.bf16 %v1801, %v1801
      %v1830 = vpack.c.bf16 %v1802, %v1802
      %v1831 = vpack.c.bf16 %v1803, %v1803
      %v1832 = vpack.c.bf16 %v1804, %v1804
      %v1841 = vunpack.c.l.b16 %v1825
      %v1842 = vunpack.c.l.b16 %v1826
      %v1843 = vunpack.c.l.b16 %v1827
      %v1844 = vunpack.c.l.b16 %v1828
      %v1845 = vunpack.c.l.b16 %v1829
      %v1846 = vunpack.c.l.b16 %v1830
      %v1847 = vunpack.c.l.b16 %v1831
      %v1848 = vunpack.c.l.b16 %v1832
      %v1849 = vpack.c.b16 %v1841, %v1841
      %v1850 = vpack.c.b16 %v1842, %v1842
      %v1851 = vpack.c.b16 %v1843, %v1843
      %v1852 = vpack.c.b16 %v1844, %v1844
      %v1853 = vpack.c.b16 %v1845, %v1845
      %v1854 = vpack.c.b16 %v1846, %v1846
      %v1855 = vpack.c.b16 %v1847, %v1847
      %v1856 = vpack.c.b16 %v1848, %v1848
      %v1858 = vshrl.u32 %v1849, 16
      %v1860 = vrot.slane %v1858, 7
      %v1861 = vshll.u32 %v1849, 16
      %v1863 = vor.u32 %v1860, %v1861
      %v1864 = vrot.slane %v1860, 4
      %v1866 = vshrl.u32 %v1850, 16
      %v1868 = vrot.slane %v1866, 7
      %v1869 = vshll.u32 %v1850, 16
      %v1871 = vor.u32 %v1868, %v1869
      %v1872 = vrot.slane %v1868, 4
      %v1874 = vshrl.u32 %v1851, 16
      %v1876 = vrot.slane %v1874, 7
      %v1877 = vshll.u32 %v1851, 16
      %v1879 = vor.u32 %v1876, %v1877
      %v1880 = vrot.slane %v1876, 4
      %v1882 = vshrl.u32 %v1852, 16
      %v1884 = vrot.slane %v1882, 7
      %v1885 = vshll.u32 %v1852, 16
      %v1887 = vor.u32 %v1884, %v1885
      %v1888 = vrot.slane %v1884, 4
      %v1890 = vshrl.u32 %v1853, 16
      %v1892 = vrot.slane %v1890, 7
      %v1893 = vshll.u32 %v1853, 16
      %v1895 = vor.u32 %v1892, %v1893
      %v1896 = vrot.slane %v1892, 4
      %v1898 = vshrl.u32 %v1854, 16
      %v1900 = vrot.slane %v1898, 7
      %v1901 = vshll.u32 %v1854, 16
      %v1903 = vor.u32 %v1900, %v1901
      %v1904 = vrot.slane %v1900, 4
      %v1906 = vshrl.u32 %v1855, 16
      %v1908 = vrot.slane %v1906, 7
      %v1909 = vshll.u32 %v1855, 16
      %v1911 = vor.u32 %v1908, %v1909
      %v1912 = vrot.slane %v1908, 4
      %v1914 = vshrl.u32 %v1856, 16
      %v1916 = vrot.slane %v1914, 7
      %v1917 = vshll.u32 %v1856, 16
      %v1919 = vor.u32 %v1916, %v1917
      %v1920 = vrot.slane %v1916, 4
      %s1937 = scalar_lea.vmem [#allocation2], 8
      %vm1938 = vcmask 1043456
      %vm1939 = vsmask.f32 7938
      %vm1940 = vmand %vm1938, %vm1939
      %v1941 = vld [vmem:[%s1937] sm:$0xf]
      %v1942 = vsel %vm1940, %v1863, %v1941
      %1943 = vst [vmem:[%s1937] sm:$0xf] %v1942
      %vm1944 = vcmask 1040384
      %vm1945 = vsmask.f32 256
      %vm1946 = vmand %vm1944, %vm1945
      %v1947 = vld [vmem:[%s1937 + $0x4] sm:$0x1]
      %v1948 = vsel %vm1946, %v1864, %v1947
      %1949 = vst [vmem:[%s1937 + $0x4] sm:$0x1] %v1948
      %v1950 = vld [vmem:[%s1937 + $0x8] sm:$0xf]
      %v1951 = vsel %vm1940, %v1871, %v1950
      %1952 = vst [vmem:[%s1937 + $0x8] sm:$0xf] %v1951
      %v1953 = vld [vmem:[%s1937 + $0xc] sm:$0x1]
      %v1954 = vsel %vm1946, %v1872, %v1953
      %1955 = vst [vmem:[%s1937 + $0xc] sm:$0x1] %v1954
      %v1956 = vld [vmem:[%s1937 + $0x10] sm:$0xf]
      %v1957 = vsel %vm1940, %v1879, %v1956
      %1958 = vst [vmem:[%s1937 + $0x10] sm:$0xf] %v1957
      %v1959 = vld [vmem:[%s1937 + $0x14] sm:$0x1]
      %v1960 = vsel %vm1946, %v1880, %v1959
      %1961 = vst [vmem:[%s1937 + $0x14] sm:$0x1] %v1960
      %v1962 = vld [vmem:[%s1937 + $0x18] sm:$0xf]
      %v1963 = vsel %vm1940, %v1887, %v1962
      %1964 = vst [vmem:[%s1937 + $0x18] sm:$0xf] %v1963
      %v1965 = vld [vmem:[%s1937 + $0x1c] sm:$0x1]
      %v1966 = vsel %vm1946, %v1888, %v1965
      %1967 = vst [vmem:[%s1937 + $0x1c] sm:$0x1] %v1966
      %v1968 = vld [vmem:[%s1937 + $0x20] sm:$0xf]
      %v1969 = vsel %vm1940, %v1895, %v1968
      %1970 = vst [vmem:[%s1937 + $0x20] sm:$0xf] %v1969
      %v1971 = vld [vmem:[%s1937 + $0x24] sm:$0x1]
      %v1972 = vsel %vm1946, %v1896, %v1971
      %1973 = vst [vmem:[%s1937 + $0x24] sm:$0x1] %v1972
      %v1974 = vld [vmem:[%s1937 + $0x28] sm:$0xf]
      %v1975 = vsel %vm1940, %v1903, %v1974
      %1976 = vst [vmem:[%s1937 + $0x28] sm:$0xf] %v1975
      %v1977 = vld [vmem:[%s1937 + $0x2c] sm:$0x1]
      %v1978 = vsel %vm1946, %v1904, %v1977
      %1979 = vst [vmem:[%s1937 + $0x2c] sm:$0x1] %v1978
      %v1980 = vld [vmem:[%s1937 + $0x30] sm:$0xf]
      %v1981 = vsel %vm1940, %v1911, %v1980
      %1982 = vst [vmem:[%s1937 + $0x30] sm:$0xf] %v1981
      %v1983 = vld [vmem:[%s1937 + $0x34] sm:$0x1]
      %v1984 = vsel %vm1946, %v1912, %v1983
      %1985 = vst [vmem:[%s1937 + $0x34] sm:$0x1] %v1984
      %v1986 = vld [vmem:[%s1937 + $0x38] sm:$0xf]
      %v1987 = vsel %vm1940, %v1919, %v1986
      %1988 = vst [vmem:[%s1937 + $0x38] sm:$0xf] %v1987
      %v1989 = vld [vmem:[%s1937 + $0x3c] sm:$0x1]
      %v1990 = vsel %vm1946, %v1920, %v1989
      %1991 = vst [vmem:[%s1937 + $0x3c] sm:$0x1] %v1990
      %v1992 = vld [vmem:[#allocation2] sm:$0xf]
      %v1993 = vld [vmem:[#allocation2 + $0x8] sm:$0xf]
      %v1994 = vld [vmem:[#allocation2 + $0x10] sm:$0xf]
      %v1995 = vld [vmem:[#allocation2 + $0x18] sm:$0xf]
      %v1996 = vld [vmem:[#allocation2 + $0x20] sm:$0xf]
      %v1997 = vld [vmem:[#allocation2 + $0x28] sm:$0xf]
      %v1998 = vld [vmem:[#allocation2 + $0x30] sm:$0xf]
      %v1999 = vld [vmem:[#allocation2 + $0x38] sm:$0xf]
      %v2000 = vld [vmem:[%s6] sm:$0xf]
      %v2001 = vld [vmem:[%s6 + $0x4] sm:$0xf]
      %v2002 = vld [vmem:[%s6 + $0x8] sm:$0xf]
      %v2003 = vld [vmem:[%s6 + $0xc] sm:$0xf]
      %v2004 = vld [vmem:[%s6 + $0x10] sm:$0xf]
      %v2005 = vld [vmem:[%s6 + $0x14] sm:$0xf]
      %v2006 = vld [vmem:[%s6 + $0x18] sm:$0xf]
      %v2007 = vld [vmem:[%s6 + $0x1c] sm:$0xf]
      %v2008 = vld [vmem:[%s6 + $0x20] sm:$0xf]
      %v2009 = vld [vmem:[%s6 + $0x24] sm:$0xf]
      %v2010 = vld [vmem:[%s6 + $0x28] sm:$0xf]
      %v2011 = vld [vmem:[%s6 + $0x2c] sm:$0xf]
      %v2012 = vld [vmem:[%s6 + $0x30] sm:$0xf]
      %v2013 = vld [vmem:[%s6 + $0x34] sm:$0xf]
      %v2014 = vld [vmem:[%s6 + $0x38] sm:$0xf]
      %v2015 = vld [vmem:[%s6 + $0x3c] sm:$0xf]
      %v2016 = vld [vmem:[#allocation2 + $0x4] sm:$0x1]
      %v2017 = vld [vmem:[#allocation2 + $0xc] sm:$0x1]
      %v2018 = vld [vmem:[#allocation2 + $0x14] sm:$0x1]
      %v2019 = vld [vmem:[#allocation2 + $0x1c] sm:$0x1]
      %v2020 = vld [vmem:[#allocation2 + $0x24] sm:$0x1]
      %v2021 = vld [vmem:[#allocation2 + $0x2c] sm:$0x1]
      %v2022 = vld [vmem:[#allocation2 + $0x34] sm:$0x1]
      %v2023 = vld [vmem:[#allocation2 + $0x3c] sm:$0x1]
      %v2025 = vshrl.u32 %v1992, 16
      %v2027 = vrot.slane %v2025, 4
      %v2028 = vshll.u32 %v1992, 16
      %v2030 = vrot.slane %v2028, 5
      %v2031 = vor.u32 %v2027, %v2030
      %v2032 = vrot.slane %v2031, 4
      %v2034 = vshll.u32 %v2016, 16
      %v2036 = vrot.slane %v2034, 5
      %v2037 = vsel %vm633, %v2032, %v2036
      %v2039 = vshrl.u32 %v1993, 16
      %v2041 = vrot.slane %v2039, 4
      %v2042 = vshll.u32 %v1993, 16
      %v2044 = vrot.slane %v2042, 5
      %v2045 = vor.u32 %v2041, %v2044
      %v2046 = vrot.slane %v2045, 4
      %v2048 = vshll.u32 %v2017, 16
      %v2050 = vrot.slane %v2048, 5
      %v2051 = vsel %vm633, %v2046, %v2050
      %v2053 = vshrl.u32 %v1994, 16
      %v2055 = vrot.slane %v2053, 4
      %v2056 = vshll.u32 %v1994, 16
      %v2058 = vrot.slane %v2056, 5
      %v2059 = vor.u32 %v2055, %v2058
      %v2060 = vrot.slane %v2059, 4
      %v2062 = vshll.u32 %v2018, 16
      %v2064 = vrot.slane %v2062, 5
      %v2065 = vsel %vm633, %v2060, %v2064
      %v2067 = vshrl.u32 %v1995, 16
      %v2069 = vrot.slane %v2067, 4
      %v2070 = vshll.u32 %v1995, 16
      %v2072 = vrot.slane %v2070, 5
      %v2073 = vor.u32 %v2069, %v2072
      %v2074 = vrot.slane %v2073, 4
      %v2076 = vshll.u32 %v2019, 16
      %v2078 = vrot.slane %v2076, 5
      %v2079 = vsel %vm633, %v2074, %v2078
      %v2081 = vshrl.u32 %v1996, 16
      %v2083 = vrot.slane %v2081, 4
      %v2084 = vshll.u32 %v1996, 16
      %v2086 = vrot.slane %v2084, 5
      %v2087 = vor.u32 %v2083, %v2086
      %v2088 = vrot.slane %v2087, 4
      %v2090 = vshll.u32 %v2020, 16
      %v2092 = vrot.slane %v2090, 5
      %v2093 = vsel %vm633, %v2088, %v2092
      %v2095 = vshrl.u32 %v1997, 16
      %v2097 = vrot.slane %v2095, 4
      %v2098 = vshll.u32 %v1997, 16
      %v2100 = vrot.slane %v2098, 5
      %v2101 = vor.u32 %v2097, %v2100
      %v2102 = vrot.slane %v2101, 4
      %v2104 = vshll.u32 %v2021, 16
      %v2106 = vrot.slane %v2104, 5
      %v2107 = vsel %vm633, %v2102, %v2106
      %v2109 = vshrl.u32 %v1998, 16
      %v2111 = vrot.slane %v2109, 4
      %v2112 = vshll.u32 %v1998, 16
      %v2114 = vrot.slane %v2112, 5
      %v2115 = vor.u32 %v2111, %v2114
      %v2116 = vrot.slane %v2115, 4
      %v2118 = vshll.u32 %v2022, 16
      %v2120 = vrot.slane %v2118, 5
      %v2121 = vsel %vm633, %v2116, %v2120
      %v2123 = vshrl.u32 %v1999, 16
      %v2125 = vrot.slane %v2123, 4
      %v2126 = vshll.u32 %v1999, 16
      %v2128 = vrot.slane %v2126, 5
      %v2129 = vor.u32 %v2125, %v2128
      %v2130 = vrot.slane %v2129, 4
      %v2132 = vshll.u32 %v2023, 16
      %v2134 = vrot.slane %v2132, 5
      %v2135 = vsel %vm633, %v2130, %v2134
      %s2136 = scalar_lea.vmem %s6, 64
      %v2137 = vld [vmem:[%s2136] sm:$0xf]
      %v2138 = vld [vmem:[%s2136 + $0x4] sm:$0xf]
      %v2139 = vld [vmem:[%s2136 + $0x8] sm:$0xf]
      %v2140 = vld [vmem:[%s2136 + $0xc] sm:$0xf]
      %v2141 = vld [vmem:[%s2136 + $0x10] sm:$0xf]
      %v2142 = vld [vmem:[%s2136 + $0x14] sm:$0xf]
      %v2143 = vld [vmem:[%s2136 + $0x18] sm:$0xf]
      %v2144 = vld [vmem:[%s2136 + $0x1c] sm:$0xf]
      %v2145 = vld [vmem:[%s2136 + $0x20] sm:$0xf]
      %v2146 = vld [vmem:[%s2136 + $0x24] sm:$0xf]
      %v2147 = vld [vmem:[%s2136 + $0x28] sm:$0xf]
      %v2148 = vld [vmem:[%s2136 + $0x2c] sm:$0xf]
      %v2149 = vld [vmem:[%s2136 + $0x30] sm:$0xf]
      %v2150 = vld [vmem:[%s2136 + $0x34] sm:$0xf]
      %v2151 = vld [vmem:[%s2136 + $0x38] sm:$0xf]
      %v2152 = vld [vmem:[%s2136 + $0x3c] sm:$0xf]
      %v2153 = vunpack.c.l.b16 %v2037
      %v2154 = vunpack.c.l.b16 %v2051
      %v2155 = vunpack.c.l.b16 %v2065
      %v2156 = vunpack.c.l.b16 %v2079
      %v2157 = vunpack.c.l.b16 %v2093
      %v2158 = vunpack.c.l.b16 %v2107
      %v2159 = vunpack.c.l.b16 %v2121
      %v2160 = vunpack.c.l.b16 %v2135
      %v2161 = vpack.c.b16 %v2154, %v2153
      %v2162 = vpack.c.b16 %v2156, %v2155
      %v2163 = vpack.c.b16 %v2158, %v2157
      %v2164 = vpack.c.b16 %v2160, %v2159
      %v2185 = vunpack.c.l.b16 %v2137
      %v2186 = vunpack.c.l.b16 %v2138
      %v2187 = vunpack.c.l.b16 %v2139
      %v2188 = vunpack.c.l.b16 %v2140
      %v2189 = vunpack.c.l.b16 %v2141
      %v2190 = vunpack.c.l.b16 %v2142
      %v2191 = vunpack.c.l.b16 %v2143
      %v2192 = vunpack.c.l.b16 %v2144
      %v2193 = vunpack.c.l.b16 %v2145
      %v2194 = vunpack.c.l.b16 %v2146
      %v2195 = vunpack.c.l.b16 %v2147
      %v2196 = vunpack.c.l.b16 %v2148
      %v2197 = vunpack.c.l.b16 %v2149
      %v2198 = vunpack.c.l.b16 %v2150
      %v2199 = vunpack.c.l.b16 %v2151
      %v2200 = vunpack.c.l.b16 %v2152
      %v2201 = vpack.c.b16 %v2186, %v2185
      %v2202 = vpack.c.b16 %v2188, %v2187
      %v2203 = vpack.c.b16 %v2190, %v2189
      %v2204 = vpack.c.b16 %v2192, %v2191
      %v2205 = vpack.c.b16 %v2194, %v2193
      %v2206 = vpack.c.b16 %v2196, %v2195
      %v2207 = vpack.c.b16 %v2198, %v2197
      %v2208 = vpack.c.b16 %v2200, %v2199
      %2217 = vmatprep.subr.bf16.mxu0 0
      %2218 = vmatpush1.bf16.msra.mxu0 %v2208
      %2219 = vmatprep.subr.bf16.mxu0 0
      %2220 = vmatpush1.bf16.msra.mxu0 %v2207
      %2221 = vmatprep.subr.bf16.mxu0 0
      %2222 = vmatpush1.bf16.msra.mxu0 %v2206
      %2223 = vmatprep.subr.bf16.mxu0 0
      %2224 = vmatpush1.bf16.msra.mxu0 %v2205
      %2225 = vmatprep.subr.bf16.mxu0 0
      %2226 = vmatpush1.bf16.msra.mxu0 %v2204
      %2227 = vmatprep.subr.bf16.mxu0 0
      %2228 = vmatpush1.bf16.msra.mxu0 %v2203
      %2229 = vmatprep.subr.bf16.mxu0 0
      %2230 = vmatpush1.bf16.msra.mxu0 %v2202
      %2231 = vmatprep.subr.bf16.mxu0 0
      %2232 = vmatpush1.bf16.msra.mxu0 %v2201
      %2233 = vmatprep.subr.bf16.mxu0 0
      %2234 = vmatpush2.bf16.msra.mxu0 0
      %2235 = vmatprep.subr.bf16.mxu0 0
      %2236 = vmatpush2.bf16.msra.mxu0 0
      %2237 = vmatprep.subr.bf16.mxu0 0
      %2238 = vmatpush2.bf16.msra.mxu0 0
      %2239 = vmatprep.subr.bf16.mxu0 0
      %2240 = vmatpush2.bf16.msra.mxu0 0
      %2241 = vmatprep.subr.bf16.mxu0 0
      %2242 = vmatpush2.bf16.msra.mxu0 0
      %2243 = vmatprep.subr.bf16.mxu0 0
      %2244 = vmatpush2.bf16.msra.mxu0 0
      %2245 = vmatprep.subr.bf16.mxu0 0
      %2246 = vmatpush2.bf16.msra.mxu0 0
      %2247 = vmatprep.subr.bf16.mxu0 0
      %2248 = vmatpush2.bf16.msra.mxu0 0
      %2249 = vmatprep.mubr.bf16.mxu0 0
      %2250 = vmatmul.mubr.bf16.gmra.mxu0 %v2161
      %v2251 = vpop.f32.mrf.mxu0
      %v2252 = vadd.f32 0.0, %v2251
      %v2253 = vpop.f32.mrf.mxu0
      %v2254 = vpop.f32.mrf.mxu0
      %v2255 = vadd.f32 0.0, %v2254
      %v2256 = vpop.f32.mrf.mxu0
      %2257 = vmatprep.mubr.bf16.mxu0 0
      %2258 = vmatmul.mubr.bf16.gmra.mxu0 %v2162
      %v2259 = vpop.f32.mrf.mxu0
      %v2260 = vadd.f32 0.0, %v2259
      %v2261 = vpop.f32.mrf.mxu0
      %v2262 = vpop.f32.mrf.mxu0
      %v2263 = vadd.f32 0.0, %v2262
      %v2264 = vpop.f32.mrf.mxu0
      %2265 = vmatprep.mubr.bf16.mxu0 0
      %2266 = vmatmul.mubr.bf16.gmra.mxu0 %v2163
      %v2267 = vpop.f32.mrf.mxu0
      %v2268 = vadd.f32 0.0, %v2267
      %v2269 = vpop.f32.mrf.mxu0
      %v2270 = vpop.f32.mrf.mxu0
      %v2271 = vadd.f32 0.0, %v2270
      %v2272 = vpop.f32.mrf.mxu0
      %2273 = vmatprep.mubr.bf16.mxu0 0
      %2274 = vmatmul.mubr.bf16.gmra.mxu0 %v2164
      %v2275 = vpop.f32.mrf.mxu0
      %v2276 = vadd.f32 0.0, %v2275
      %v2277 = vpop.f32.mrf.mxu0
      %v2278 = vpop.f32.mrf.mxu0
      %v2279 = vadd.f32 0.0, %v2278
      %v2280 = vpop.f32.mrf.mxu0
      %2281 = vdwg.mxu0
      %v2290 = vunpack.c.l.b16 %v1992
      %v2291 = vunpack.c.l.b16 %v1993
      %v2292 = vunpack.c.l.b16 %v1994
      %v2293 = vunpack.c.l.b16 %v1995
      %v2294 = vunpack.c.l.b16 %v1996
      %v2295 = vunpack.c.l.b16 %v1997
      %v2296 = vunpack.c.l.b16 %v1998
      %v2297 = vunpack.c.l.b16 %v1999
      %v2298 = vpack.c.b16 %v2291, %v2290
      %v2299 = vpack.c.b16 %v2293, %v2292
      %v2300 = vpack.c.b16 %v2295, %v2294
      %v2301 = vpack.c.b16 %v2297, %v2296
      %v2322 = vunpack.c.l.b16 %v2000
      %v2323 = vunpack.c.l.b16 %v2001
      %v2324 = vunpack.c.l.b16 %v2002
      %v2325 = vunpack.c.l.b16 %v2003
      %v2326 = vunpack.c.l.b16 %v2004
      %v2327 = vunpack.c.l.b16 %v2005
      %v2328 = vunpack.c.l.b16 %v2006
      %v2329 = vunpack.c.l.b16 %v2007
      %v2330 = vunpack.c.l.b16 %v2008
      %v2331 = vunpack.c.l.b16 %v2009
      %v2332 = vunpack.c.l.b16 %v2010
      %v2333 = vunpack.c.l.b16 %v2011
      %v2334 = vunpack.c.l.b16 %v2012
      %v2335 = vunpack.c.l.b16 %v2013
      %v2336 = vunpack.c.l.b16 %v2014
      %v2337 = vunpack.c.l.b16 %v2015
      %v2338 = vpack.c.b16 %v2323, %v2322
      %v2339 = vpack.c.b16 %v2325, %v2324
      %v2340 = vpack.c.b16 %v2327, %v2326
      %v2341 = vpack.c.b16 %v2329, %v2328
      %v2342 = vpack.c.b16 %v2331, %v2330
      %v2343 = vpack.c.b16 %v2333, %v2332
      %v2344 = vpack.c.b16 %v2335, %v2334
      %v2345 = vpack.c.b16 %v2337, %v2336
      %2354 = vmatprep.subr.bf16.mxu0 0
      %2355 = vmatpush1.bf16.msra.mxu0 %v2345
      %2356 = vmatprep.subr.bf16.mxu0 0
      %2357 = vmatpush1.bf16.msra.mxu0 %v2344
      %2358 = vmatprep.subr.bf16.mxu0 0
      %2359 = vmatpush1.bf16.msra.mxu0 %v2343
      %2360 = vmatprep.subr.bf16.mxu0 0
      %2361 = vmatpush1.bf16.msra.mxu0 %v2342
      %2362 = vmatprep.subr.bf16.mxu0 0
      %2363 = vmatpush1.bf16.msra.mxu0 %v2341
      %2364 = vmatprep.subr.bf16.mxu0 0
      %2365 = vmatpush1.bf16.msra.mxu0 %v2340
      %2366 = vmatprep.subr.bf16.mxu0 0
      %2367 = vmatpush1.bf16.msra.mxu0 %v2339
      %2368 = vmatprep.subr.bf16.mxu0 0
      %2369 = vmatpush1.bf16.msra.mxu0 %v2338
      %2370 = vmatprep.subr.bf16.mxu0 0
      %2371 = vmatpush2.bf16.msra.mxu0 0
      %2372 = vmatprep.subr.bf16.mxu0 0
      %2373 = vmatpush2.bf16.msra.mxu0 0
      %2374 = vmatprep.subr.bf16.mxu0 0
      %2375 = vmatpush2.bf16.msra.mxu0 0
      %2376 = vmatprep.subr.bf16.mxu0 0
      %2377 = vmatpush2.bf16.msra.mxu0 0
      %2378 = vmatprep.subr.bf16.mxu0 0
      %2379 = vmatpush2.bf16.msra.mxu0 0
      %2380 = vmatprep.subr.bf16.mxu0 0
      %2381 = vmatpush2.bf16.msra.mxu0 0
      %2382 = vmatprep.subr.bf16.mxu0 0
      %2383 = vmatpush2.bf16.msra.mxu0 0
      %2384 = vmatprep.subr.bf16.mxu0 0
      %2385 = vmatpush2.bf16.msra.mxu0 0
      %2386 = vmatprep.mubr.bf16.mxu0 0
      %2387 = vmatmul.mubr.bf16.gmra.mxu0 %v2298
      %v2388 = vpop.f32.mrf.mxu0
      %v2389 = vadd.f32 %v2252, %v2388
      %v2390 = vpop.f32.mrf.mxu0
      %v2391 = vpop.f32.mrf.mxu0
      %v2392 = vadd.f32 %v2255, %v2391
      %v2393 = vpop.f32.mrf.mxu0
      %2394 = vmatprep.mubr.bf16.mxu0 0
      %2395 = vmatmul.mubr.bf16.gmra.mxu0 %v2299
      %v2396 = vpop.f32.mrf.mxu0
      %v2397 = vadd.f32 %v2260, %v2396
      %v2398 = vpop.f32.mrf.mxu0
      %v2399 = vpop.f32.mrf.mxu0
      %v2400 = vadd.f32 %v2263, %v2399
      %v2401 = vpop.f32.mrf.mxu0
      %2402 = vmatprep.mubr.bf16.mxu0 0
      %2403 = vmatmul.mubr.bf16.gmra.mxu0 %v2300
      %v2404 = vpop.f32.mrf.mxu0
      %v2405 = vadd.f32 %v2268, %v2404
      %v2406 = vpop.f32.mrf.mxu0
      %v2407 = vpop.f32.mrf.mxu0
      %v2408 = vadd.f32 %v2271, %v2407
      %v2409 = vpop.f32.mrf.mxu0
      %2410 = vmatprep.mubr.bf16.mxu0 0
      %2411 = vmatmul.mubr.bf16.gmra.mxu0 %v2301
      %v2412 = vpop.f32.mrf.mxu0
      %v2413 = vadd.f32 %v2276, %v2412
      %v2414 = vpop.f32.mrf.mxu0
      %v2415 = vpop.f32.mrf.mxu0
      %v2416 = vadd.f32 %v2279, %v2415
      %v2417 = vpop.f32.mrf.mxu0
      %2418 = vdwg.mxu0
      %v2419 = vld [vmem:[#allocation2] sm:$0xe]
      %v2420 = vld [vmem:[#allocation2 + $0x8] sm:$0xe]
      %v2421 = vld [vmem:[#allocation2 + $0x10] sm:$0xe]
      %v2422 = vld [vmem:[#allocation2 + $0x18] sm:$0xe]
      %v2423 = vld [vmem:[#allocation2 + $0x20] sm:$0xe]
      %v2424 = vld [vmem:[#allocation2 + $0x28] sm:$0xe]
      %v2425 = vld [vmem:[#allocation2 + $0x30] sm:$0xe]
      %v2426 = vld [vmem:[#allocation2 + $0x38] sm:$0xe]
      %vm2443 = vcmask 1042432
      %vm2444 = vcmask 1046532
      %vm2445 = vmor %vm2443, %vm2444
      %v2446 = vrot.slane %v2419, 5
      %v2447 = vrot.slane %v2446, 4
      %v2448 = vrot.slane %v2016, 5
      %v2449 = vsel %vm2445, %v2447, %v2448
      %v2450 = vrot.slane %v2420, 5
      %v2451 = vrot.slane %v2450, 4
      %v2452 = vrot.slane %v2017, 5
      %v2453 = vsel %vm2445, %v2451, %v2452
      %v2454 = vrot.slane %v2421, 5
      %v2455 = vrot.slane %v2454, 4
      %v2456 = vrot.slane %v2018, 5
      %v2457 = vsel %vm2445, %v2455, %v2456
      %v2458 = vrot.slane %v2422, 5
      %v2459 = vrot.slane %v2458, 4
      %v2460 = vrot.slane %v2019, 5
      %v2461 = vsel %vm2445, %v2459, %v2460
      %v2462 = vrot.slane %v2423, 5
      %v2463 = vrot.slane %v2462, 4
      %v2464 = vrot.slane %v2020, 5
      %v2465 = vsel %vm2445, %v2463, %v2464
      %v2466 = vrot.slane %v2424, 5
      %v2467 = vrot.slane %v2466, 4
      %v2468 = vrot.slane %v2021, 5
      %v2469 = vsel %vm2445, %v2467, %v2468
      %v2470 = vrot.slane %v2425, 5
      %v2471 = vrot.slane %v2470, 4
      %v2472 = vrot.slane %v2022, 5
      %v2473 = vsel %vm2445, %v2471, %v2472
      %v2474 = vrot.slane %v2426, 5
      %v2475 = vrot.slane %v2474, 4
      %v2476 = vrot.slane %v2023, 5
      %v2477 = vsel %vm2445, %v2475, %v2476
      %s2478 = scalar_lea.vmem %s6, 128
      %v2479 = vld [vmem:[%s2478] sm:$0xf]
      %v2480 = vld [vmem:[%s2478 + $0x4] sm:$0xf]
      %v2481 = vld [vmem:[%s2478 + $0x8] sm:$0xf]
      %v2482 = vld [vmem:[%s2478 + $0xc] sm:$0xf]
      %v2483 = vld [vmem:[%s2478 + $0x10] sm:$0xf]
      %v2484 = vld [vmem:[%s2478 + $0x14] sm:$0xf]
      %v2485 = vld [vmem:[%s2478 + $0x18] sm:$0xf]
      %v2486 = vld [vmem:[%s2478 + $0x1c] sm:$0xf]
      %v2487 = vld [vmem:[%s2478 + $0x20] sm:$0xf]
      %v2488 = vld [vmem:[%s2478 + $0x24] sm:$0xf]
      %v2489 = vld [vmem:[%s2478 + $0x28] sm:$0xf]
      %v2490 = vld [vmem:[%s2478 + $0x2c] sm:$0xf]
      %v2491 = vld [vmem:[%s2478 + $0x30] sm:$0xf]
      %v2492 = vld [vmem:[%s2478 + $0x34] sm:$0xf]
      %v2493 = vld [vmem:[%s2478 + $0x38] sm:$0xf]
      %v2494 = vld [vmem:[%s2478 + $0x3c] sm:$0xf]
      %v2495 = vunpack.c.l.b16 %v2449
      %v2496 = vunpack.c.l.b16 %v2453
      %v2497 = vunpack.c.l.b16 %v2457
      %v2498 = vunpack.c.l.b16 %v2461
      %v2499 = vunpack.c.l.b16 %v2465
      %v2500 = vunpack.c.l.b16 %v2469
      %v2501 = vunpack.c.l.b16 %v2473
      %v2502 = vunpack.c.l.b16 %v2477
      %v2503 = vpack.c.b16 %v2496, %v2495
      %v2504 = vpack.c.b16 %v2498, %v2497
      %v2505 = vpack.c.b16 %v2500, %v2499
      %v2506 = vpack.c.b16 %v2502, %v2501
      %v2527 = vunpack.c.l.b16 %v2479
      %v2528 = vunpack.c.l.b16 %v2480
      %v2529 = vunpack.c.l.b16 %v2481
      %v2530 = vunpack.c.l.b16 %v2482
      %v2531 = vunpack.c.l.b16 %v2483
      %v2532 = vunpack.c.l.b16 %v2484
      %v2533 = vunpack.c.l.b16 %v2485
      %v2534 = vunpack.c.l.b16 %v2486
      %v2535 = vunpack.c.l.b16 %v2487
      %v2536 = vunpack.c.l.b16 %v2488
      %v2537 = vunpack.c.l.b16 %v2489
      %v2538 = vunpack.c.l.b16 %v2490
      %v2539 = vunpack.c.l.b16 %v2491
      %v2540 = vunpack.c.l.b16 %v2492
      %v2541 = vunpack.c.l.b16 %v2493
      %v2542 = vunpack.c.l.b16 %v2494
      %v2543 = vpack.c.b16 %v2528, %v2527
      %v2544 = vpack.c.b16 %v2530, %v2529
      %v2545 = vpack.c.b16 %v2532, %v2531
      %v2546 = vpack.c.b16 %v2534, %v2533
      %v2547 = vpack.c.b16 %v2536, %v2535
      %v2548 = vpack.c.b16 %v2538, %v2537
      %v2549 = vpack.c.b16 %v2540, %v2539
      %v2550 = vpack.c.b16 %v2542, %v2541
      %2559 = vmatprep.subr.bf16.mxu0 0
      %2560 = vmatpush1.bf16.msra.mxu0 %v2550
      %2561 = vmatprep.subr.bf16.mxu0 0
      %2562 = vmatpush1.bf16.msra.mxu0 %v2549
      %2563 = vmatprep.subr.bf16.mxu0 0
      %2564 = vmatpush1.bf16.msra.mxu0 %v2548
      %2565 = vmatprep.subr.bf16.mxu0 0
      %2566 = vmatpush1.bf16.msra.mxu0 %v2547
      %2567 = vmatprep.subr.bf16.mxu0 0
      %2568 = vmatpush1.bf16.msra.mxu0 %v2546
      %2569 = vmatprep.subr.bf16.mxu0 0
      %2570 = vmatpush1.bf16.msra.mxu0 %v2545
      %2571 = vmatprep.subr.bf16.mxu0 0
      %2572 = vmatpush1.bf16.msra.mxu0 %v2544
      %2573 = vmatprep.subr.bf16.mxu0 0
      %2574 = vmatpush1.bf16.msra.mxu0 %v2543
      %2575 = vmatprep.subr.bf16.mxu0 0
      %2576 = vmatpush2.bf16.msra.mxu0 0
      %2577 = vmatprep.subr.bf16.mxu0 0
      %2578 = vmatpush2.bf16.msra.mxu0 0
      %2579 = vmatprep.subr.bf16.mxu0 0
      %2580 = vmatpush2.bf16.msra.mxu0 0
      %2581 = vmatprep.subr.bf16.mxu0 0
      %2582 = vmatpush2.bf16.msra.mxu0 0
      %2583 = vmatprep.subr.bf16.mxu0 0
      %2584 = vmatpush2.bf16.msra.mxu0 0
      %2585 = vmatprep.subr.bf16.mxu0 0
      %2586 = vmatpush2.bf16.msra.mxu0 0
      %2587 = vmatprep.subr.bf16.mxu0 0
      %2588 = vmatpush2.bf16.msra.mxu0 0
      %2589 = vmatprep.subr.bf16.mxu0 0
      %2590 = vmatpush2.bf16.msra.mxu0 0
      %2591 = vmatprep.mubr.bf16.mxu0 0
      %2592 = vmatmul.mubr.bf16.gmra.mxu0 %v2503
      %v2593 = vpop.f32.mrf.mxu0
      %v2594 = vadd.f32 0.0, %v2593
      %v2595 = vpop.f32.mrf.mxu0
      %v2596 = vpop.f32.mrf.mxu0
      %v2597 = vadd.f32 0.0, %v2596
      %v2598 = vpop.f32.mrf.mxu0
      %2599 = vmatprep.mubr.bf16.mxu0 0
      %2600 = vmatmul.mubr.bf16.gmra.mxu0 %v2504
      %v2601 = vpop.f32.mrf.mxu0
      %v2602 = vadd.f32 0.0, %v2601
      %v2603 = vpop.f32.mrf.mxu0
      %v2604 = vpop.f32.mrf.mxu0
      %v2605 = vadd.f32 0.0, %v2604
      %v2606 = vpop.f32.mrf.mxu0
      %2607 = vmatprep.mubr.bf16.mxu0 0
      %2608 = vmatmul.mubr.bf16.gmra.mxu0 %v2505
      %v2609 = vpop.f32.mrf.mxu0
      %v2610 = vadd.f32 0.0, %v2609
      %v2611 = vpop.f32.mrf.mxu0
      %v2612 = vpop.f32.mrf.mxu0
      %v2613 = vadd.f32 0.0, %v2612
      %v2614 = vpop.f32.mrf.mxu0
      %2615 = vmatprep.mubr.bf16.mxu0 0
      %2616 = vmatmul.mubr.bf16.gmra.mxu0 %v2506
      %v2617 = vpop.f32.mrf.mxu0
      %v2618 = vadd.f32 0.0, %v2617
      %v2619 = vpop.f32.mrf.mxu0
      %v2620 = vpop.f32.mrf.mxu0
      %v2621 = vadd.f32 0.0, %v2620
      %v2622 = vpop.f32.mrf.mxu0
      %2623 = vdwg.mxu0
      %v2624 = vadd.f32 %v2389, %v2594
      %v2625 = vadd.f32 %v2392, %v2597
      %v2626 = vadd.f32 %v2397, %v2602
      %v2627 = vadd.f32 %v2400, %v2605
      %v2628 = vadd.f32 %v2405, %v2610
      %v2629 = vadd.f32 %v2408, %v2613
      %v2630 = vadd.f32 %v2413, %v2618
      %v2631 = vadd.f32 %v2416, %v2621
      %v2632 = vld [vmem:[%s1937] sm:$0xf]
      %v2633 = vld [vmem:[%s1937 + $0x8] sm:$0xf]
      %v2634 = vld [vmem:[%s1937 + $0x10] sm:$0xf]
      %v2635 = vld [vmem:[%s1937 + $0x18] sm:$0xf]
      %v2636 = vld [vmem:[%s1937 + $0x20] sm:$0xf]
      %v2637 = vld [vmem:[%s1937 + $0x28] sm:$0xf]
      %v2638 = vld [vmem:[%s1937 + $0x30] sm:$0xf]
      %v2639 = vld [vmem:[%s1937 + $0x38] sm:$0xf]
      %s2640 = scalar_lea.vmem %s6, 192
      %v2641 = vld [vmem:[%s2640] sm:$0xf]
      %v2642 = vld [vmem:[%s2640 + $0x4] sm:$0xf]
      %v2643 = vld [vmem:[%s2640 + $0x8] sm:$0xf]
      %v2644 = vld [vmem:[%s2640 + $0xc] sm:$0xf]
      %v2645 = vld [vmem:[%s2640 + $0x10] sm:$0xf]
      %v2646 = vld [vmem:[%s2640 + $0x14] sm:$0xf]
      %v2647 = vld [vmem:[%s2640 + $0x18] sm:$0xf]
      %v2648 = vld [vmem:[%s2640 + $0x1c] sm:$0xf]
      %v2649 = vld [vmem:[%s2640 + $0x20] sm:$0xf]
      %v2650 = vld [vmem:[%s2640 + $0x24] sm:$0xf]
      %v2651 = vld [vmem:[%s2640 + $0x28] sm:$0xf]
      %v2652 = vld [vmem:[%s2640 + $0x2c] sm:$0xf]
      %v2653 = vld [vmem:[%s2640 + $0x30] sm:$0xf]
      %v2654 = vld [vmem:[%s2640 + $0x34] sm:$0xf]
      %v2655 = vld [vmem:[%s2640 + $0x38] sm:$0xf]
      %v2656 = vld [vmem:[%s2640 + $0x3c] sm:$0xf]
      %v2665 = vunpack.c.l.b16 %v2632
      %v2666 = vunpack.c.l.b16 %v2633
      %v2667 = vunpack.c.l.b16 %v2634
      %v2668 = vunpack.c.l.b16 %v2635
      %v2669 = vunpack.c.l.b16 %v2636
      %v2670 = vunpack.c.l.b16 %v2637
      %v2671 = vunpack.c.l.b16 %v2638
      %v2672 = vunpack.c.l.b16 %v2639
      %v2673 = vpack.c.b16 %v2666, %v2665
      %v2674 = vpack.c.b16 %v2668, %v2667
      %v2675 = vpack.c.b16 %v2670, %v2669
      %v2676 = vpack.c.b16 %v2672, %v2671
      %v2697 = vunpack.c.l.b16 %v2641
      %v2698 = vunpack.c.l.b16 %v2642
      %v2699 = vunpack.c.l.b16 %v2643
      %v2700 = vunpack.c.l.b16 %v2644
      %v2701 = vunpack.c.l.b16 %v2645
      %v2702 = vunpack.c.l.b16 %v2646
      %v2703 = vunpack.c.l.b16 %v2647
      %v2704 = vunpack.c.l.b16 %v2648
      %v2705 = vunpack.c.l.b16 %v2649
      %v2706 = vunpack.c.l.b16 %v2650
      %v2707 = vunpack.c.l.b16 %v2651
      %v2708 = vunpack.c.l.b16 %v2652
      %v2709 = vunpack.c.l.b16 %v2653
      %v2710 = vunpack.c.l.b16 %v2654
      %v2711 = vunpack.c.l.b16 %v2655
      %v2712 = vunpack.c.l.b16 %v2656
      %v2713 = vpack.c.b16 %v2698, %v2697
      %v2714 = vpack.c.b16 %v2700, %v2699
      %v2715 = vpack.c.b16 %v2702, %v2701
      %v2716 = vpack.c.b16 %v2704, %v2703
      %v2717 = vpack.c.b16 %v2706, %v2705
      %v2718 = vpack.c.b16 %v2708, %v2707
      %v2719 = vpack.c.b16 %v2710, %v2709
      %v2720 = vpack.c.b16 %v2712, %v2711
      %2729 = vmatprep.subr.bf16.mxu0 0
      %2730 = vmatpush1.bf16.msra.mxu0 %v2720
      %2731 = vmatprep.subr.bf16.mxu0 0
      %2732 = vmatpush1.bf16.msra.mxu0 %v2719
      %2733 = vmatprep.subr.bf16.mxu0 0
      %2734 = vmatpush1.bf16.msra.mxu0 %v2718
      %2735 = vmatprep.subr.bf16.mxu0 0
      %2736 = vmatpush1.bf16.msra.mxu0 %v2717
      %2737 = vmatprep.subr.bf16.mxu0 0
      %2738 = vmatpush1.bf16.msra.mxu0 %v2716
      %2739 = vmatprep.subr.bf16.mxu0 0
      %2740 = vmatpush1.bf16.msra.mxu0 %v2715
      %2741 = vmatprep.subr.bf16.mxu0 0
      %2742 = vmatpush1.bf16.msra.mxu0 %v2714
      %2743 = vmatprep.subr.bf16.mxu0 0
      %2744 = vmatpush1.bf16.msra.mxu0 %v2713
      %2745 = vmatprep.subr.bf16.mxu0 0
      %2746 = vmatpush2.bf16.msra.mxu0 0
      %2747 = vmatprep.subr.bf16.mxu0 0
      %2748 = vmatpush2.bf16.msra.mxu0 0
      %2749 = vmatprep.subr.bf16.mxu0 0
      %2750 = vmatpush2.bf16.msra.mxu0 0
      %2751 = vmatprep.subr.bf16.mxu0 0
      %2752 = vmatpush2.bf16.msra.mxu0 0
      %2753 = vmatprep.subr.bf16.mxu0 0
      %2754 = vmatpush2.bf16.msra.mxu0 0
      %2755 = vmatprep.subr.bf16.mxu0 0
      %2756 = vmatpush2.bf16.msra.mxu0 0
      %2757 = vmatprep.subr.bf16.mxu0 0
      %2758 = vmatpush2.bf16.msra.mxu0 0
      %2759 = vmatprep.subr.bf16.mxu0 0
      %2760 = vmatpush2.bf16.msra.mxu0 0
      %2761 = vmatprep.mubr.bf16.mxu0 0
      %2762 = vmatmul.mubr.bf16.gmra.mxu0 %v2673
      %v2763 = vpop.f32.mrf.mxu0
      %v2764 = vadd.f32 0.0, %v2763
      %v2765 = vpop.f32.mrf.mxu0
      %v2766 = vpop.f32.mrf.mxu0
      %v2767 = vadd.f32 0.0, %v2766
      %v2768 = vpop.f32.mrf.mxu0
      %2769 = vmatprep.mubr.bf16.mxu0 0
      %2770 = vmatmul.mubr.bf16.gmra.mxu0 %v2674
      %v2771 = vpop.f32.mrf.mxu0
      %v2772 = vadd.f32 0.0, %v2771
      %v2773 = vpop.f32.mrf.mxu0
      %v2774 = vpop.f32.mrf.mxu0
      %v2775 = vadd.f32 0.0, %v2774
      %v2776 = vpop.f32.mrf.mxu0
      %2777 = vmatprep.mubr.bf16.mxu0 0
      %2778 = vmatmul.mubr.bf16.gmra.mxu0 %v2675
      %v2779 = vpop.f32.mrf.mxu0
      %v2780 = vadd.f32 0.0, %v2779
      %v2781 = vpop.f32.mrf.mxu0
      %v2782 = vpop.f32.mrf.mxu0
      %v2783 = vadd.f32 0.0, %v2782
      %v2784 = vpop.f32.mrf.mxu0
      %2785 = vmatprep.mubr.bf16.mxu0 0
      %2786 = vmatmul.mubr.bf16.gmra.mxu0 %v2676
      %v2787 = vpop.f32.mrf.mxu0
      %v2788 = vadd.f32 0.0, %v2787
      %v2789 = vpop.f32.mrf.mxu0
      %v2790 = vpop.f32.mrf.mxu0
      %v2791 = vadd.f32 0.0, %v2790
      %v2792 = vpop.f32.mrf.mxu0
      %2793 = vdwg.mxu0
      %v2794 = vadd.f32 %v2624, %v2764
      %v2795 = vadd.f32 %v2625, %v2767
      %v2796 = vadd.f32 %v2626, %v2772
      %v2797 = vadd.f32 %v2627, %v2775
      %v2798 = vadd.f32 %v2628, %v2780
      %v2799 = vadd.f32 %v2629, %v2783
      %v2800 = vadd.f32 %v2630, %v2788
      %v2801 = vadd.f32 %v2631, %v2791
      %v2802 = vld [vmem:[%s1937] sm:$0xf]
      %v2803 = vld [vmem:[%s1937 + $0x4] sm:$0x1]
      %v2804 = vld [vmem:[%s1937 + $0x8] sm:$0xf]
      %v2805 = vld [vmem:[%s1937 + $0xc] sm:$0x1]
      %v2806 = vld [vmem:[%s1937 + $0x10] sm:$0xf]
      %v2807 = vld [vmem:[%s1937 + $0x14] sm:$0x1]
      %v2808 = vld [vmem:[%s1937 + $0x18] sm:$0xf]
      %v2809 = vld [vmem:[%s1937 + $0x1c] sm:$0x1]
      %v2810 = vld [vmem:[%s1937 + $0x20] sm:$0xf]
      %v2811 = vld [vmem:[%s1937 + $0x24] sm:$0x1]
      %v2812 = vld [vmem:[%s1937 + $0x28] sm:$0xf]
      %v2813 = vld [vmem:[%s1937 + $0x2c] sm:$0x1]
      %v2814 = vld [vmem:[%s1937 + $0x30] sm:$0xf]
      %v2815 = vld [vmem:[%s1937 + $0x34] sm:$0x1]
      %v2816 = vld [vmem:[%s1937 + $0x38] sm:$0xf]
      %v2817 = vld [vmem:[%s1937 + $0x3c] sm:$0x1]
      %v2819 = vshrl.u32 %v2802, 16
      %v2821 = vrot.slane %v2819, 4
      %v2822 = vshll.u32 %v2802, 16
      %v2824 = vrot.slane %v2822, 5
      %v2825 = vor.u32 %v2821, %v2824
      %v2826 = vrot.slane %v2825, 4
      %v2828 = vshll.u32 %v2803, 16
      %v2830 = vrot.slane %v2828, 5
      %v2831 = vsel %vm633, %v2826, %v2830
      %v2833 = vshrl.u32 %v2804, 16
      %v2835 = vrot.slane %v2833, 4
      %v2836 = vshll.u32 %v2804, 16
      %v2838 = vrot.slane %v2836, 5
      %v2839 = vor.u32 %v2835, %v2838
      %v2840 = vrot.slane %v2839, 4
      %v2842 = vshll.u32 %v2805, 16
      %v2844 = vrot.slane %v2842, 5
      %v2845 = vsel %vm633, %v2840, %v2844
      %v2847 = vshrl.u32 %v2806, 16
      %v2849 = vrot.slane %v2847, 4
      %v2850 = vshll.u32 %v2806, 16
      %v2852 = vrot.slane %v2850, 5
      %v2853 = vor.u32 %v2849, %v2852
      %v2854 = vrot.slane %v2853, 4
      %v2856 = vshll.u32 %v2807, 16
      %v2858 = vrot.slane %v2856, 5
      %v2859 = vsel %vm633, %v2854, %v2858
      %v2861 = vshrl.u32 %v2808, 16
      %v2863 = vrot.slane %v2861, 4
      %v2864 = vshll.u32 %v2808, 16
      %v2866 = vrot.slane %v2864, 5
      %v2867 = vor.u32 %v2863, %v2866
      %v2868 = vrot.slane %v2867, 4
      %v2870 = vshll.u32 %v2809, 16
      %v2872 = vrot.slane %v2870, 5
      %v2873 = vsel %vm633, %v2868, %v2872
      %v2875 = vshrl.u32 %v2810, 16
      %v2877 = vrot.slane %v2875, 4
      %v2878 = vshll.u32 %v2810, 16
      %v2880 = vrot.slane %v2878, 5
      %v2881 = vor.u32 %v2877, %v2880
      %v2882 = vrot.slane %v2881, 4
      %v2884 = vshll.u32 %v2811, 16
      %v2886 = vrot.slane %v2884, 5
      %v2887 = vsel %vm633, %v2882, %v2886
      %v2889 = vshrl.u32 %v2812, 16
      %v2891 = vrot.slane %v2889, 4
      %v2892 = vshll.u32 %v2812, 16
      %v2894 = vrot.slane %v2892, 5
      %v2895 = vor.u32 %v2891, %v2894
      %v2896 = vrot.slane %v2895, 4
      %v2898 = vshll.u32 %v2813, 16
      %v2900 = vrot.slane %v2898, 5
      %v2901 = vsel %vm633, %v2896, %v2900
      %v2903 = vshrl.u32 %v2814, 16
      %v2905 = vrot.slane %v2903, 4
      %v2906 = vshll.u32 %v2814, 16
      %v2908 = vrot.slane %v2906, 5
      %v2909 = vor.u32 %v2905, %v2908
      %v2910 = vrot.slane %v2909, 4
      %v2912 = vshll.u32 %v2815, 16
      %v2914 = vrot.slane %v2912, 5
      %v2915 = vsel %vm633, %v2910, %v2914
      %v2917 = vshrl.u32 %v2816, 16
      %v2919 = vrot.slane %v2917, 4
      %v2920 = vshll.u32 %v2816, 16
      %v2922 = vrot.slane %v2920, 5
      %v2923 = vor.u32 %v2919, %v2922
      %v2924 = vrot.slane %v2923, 4
      %v2926 = vshll.u32 %v2817, 16
      %v2928 = vrot.slane %v2926, 5
      %v2929 = vsel %vm633, %v2924, %v2928
      %s2930 = scalar_lea.vmem %s6, 256
      %v2931 = vld [vmem:[%s2930] sm:$0xf]
      %v2932 = vld [vmem:[%s2930 + $0x4] sm:$0xf]
      %v2933 = vld [vmem:[%s2930 + $0x8] sm:$0xf]
      %v2934 = vld [vmem:[%s2930 + $0xc] sm:$0xf]
      %v2935 = vld [vmem:[%s2930 + $0x10] sm:$0xf]
      %v2936 = vld [vmem:[%s2930 + $0x14] sm:$0xf]
      %v2937 = vld [vmem:[%s2930 + $0x18] sm:$0xf]
      %v2938 = vld [vmem:[%s2930 + $0x1c] sm:$0xf]
      %v2939 = vld [vmem:[%s2930 + $0x20] sm:$0xf]
      %v2940 = vld [vmem:[%s2930 + $0x24] sm:$0xf]
      %v2941 = vld [vmem:[%s2930 + $0x28] sm:$0xf]
      %v2942 = vld [vmem:[%s2930 + $0x2c] sm:$0xf]
      %v2943 = vld [vmem:[%s2930 + $0x30] sm:$0xf]
      %v2944 = vld [vmem:[%s2930 + $0x34] sm:$0xf]
      %v2945 = vld [vmem:[%s2930 + $0x38] sm:$0xf]
      %v2946 = vld [vmem:[%s2930 + $0x3c] sm:$0xf]
      %v2947 = vunpack.c.l.b16 %v2831
      %v2948 = vunpack.c.l.b16 %v2845
      %v2949 = vunpack.c.l.b16 %v2859
      %v2950 = vunpack.c.l.b16 %v2873
      %v2951 = vunpack.c.l.b16 %v2887
      %v2952 = vunpack.c.l.b16 %v2901
      %v2953 = vunpack.c.l.b16 %v2915
      %v2954 = vunpack.c.l.b16 %v2929
      %v2955 = vpack.c.b16 %v2948, %v2947
      %v2956 = vpack.c.b16 %v2950, %v2949
      %v2957 = vpack.c.b16 %v2952, %v2951
      %v2958 = vpack.c.b16 %v2954, %v2953
      %v2979 = vunpack.c.l.b16 %v2931
      %v2980 = vunpack.c.l.b16 %v2932
      %v2981 = vunpack.c.l.b16 %v2933
      %v2982 = vunpack.c.l.b16 %v2934
      %v2983 = vunpack.c.l.b16 %v2935
      %v2984 = vunpack.c.l.b16 %v2936
      %v2985 = vunpack.c.l.b16 %v2937
      %v2986 = vunpack.c.l.b16 %v2938
      %v2987 = vunpack.c.l.b16 %v2939
      %v2988 = vunpack.c.l.b16 %v2940
      %v2989 = vunpack.c.l.b16 %v2941
      %v2990 = vunpack.c.l.b16 %v2942
      %v2991 = vunpack.c.l.b16 %v2943
      %v2992 = vunpack.c.l.b16 %v2944
      %v2993 = vunpack.c.l.b16 %v2945
      %v2994 = vunpack.c.l.b16 %v2946
      %v2995 = vpack.c.b16 %v2980, %v2979
      %v2996 = vpack.c.b16 %v2982, %v2981
      %v2997 = vpack.c.b16 %v2984, %v2983
      %v2998 = vpack.c.b16 %v2986, %v2985
      %v2999 = vpack.c.b16 %v2988, %v2987
      %v3000 = vpack.c.b16 %v2990, %v2989
      %v3001 = vpack.c.b16 %v2992, %v2991
      %v3002 = vpack.c.b16 %v2994, %v2993
      %3011 = vmatprep.subr.bf16.mxu0 0
      %3012 = vmatpush1.bf16.msra.mxu0 %v3002
      %3013 = vmatprep.subr.bf16.mxu0 0
      %3014 = vmatpush1.bf16.msra.mxu0 %v3001
      %3015 = vmatprep.subr.bf16.mxu0 0
      %3016 = vmatpush1.bf16.msra.mxu0 %v3000
      %3017 = vmatprep.subr.bf16.mxu0 0
      %3018 = vmatpush1.bf16.msra.mxu0 %v2999
      %3019 = vmatprep.subr.bf16.mxu0 0
      %3020 = vmatpush1.bf16.msra.mxu0 %v2998
      %3021 = vmatprep.subr.bf16.mxu0 0
      %3022 = vmatpush1.bf16.msra.mxu0 %v2997
      %3023 = vmatprep.subr.bf16.mxu0 0
      %3024 = vmatpush1.bf16.msra.mxu0 %v2996
      %3025 = vmatprep.subr.bf16.mxu0 0
      %3026 = vmatpush1.bf16.msra.mxu0 %v2995
      %3027 = vmatprep.subr.bf16.mxu0 0
      %3028 = vmatpush2.bf16.msra.mxu0 0
      %3029 = vmatprep.subr.bf16.mxu0 0
      %3030 = vmatpush2.bf16.msra.mxu0 0
      %3031 = vmatprep.subr.bf16.mxu0 0
      %3032 = vmatpush2.bf16.msra.mxu0 0
      %3033 = vmatprep.subr.bf16.mxu0 0
      %3034 = vmatpush2.bf16.msra.mxu0 0
      %3035 = vmatprep.subr.bf16.mxu0 0
      %3036 = vmatpush2.bf16.msra.mxu0 0
      %3037 = vmatprep.subr.bf16.mxu0 0
      %3038 = vmatpush2.bf16.msra.mxu0 0
      %3039 = vmatprep.subr.bf16.mxu0 0
      %3040 = vmatpush2.bf16.msra.mxu0 0
      %3041 = vmatprep.subr.bf16.mxu0 0
      %3042 = vmatpush2.bf16.msra.mxu0 0
      %3043 = vmatprep.mubr.bf16.mxu0 0
      %3044 = vmatmul.mubr.bf16.gmra.mxu0 %v2955
      %v3045 = vpop.f32.mrf.mxu0
      %v3046 = vadd.f32 0.0, %v3045
      %v3047 = vpop.f32.mrf.mxu0
      %v3048 = vpop.f32.mrf.mxu0
      %v3049 = vadd.f32 0.0, %v3048
      %v3050 = vpop.f32.mrf.mxu0
      %3051 = vmatprep.mubr.bf16.mxu0 0
      %3052 = vmatmul.mubr.bf16.gmra.mxu0 %v2956
      %v3053 = vpop.f32.mrf.mxu0
      %v3054 = vadd.f32 0.0, %v3053
      %v3055 = vpop.f32.mrf.mxu0
      %v3056 = vpop.f32.mrf.mxu0
      %v3057 = vadd.f32 0.0, %v3056
      %v3058 = vpop.f32.mrf.mxu0
      %3059 = vmatprep.mubr.bf16.mxu0 0
      %3060 = vmatmul.mubr.bf16.gmra.mxu0 %v2957
      %v3061 = vpop.f32.mrf.mxu0
      %v3062 = vadd.f32 0.0, %v3061
      %v3063 = vpop.f32.mrf.mxu0
      %v3064 = vpop.f32.mrf.mxu0
      %v3065 = vadd.f32 0.0, %v3064
      %v3066 = vpop.f32.mrf.mxu0
      %3067 = vmatprep.mubr.bf16.mxu0 0
      %3068 = vmatmul.mubr.bf16.gmra.mxu0 %v2958
      %v3069 = vpop.f32.mrf.mxu0
      %v3070 = vadd.f32 0.0, %v3069
      %v3071 = vpop.f32.mrf.mxu0
      %v3072 = vpop.f32.mrf.mxu0
      %v3073 = vadd.f32 0.0, %v3072
      %v3074 = vpop.f32.mrf.mxu0
      %3075 = vdwg.mxu0
      %v3076 = vadd.f32 %v2794, %v3046
      %v3077 = vadd.f32 %v2795, %v3049
      %v3078 = vadd.f32 %v2796, %v3054
      %v3079 = vadd.f32 %v2797, %v3057
      %v3080 = vadd.f32 %v2798, %v3062
      %v3081 = vadd.f32 %v2799, %v3065
      %v3082 = vadd.f32 %v2800, %v3070
      %v3083 = vadd.f32 %v2801, %v3073
      %v3084 = vld [vmem:[%s1937] sm:$0xe]
      %v3085 = vld [vmem:[%s1937 + $0x8] sm:$0xe]
      %v3086 = vld [vmem:[%s1937 + $0x10] sm:$0xe]
      %v3087 = vld [vmem:[%s1937 + $0x18] sm:$0xe]
      %v3088 = vld [vmem:[%s1937 + $0x20] sm:$0xe]
      %v3089 = vld [vmem:[%s1937 + $0x28] sm:$0xe]
      %v3090 = vld [vmem:[%s1937 + $0x30] sm:$0xe]
      %v3091 = vld [vmem:[%s1937 + $0x38] sm:$0xe]
      %v3108 = vrot.slane %v3084, 5
      %v3109 = vrot.slane %v3108, 4
      %v3110 = vrot.slane %v2803, 5
      %v3111 = vsel %vm2445, %v3109, %v3110
      %v3112 = vrot.slane %v3085, 5
      %v3113 = vrot.slane %v3112, 4
      %v3114 = vrot.slane %v2805, 5
      %v3115 = vsel %vm2445, %v3113, %v3114
      %v3116 = vrot.slane %v3086, 5
      %v3117 = vrot.slane %v3116, 4
      %v3118 = vrot.slane %v2807, 5
      %v3119 = vsel %vm2445, %v3117, %v3118
      %v3120 = vrot.slane %v3087, 5
      %v3121 = vrot.slane %v3120, 4
      %v3122 = vrot.slane %v2809, 5
      %v3123 = vsel %vm2445, %v3121, %v3122
      %v3124 = vrot.slane %v3088, 5
      %v3125 = vrot.slane %v3124, 4
      %v3126 = vrot.slane %v2811, 5
      %v3127 = vsel %vm2445, %v3125, %v3126
      %v3128 = vrot.slane %v3089, 5
      %v3129 = vrot.slane %v3128, 4
      %v3130 = vrot.slane %v2813, 5
      %v3131 = vsel %vm2445, %v3129, %v3130
      %v3132 = vrot.slane %v3090, 5
      %v3133 = vrot.slane %v3132, 4
      %v3134 = vrot.slane %v2815, 5
      %v3135 = vsel %vm2445, %v3133, %v3134
      %v3136 = vrot.slane %v3091, 5
      %v3137 = vrot.slane %v3136, 4
      %v3138 = vrot.slane %v2817, 5
      %v3139 = vsel %vm2445, %v3137, %v3138
      %s3140 = scalar_lea.vmem %s6, 320
      %v3141 = vld [vmem:[%s3140] sm:$0xf]
      %v3142 = vld [vmem:[%s3140 + $0x4] sm:$0xf]
      %v3143 = vld [vmem:[%s3140 + $0x8] sm:$0xf]
      %v3144 = vld [vmem:[%s3140 + $0xc] sm:$0xf]
      %v3145 = vld [vmem:[%s3140 + $0x10] sm:$0xf]
      %v3146 = vld [vmem:[%s3140 + $0x14] sm:$0xf]
      %v3147 = vld [vmem:[%s3140 + $0x18] sm:$0xf]
      %v3148 = vld [vmem:[%s3140 + $0x1c] sm:$0xf]
      %v3149 = vld [vmem:[%s3140 + $0x20] sm:$0xf]
      %v3150 = vld [vmem:[%s3140 + $0x24] sm:$0xf]
      %v3151 = vld [vmem:[%s3140 + $0x28] sm:$0xf]
      %v3152 = vld [vmem:[%s3140 + $0x2c] sm:$0xf]
      %v3153 = vld [vmem:[%s3140 + $0x30] sm:$0xf]
      %v3154 = vld [vmem:[%s3140 + $0x34] sm:$0xf]
      %v3155 = vld [vmem:[%s3140 + $0x38] sm:$0xf]
      %v3156 = vld [vmem:[%s3140 + $0x3c] sm:$0xf]
      %v3157 = vunpack.c.l.b16 %v3111
      %v3158 = vunpack.c.l.b16 %v3115
      %v3159 = vunpack.c.l.b16 %v3119
      %v3160 = vunpack.c.l.b16 %v3123
      %v3161 = vunpack.c.l.b16 %v3127
      %v3162 = vunpack.c.l.b16 %v3131
      %v3163 = vunpack.c.l.b16 %v3135
      %v3164 = vunpack.c.l.b16 %v3139
      %v3165 = vpack.c.b16 %v3158, %v3157
      %v3166 = vpack.c.b16 %v3160, %v3159
      %v3167 = vpack.c.b16 %v3162, %v3161
      %v3168 = vpack.c.b16 %v3164, %v3163
      %v3189 = vunpack.c.l.b16 %v3141
      %v3190 = vunpack.c.l.b16 %v3142
      %v3191 = vunpack.c.l.b16 %v3143
      %v3192 = vunpack.c.l.b16 %v3144
      %v3193 = vunpack.c.l.b16 %v3145
      %v3194 = vunpack.c.l.b16 %v3146
      %v3195 = vunpack.c.l.b16 %v3147
      %v3196 = vunpack.c.l.b16 %v3148
      %v3197 = vunpack.c.l.b16 %v3149
      %v3198 = vunpack.c.l.b16 %v3150
      %v3199 = vunpack.c.l.b16 %v3151
      %v3200 = vunpack.c.l.b16 %v3152
      %v3201 = vunpack.c.l.b16 %v3153
      %v3202 = vunpack.c.l.b16 %v3154
      %v3203 = vunpack.c.l.b16 %v3155
      %v3204 = vunpack.c.l.b16 %v3156
      %v3205 = vpack.c.b16 %v3190, %v3189
      %v3206 = vpack.c.b16 %v3192, %v3191
      %v3207 = vpack.c.b16 %v3194, %v3193
      %v3208 = vpack.c.b16 %v3196, %v3195
      %v3209 = vpack.c.b16 %v3198, %v3197
      %v3210 = vpack.c.b16 %v3200, %v3199
      %v3211 = vpack.c.b16 %v3202, %v3201
      %v3212 = vpack.c.b16 %v3204, %v3203
      %3221 = vmatprep.subr.bf16.mxu0 0
      %3222 = vmatpush1.bf16.msra.mxu0 %v3212
      %3223 = vmatprep.subr.bf16.mxu0 0
      %3224 = vmatpush1.bf16.msra.mxu0 %v3211
      %3225 = vmatprep.subr.bf16.mxu0 0
      %3226 = vmatpush1.bf16.msra.mxu0 %v3210
      %3227 = vmatprep.subr.bf16.mxu0 0
      %3228 = vmatpush1.bf16.msra.mxu0 %v3209
      %3229 = vmatprep.subr.bf16.mxu0 0
      %3230 = vmatpush1.bf16.msra.mxu0 %v3208
      %3231 = vmatprep.subr.bf16.mxu0 0
      %3232 = vmatpush1.bf16.msra.mxu0 %v3207
      %3233 = vmatprep.subr.bf16.mxu0 0
      %3234 = vmatpush1.bf16.msra.mxu0 %v3206
      %3235 = vmatprep.subr.bf16.mxu0 0
      %3236 = vmatpush1.bf16.msra.mxu0 %v3205
      %3237 = vmatprep.subr.bf16.mxu0 0
      %3238 = vmatpush2.bf16.msra.mxu0 0
      %3239 = vmatprep.subr.bf16.mxu0 0
      %3240 = vmatpush2.bf16.msra.mxu0 0
      %3241 = vmatprep.subr.bf16.mxu0 0
      %3242 = vmatpush2.bf16.msra.mxu0 0
      %3243 = vmatprep.subr.bf16.mxu0 0
      %3244 = vmatpush2.bf16.msra.mxu0 0
      %3245 = vmatprep.subr.bf16.mxu0 0
      %3246 = vmatpush2.bf16.msra.mxu0 0
      %3247 = vmatprep.subr.bf16.mxu0 0
      %3248 = vmatpush2.bf16.msra.mxu0 0
      %3249 = vmatprep.subr.bf16.mxu0 0
      %3250 = vmatpush2.bf16.msra.mxu0 0
      %3251 = vmatprep.subr.bf16.mxu0 0
      %3252 = vmatpush2.bf16.msra.mxu0 0
      %3253 = vmatprep.mubr.bf16.mxu0 0
      %3254 = vmatmul.mubr.bf16.gmra.mxu0 %v3165
      %v3255 = vpop.f32.mrf.mxu0
      %v3256 = vadd.f32 0.0, %v3255
      %v3257 = vpop.f32.mrf.mxu0
      %v3258 = vpop.f32.mrf.mxu0
      %v3259 = vadd.f32 0.0, %v3258
      %v3260 = vpop.f32.mrf.mxu0
      %3261 = vmatprep.mubr.bf16.mxu0 0
      %3262 = vmatmul.mubr.bf16.gmra.mxu0 %v3166
      %v3263 = vpop.f32.mrf.mxu0
      %v3264 = vadd.f32 0.0, %v3263
      %v3265 = vpop.f32.mrf.mxu0
      %v3266 = vpop.f32.mrf.mxu0
      %v3267 = vadd.f32 0.0, %v3266
      %v3268 = vpop.f32.mrf.mxu0
      %3269 = vmatprep.mubr.bf16.mxu0 0
      %3270 = vmatmul.mubr.bf16.gmra.mxu0 %v3167
      %v3271 = vpop.f32.mrf.mxu0
      %v3272 = vadd.f32 0.0, %v3271
      %v3273 = vpop.f32.mrf.mxu0
      %v3274 = vpop.f32.mrf.mxu0
      %v3275 = vadd.f32 0.0, %v3274
      %v3276 = vpop.f32.mrf.mxu0
      %3277 = vmatprep.mubr.bf16.mxu0 0
      %3278 = vmatmul.mubr.bf16.gmra.mxu0 %v3168
      %v3279 = vpop.f32.mrf.mxu0
      %v3280 = vadd.f32 0.0, %v3279
      %v3281 = vpop.f32.mrf.mxu0
      %v3282 = vpop.f32.mrf.mxu0
      %v3283 = vadd.f32 0.0, %v3282
      %v3284 = vpop.f32.mrf.mxu0
      %3285 = vdwg.mxu0
      %v3286 = vadd.f32 %v3076, %v3256
      %v3287 = vadd.f32 %v3077, %v3259
      %v3288 = vadd.f32 %v3078, %v3264
      %v3289 = vadd.f32 %v3079, %v3267
      %v3290 = vadd.f32 %v3080, %v3272
      %v3291 = vadd.f32 %v3081, %v3275
      %v3292 = vadd.f32 %v3082, %v3280
      %v3293 = vadd.f32 %v3083, %v3283
      %s3294 = scalar_lea.vmem [#allocation2], 16
      %v3295 = vld [vmem:[%s3294] sm:$0xf]
      %v3296 = vld [vmem:[%s3294 + $0x8] sm:$0xf]
      %v3297 = vld [vmem:[%s3294 + $0x10] sm:$0xf]
      %v3298 = vld [vmem:[%s3294 + $0x18] sm:$0xf]
      %v3299 = vld [vmem:[%s3294 + $0x20] sm:$0xf]
      %v3300 = vld [vmem:[%s3294 + $0x28] sm:$0xf]
      %v3301 = vld [vmem:[%s3294 + $0x30] sm:$0xf]
      %v3302 = vld [vmem:[%s3294 + $0x38] sm:$0xf]
      %s3303 = scalar_lea.vmem %s6, 384
      %v3304 = vld [vmem:[%s3303] sm:$0xf]
      %v3305 = vld [vmem:[%s3303 + $0x4] sm:$0xf]
      %v3306 = vld [vmem:[%s3303 + $0x8] sm:$0xf]
      %v3307 = vld [vmem:[%s3303 + $0xc] sm:$0xf]
      %v3308 = vld [vmem:[%s3303 + $0x10] sm:$0xf]
      %v3309 = vld [vmem:[%s3303 + $0x14] sm:$0xf]
      %v3310 = vld [vmem:[%s3303 + $0x18] sm:$0xf]
      %v3311 = vld [vmem:[%s3303 + $0x1c] sm:$0xf]
      %v3312 = vld [vmem:[%s3303 + $0x20] sm:$0xf]
      %v3313 = vld [vmem:[%s3303 + $0x24] sm:$0xf]
      %v3314 = vld [vmem:[%s3303 + $0x28] sm:$0xf]
      %v3315 = vld [vmem:[%s3303 + $0x2c] sm:$0xf]
      %v3316 = vld [vmem:[%s3303 + $0x30] sm:$0xf]
      %v3317 = vld [vmem:[%s3303 + $0x34] sm:$0xf]
      %v3318 = vld [vmem:[%s3303 + $0x38] sm:$0xf]
      %v3319 = vld [vmem:[%s3303 + $0x3c] sm:$0xf]
      %v3328 = vunpack.c.l.b16 %v3295
      %v3329 = vunpack.c.l.b16 %v3296
      %v3330 = vunpack.c.l.b16 %v3297
      %v3331 = vunpack.c.l.b16 %v3298
      %v3332 = vunpack.c.l.b16 %v3299
      %v3333 = vunpack.c.l.b16 %v3300
      %v3334 = vunpack.c.l.b16 %v3301
      %v3335 = vunpack.c.l.b16 %v3302
      %v3336 = vpack.c.b16 %v3329, %v3328
      %v3337 = vpack.c.b16 %v3331, %v3330
      %v3338 = vpack.c.b16 %v3333, %v3332
      %v3339 = vpack.c.b16 %v3335, %v3334
      %v3360 = vunpack.c.l.b16 %v3304
      %v3361 = vunpack.c.l.b16 %v3305
      %v3362 = vunpack.c.l.b16 %v3306
      %v3363 = vunpack.c.l.b16 %v3307
      %v3364 = vunpack.c.l.b16 %v3308
      %v3365 = vunpack.c.l.b16 %v3309
      %v3366 = vunpack.c.l.b16 %v3310
      %v3367 = vunpack.c.l.b16 %v3311
      %v3368 = vunpack.c.l.b16 %v3312
      %v3369 = vunpack.c.l.b16 %v3313
      %v3370 = vunpack.c.l.b16 %v3314
      %v3371 = vunpack.c.l.b16 %v3315
      %v3372 = vunpack.c.l.b16 %v3316
      %v3373 = vunpack.c.l.b16 %v3317
      %v3374 = vunpack.c.l.b16 %v3318
      %v3375 = vunpack.c.l.b16 %v3319
      %v3376 = vpack.c.b16 %v3361, %v3360
      %v3377 = vpack.c.b16 %v3363, %v3362
      %v3378 = vpack.c.b16 %v3365, %v3364
      %v3379 = vpack.c.b16 %v3367, %v3366
      %v3380 = vpack.c.b16 %v3369, %v3368
      %v3381 = vpack.c.b16 %v3371, %v3370
      %v3382 = vpack.c.b16 %v3373, %v3372
      %v3383 = vpack.c.b16 %v3375, %v3374
      %3392 = vmatprep.subr.bf16.mxu0 0
      %3393 = vmatpush1.bf16.msra.mxu0 %v3383
      %3394 = vmatprep.subr.bf16.mxu0 0
      %3395 = vmatpush1.bf16.msra.mxu0 %v3382
      %3396 = vmatprep.subr.bf16.mxu0 0
      %3397 = vmatpush1.bf16.msra.mxu0 %v3381
      %3398 = vmatprep.subr.bf16.mxu0 0
      %3399 = vmatpush1.bf16.msra.mxu0 %v3380
      %3400 = vmatprep.subr.bf16.mxu0 0
      %3401 = vmatpush1.bf16.msra.mxu0 %v3379
      %3402 = vmatprep.subr.bf16.mxu0 0
      %3403 = vmatpush1.bf16.msra.mxu0 %v3378
      %3404 = vmatprep.subr.bf16.mxu0 0
      %3405 = vmatpush1.bf16.msra.mxu0 %v3377
      %3406 = vmatprep.subr.bf16.mxu0 0
      %3407 = vmatpush1.bf16.msra.mxu0 %v3376
      %3408 = vmatprep.subr.bf16.mxu0 0
      %3409 = vmatpush2.bf16.msra.mxu0 0
      %3410 = vmatprep.subr.bf16.mxu0 0
      %3411 = vmatpush2.bf16.msra.mxu0 0
      %3412 = vmatprep.subr.bf16.mxu0 0
      %3413 = vmatpush2.bf16.msra.mxu0 0
      %3414 = vmatprep.subr.bf16.mxu0 0
      %3415 = vmatpush2.bf16.msra.mxu0 0
      %3416 = vmatprep.subr.bf16.mxu0 0
      %3417 = vmatpush2.bf16.msra.mxu0 0
      %3418 = vmatprep.subr.bf16.mxu0 0
      %3419 = vmatpush2.bf16.msra.mxu0 0
      %3420 = vmatprep.subr.bf16.mxu0 0
      %3421 = vmatpush2.bf16.msra.mxu0 0
      %3422 = vmatprep.subr.bf16.mxu0 0
      %3423 = vmatpush2.bf16.msra.mxu0 0
      %3424 = vmatprep.mubr.bf16.mxu0 0
      %3425 = vmatmul.mubr.bf16.gmra.mxu0 %v3336
      %v3426 = vpop.f32.mrf.mxu0
      %v3427 = vadd.f32 0.0, %v3426
      %v3428 = vpop.f32.mrf.mxu0
      %v3429 = vpop.f32.mrf.mxu0
      %v3430 = vadd.f32 0.0, %v3429
      %v3431 = vpop.f32.mrf.mxu0
      %3432 = vmatprep.mubr.bf16.mxu0 0
      %3433 = vmatmul.mubr.bf16.gmra.mxu0 %v3337
      %v3434 = vpop.f32.mrf.mxu0
      %v3435 = vadd.f32 0.0, %v3434
      %v3436 = vpop.f32.mrf.mxu0
      %v3437 = vpop.f32.mrf.mxu0
      %v3438 = vadd.f32 0.0, %v3437
      %v3439 = vpop.f32.mrf.mxu0
      %3440 = vmatprep.mubr.bf16.mxu0 0
      %3441 = vmatmul.mubr.bf16.gmra.mxu0 %v3338
      %v3442 = vpop.f32.mrf.mxu0
      %v3443 = vadd.f32 0.0, %v3442
      %v3444 = vpop.f32.mrf.mxu0
      %v3445 = vpop.f32.mrf.mxu0
      %v3446 = vadd.f32 0.0, %v3445
      %v3447 = vpop.f32.mrf.mxu0
      %3448 = vmatprep.mubr.bf16.mxu0 0
      %3449 = vmatmul.mubr.bf16.gmra.mxu0 %v3339
      %v3450 = vpop.f32.mrf.mxu0
      %v3451 = vadd.f32 0.0, %v3450
      %v3452 = vpop.f32.mrf.mxu0
      %v3453 = vpop.f32.mrf.mxu0
      %v3454 = vadd.f32 0.0, %v3453
      %v3455 = vpop.f32.mrf.mxu0
      %3456 = vdwg.mxu0
      %v3457 = vadd.f32 %v3286, %v3427
      %v3458 = vadd.f32 %v3287, %v3430
      %v3459 = vadd.f32 %v3288, %v3435
      %v3460 = vadd.f32 %v3289, %v3438
      %v3461 = vadd.f32 %v3290, %v3443
      %v3462 = vadd.f32 %v3291, %v3446
      %v3463 = vadd.f32 %v3292, %v3451
      %v3464 = vadd.f32 %v3293, %v3454
      %v3465 = vld [vmem:[%s3294] sm:$0xf]
      %v3466 = vld [vmem:[%s3294 + $0x4] sm:$0x1]
      %v3467 = vld [vmem:[%s3294 + $0x8] sm:$0xf]
      %v3468 = vld [vmem:[%s3294 + $0xc] sm:$0x1]
      %v3469 = vld [vmem:[%s3294 + $0x10] sm:$0xf]
      %v3470 = vld [vmem:[%s3294 + $0x14] sm:$0x1]
      %v3471 = vld [vmem:[%s3294 + $0x18] sm:$0xf]
      %v3472 = vld [vmem:[%s3294 + $0x1c] sm:$0x1]
      %v3473 = vld [vmem:[%s3294 + $0x20] sm:$0xf]
      %v3474 = vld [vmem:[%s3294 + $0x24] sm:$0x1]
      %v3475 = vld [vmem:[%s3294 + $0x28] sm:$0xf]
      %v3476 = vld [vmem:[%s3294 + $0x2c] sm:$0x1]
      %v3477 = vld [vmem:[%s3294 + $0x30] sm:$0xf]
      %v3478 = vld [vmem:[%s3294 + $0x34] sm:$0x1]
      %v3479 = vld [vmem:[%s3294 + $0x38] sm:$0xf]
      %v3480 = vld [vmem:[%s3294 + $0x3c] sm:$0x1]
      %v3482 = vshrl.u32 %v3465, 16
      %v3484 = vrot.slane %v3482, 4
      %v3485 = vshll.u32 %v3465, 16
      %v3487 = vrot.slane %v3485, 5
      %v3488 = vor.u32 %v3484, %v3487
      %v3489 = vrot.slane %v3488, 4
      %v3491 = vshll.u32 %v3466, 16
      %v3493 = vrot.slane %v3491, 5
      %v3494 = vsel %vm633, %v3489, %v3493
      %v3496 = vshrl.u32 %v3467, 16
      %v3498 = vrot.slane %v3496, 4
      %v3499 = vshll.u32 %v3467, 16
      %v3501 = vrot.slane %v3499, 5
      %v3502 = vor.u32 %v3498, %v3501
      %v3503 = vrot.slane %v3502, 4
      %v3505 = vshll.u32 %v3468, 16
      %v3507 = vrot.slane %v3505, 5
      %v3508 = vsel %vm633, %v3503, %v3507
      %v3510 = vshrl.u32 %v3469, 16
      %v3512 = vrot.slane %v3510, 4
      %v3513 = vshll.u32 %v3469, 16
      %v3515 = vrot.slane %v3513, 5
      %v3516 = vor.u32 %v3512, %v3515
      %v3517 = vrot.slane %v3516, 4
      %v3519 = vshll.u32 %v3470, 16
      %v3521 = vrot.slane %v3519, 5
      %v3522 = vsel %vm633, %v3517, %v3521
      %v3524 = vshrl.u32 %v3471, 16
      %v3526 = vrot.slane %v3524, 4
      %v3527 = vshll.u32 %v3471, 16
      %v3529 = vrot.slane %v3527, 5
      %v3530 = vor.u32 %v3526, %v3529
      %v3531 = vrot.slane %v3530, 4
      %v3533 = vshll.u32 %v3472, 16
      %v3535 = vrot.slane %v3533, 5
      %v3536 = vsel %vm633, %v3531, %v3535
      %v3538 = vshrl.u32 %v3473, 16
      %v3540 = vrot.slane %v3538, 4
      %v3541 = vshll.u32 %v3473, 16
      %v3543 = vrot.slane %v3541, 5
      %v3544 = vor.u32 %v3540, %v3543
      %v3545 = vrot.slane %v3544, 4
      %v3547 = vshll.u32 %v3474, 16
      %v3549 = vrot.slane %v3547, 5
      %v3550 = vsel %vm633, %v3545, %v3549
      %v3552 = vshrl.u32 %v3475, 16
      %v3554 = vrot.slane %v3552, 4
      %v3555 = vshll.u32 %v3475, 16
      %v3557 = vrot.slane %v3555, 5
      %v3558 = vor.u32 %v3554, %v3557
      %v3559 = vrot.slane %v3558, 4
      %v3561 = vshll.u32 %v3476, 16
      %v3563 = vrot.slane %v3561, 5
      %v3564 = vsel %vm633, %v3559, %v3563
      %v3566 = vshrl.u32 %v3477, 16
      %v3568 = vrot.slane %v3566, 4
      %v3569 = vshll.u32 %v3477, 16
      %v3571 = vrot.slane %v3569, 5
      %v3572 = vor.u32 %v3568, %v3571
      %v3573 = vrot.slane %v3572, 4
      %v3575 = vshll.u32 %v3478, 16
      %v3577 = vrot.slane %v3575, 5
      %v3578 = vsel %vm633, %v3573, %v3577
      %v3580 = vshrl.u32 %v3479, 16
      %v3582 = vrot.slane %v3580, 4
      %v3583 = vshll.u32 %v3479, 16
      %v3585 = vrot.slane %v3583, 5
      %v3586 = vor.u32 %v3582, %v3585
      %v3587 = vrot.slane %v3586, 4
      %v3589 = vshll.u32 %v3480, 16
      %v3591 = vrot.slane %v3589, 5
      %v3592 = vsel %vm633, %v3587, %v3591
      %s3593 = scalar_lea.vmem %s6, 448
      %v3594 = vld [vmem:[%s3593] sm:$0xf]
      %v3595 = vld [vmem:[%s3593 + $0x4] sm:$0xf]
      %v3596 = vld [vmem:[%s3593 + $0x8] sm:$0xf]
      %v3597 = vld [vmem:[%s3593 + $0xc] sm:$0xf]
      %v3598 = vld [vmem:[%s3593 + $0x10] sm:$0xf]
      %v3599 = vld [vmem:[%s3593 + $0x14] sm:$0xf]
      %v3600 = vld [vmem:[%s3593 + $0x18] sm:$0xf]
      %v3601 = vld [vmem:[%s3593 + $0x1c] sm:$0xf]
      %v3602 = vld [vmem:[%s3593 + $0x20] sm:$0xf]
      %v3603 = vld [vmem:[%s3593 + $0x24] sm:$0xf]
      %v3604 = vld [vmem:[%s3593 + $0x28] sm:$0xf]
      %v3605 = vld [vmem:[%s3593 + $0x2c] sm:$0xf]
      %v3606 = vld [vmem:[%s3593 + $0x30] sm:$0xf]
      %v3607 = vld [vmem:[%s3593 + $0x34] sm:$0xf]
      %v3608 = vld [vmem:[%s3593 + $0x38] sm:$0xf]
      %v3609 = vld [vmem:[%s3593 + $0x3c] sm:$0xf]
      %v3610 = vunpack.c.l.b16 %v3494
      %v3611 = vunpack.c.l.b16 %v3508
      %v3612 = vunpack.c.l.b16 %v3522
      %v3613 = vunpack.c.l.b16 %v3536
      %v3614 = vunpack.c.l.b16 %v3550
      %v3615 = vunpack.c.l.b16 %v3564
      %v3616 = vunpack.c.l.b16 %v3578
      %v3617 = vunpack.c.l.b16 %v3592
      %v3618 = vpack.c.b16 %v3611, %v3610
      %v3619 = vpack.c.b16 %v3613, %v3612
      %v3620 = vpack.c.b16 %v3615, %v3614
      %v3621 = vpack.c.b16 %v3617, %v3616
      %v3642 = vunpack.c.l.b16 %v3594
      %v3643 = vunpack.c.l.b16 %v3595
      %v3644 = vunpack.c.l.b16 %v3596
      %v3645 = vunpack.c.l.b16 %v3597
      %v3646 = vunpack.c.l.b16 %v3598
      %v3647 = vunpack.c.l.b16 %v3599
      %v3648 = vunpack.c.l.b16 %v3600
      %v3649 = vunpack.c.l.b16 %v3601
      %v3650 = vunpack.c.l.b16 %v3602
      %v3651 = vunpack.c.l.b16 %v3603
      %v3652 = vunpack.c.l.b16 %v3604
      %v3653 = vunpack.c.l.b16 %v3605
      %v3654 = vunpack.c.l.b16 %v3606
      %v3655 = vunpack.c.l.b16 %v3607
      %v3656 = vunpack.c.l.b16 %v3608
      %v3657 = vunpack.c.l.b16 %v3609
      %v3658 = vpack.c.b16 %v3643, %v3642
      %v3659 = vpack.c.b16 %v3645, %v3644
      %v3660 = vpack.c.b16 %v3647, %v3646
      %v3661 = vpack.c.b16 %v3649, %v3648
      %v3662 = vpack.c.b16 %v3651, %v3650
      %v3663 = vpack.c.b16 %v3653, %v3652
      %v3664 = vpack.c.b16 %v3655, %v3654
      %v3665 = vpack.c.b16 %v3657, %v3656
      %3674 = vmatprep.subr.bf16.mxu0 0
      %3675 = vmatpush1.bf16.msra.mxu0 %v3665
      %3676 = vmatprep.subr.bf16.mxu0 0
      %3677 = vmatpush1.bf16.msra.mxu0 %v3664
      %3678 = vmatprep.subr.bf16.mxu0 0
      %3679 = vmatpush1.bf16.msra.mxu0 %v3663
      %3680 = vmatprep.subr.bf16.mxu0 0
      %3681 = vmatpush1.bf16.msra.mxu0 %v3662
      %3682 = vmatprep.subr.bf16.mxu0 0
      %3683 = vmatpush1.bf16.msra.mxu0 %v3661
      %3684 = vmatprep.subr.bf16.mxu0 0
      %3685 = vmatpush1.bf16.msra.mxu0 %v3660
      %3686 = vmatprep.subr.bf16.mxu0 0
      %3687 = vmatpush1.bf16.msra.mxu0 %v3659
      %3688 = vmatprep.subr.bf16.mxu0 0
      %3689 = vmatpush1.bf16.msra.mxu0 %v3658
      %3690 = vmatprep.subr.bf16.mxu0 0
      %3691 = vmatpush2.bf16.msra.mxu0 0
      %3692 = vmatprep.subr.bf16.mxu0 0
      %3693 = vmatpush2.bf16.msra.mxu0 0
      %3694 = vmatprep.subr.bf16.mxu0 0
      %3695 = vmatpush2.bf16.msra.mxu0 0
      %3696 = vmatprep.subr.bf16.mxu0 0
      %3697 = vmatpush2.bf16.msra.mxu0 0
      %3698 = vmatprep.subr.bf16.mxu0 0
      %3699 = vmatpush2.bf16.msra.mxu0 0
      %3700 = vmatprep.subr.bf16.mxu0 0
      %3701 = vmatpush2.bf16.msra.mxu0 0
      %3702 = vmatprep.subr.bf16.mxu0 0
      %3703 = vmatpush2.bf16.msra.mxu0 0
      %3704 = vmatprep.subr.bf16.mxu0 0
      %3705 = vmatpush2.bf16.msra.mxu0 0
      %3706 = vmatprep.mubr.bf16.mxu0 0
      %3707 = vmatmul.mubr.bf16.gmra.mxu0 %v3618
      %v3708 = vpop.f32.mrf.mxu0
      %v3709 = vadd.f32 0.0, %v3708
      %v3710 = vpop.f32.mrf.mxu0
      %v3711 = vpop.f32.mrf.mxu0
      %v3712 = vadd.f32 0.0, %v3711
      %v3713 = vpop.f32.mrf.mxu0
      %3714 = vmatprep.mubr.bf16.mxu0 0
      %3715 = vmatmul.mubr.bf16.gmra.mxu0 %v3619
      %v3716 = vpop.f32.mrf.mxu0
      %v3717 = vadd.f32 0.0, %v3716
      %v3718 = vpop.f32.mrf.mxu0
      %v3719 = vpop.f32.mrf.mxu0
      %v3720 = vadd.f32 0.0, %v3719
      %v3721 = vpop.f32.mrf.mxu0
      %3722 = vmatprep.mubr.bf16.mxu0 0
      %3723 = vmatmul.mubr.bf16.gmra.mxu0 %v3620
      %v3724 = vpop.f32.mrf.mxu0
      %v3725 = vadd.f32 0.0, %v3724
      %v3726 = vpop.f32.mrf.mxu0
      %v3727 = vpop.f32.mrf.mxu0
      %v3728 = vadd.f32 0.0, %v3727
      %v3729 = vpop.f32.mrf.mxu0
      %3730 = vmatprep.mubr.bf16.mxu0 0
      %3731 = vmatmul.mubr.bf16.gmra.mxu0 %v3621
      %v3732 = vpop.f32.mrf.mxu0
      %v3733 = vadd.f32 0.0, %v3732
      %v3734 = vpop.f32.mrf.mxu0
      %v3735 = vpop.f32.mrf.mxu0
      %v3736 = vadd.f32 0.0, %v3735
      %v3737 = vpop.f32.mrf.mxu0
      %3738 = vdwg.mxu0
      %v3739 = vadd.f32 %v3457, %v3709
      %v3740 = vadd.f32 %v3458, %v3712
      %v3741 = vadd.f32 %v3459, %v3717
      %v3742 = vadd.f32 %v3460, %v3720
      %v3743 = vadd.f32 %v3461, %v3725
      %v3744 = vadd.f32 %v3462, %v3728
      %v3745 = vadd.f32 %v3463, %v3733
      %v3746 = vadd.f32 %v3464, %v3736
      %v3747 = vld [vmem:[%s3294] sm:$0xe]
      %v3748 = vld [vmem:[%s3294 + $0x8] sm:$0xe]
      %v3749 = vld [vmem:[%s3294 + $0x10] sm:$0xe]
      %v3750 = vld [vmem:[%s3294 + $0x18] sm:$0xe]
      %v3751 = vld [vmem:[%s3294 + $0x20] sm:$0xe]
      %v3752 = vld [vmem:[%s3294 + $0x28] sm:$0xe]
      %v3753 = vld [vmem:[%s3294 + $0x30] sm:$0xe]
      %v3754 = vld [vmem:[%s3294 + $0x38] sm:$0xe]
      %v3771 = vrot.slane %v3747, 5
      %v3772 = vrot.slane %v3771, 4
      %v3773 = vrot.slane %v3466, 5
      %v3774 = vsel %vm2445, %v3772, %v3773
      %v3775 = vrot.slane %v3748, 5
      %v3776 = vrot.slane %v3775, 4
      %v3777 = vrot.slane %v3468, 5
      %v3778 = vsel %vm2445, %v3776, %v3777
      %v3779 = vrot.slane %v3749, 5
      %v3780 = vrot.slane %v3779, 4
      %v3781 = vrot.slane %v3470, 5
      %v3782 = vsel %vm2445, %v3780, %v3781
      %v3783 = vrot.slane %v3750, 5
      %v3784 = vrot.slane %v3783, 4
      %v3785 = vrot.slane %v3472, 5
      %v3786 = vsel %vm2445, %v3784, %v3785
      %v3787 = vrot.slane %v3751, 5
      %v3788 = vrot.slane %v3787, 4
      %v3789 = vrot.slane %v3474, 5
      %v3790 = vsel %vm2445, %v3788, %v3789
      %v3791 = vrot.slane %v3752, 5
      %v3792 = vrot.slane %v3791, 4
      %v3793 = vrot.slane %v3476, 5
      %v3794 = vsel %vm2445, %v3792, %v3793
      %v3795 = vrot.slane %v3753, 5
      %v3796 = vrot.slane %v3795, 4
      %v3797 = vrot.slane %v3478, 5
      %v3798 = vsel %vm2445, %v3796, %v3797
      %v3799 = vrot.slane %v3754, 5
      %v3800 = vrot.slane %v3799, 4
      %v3801 = vrot.slane %v3480, 5
      %v3802 = vsel %vm2445, %v3800, %v3801
      %s3803 = scalar_lea.vmem %s6, 512
      %v3804 = vld [vmem:[%s3803] sm:$0xf]
      %v3805 = vld [vmem:[%s3803 + $0x4] sm:$0xf]
      %v3806 = vld [vmem:[%s3803 + $0x8] sm:$0xf]
      %v3807 = vld [vmem:[%s3803 + $0xc] sm:$0xf]
      %v3808 = vld [vmem:[%s3803 + $0x10] sm:$0xf]
      %v3809 = vld [vmem:[%s3803 + $0x14] sm:$0xf]
      %v3810 = vld [vmem:[%s3803 + $0x18] sm:$0xf]
      %v3811 = vld [vmem:[%s3803 + $0x1c] sm:$0xf]
      %v3812 = vld [vmem:[%s3803 + $0x20] sm:$0xf]
      %v3813 = vld [vmem:[%s3803 + $0x24] sm:$0xf]
      %v3814 = vld [vmem:[%s3803 + $0x28] sm:$0xf]
      %v3815 = vld [vmem:[%s3803 + $0x2c] sm:$0xf]
      %v3816 = vld [vmem:[%s3803 + $0x30] sm:$0xf]
      %v3817 = vld [vmem:[%s3803 + $0x34] sm:$0xf]
      %v3818 = vld [vmem:[%s3803 + $0x38] sm:$0xf]
      %v3819 = vld [vmem:[%s3803 + $0x3c] sm:$0xf]
      %v3820 = vunpack.c.l.b16 %v3774
      %v3821 = vunpack.c.l.b16 %v3778
      %v3822 = vunpack.c.l.b16 %v3782
      %v3823 = vunpack.c.l.b16 %v3786
      %v3824 = vunpack.c.l.b16 %v3790
      %v3825 = vunpack.c.l.b16 %v3794
      %v3826 = vunpack.c.l.b16 %v3798
      %v3827 = vunpack.c.l.b16 %v3802
      %v3828 = vpack.c.b16 %v3821, %v3820
      %v3829 = vpack.c.b16 %v3823, %v3822
      %v3830 = vpack.c.b16 %v3825, %v3824
      %v3831 = vpack.c.b16 %v3827, %v3826
      %v3852 = vunpack.c.l.b16 %v3804
      %v3853 = vunpack.c.l.b16 %v3805
      %v3854 = vunpack.c.l.b16 %v3806
      %v3855 = vunpack.c.l.b16 %v3807
      %v3856 = vunpack.c.l.b16 %v3808
      %v3857 = vunpack.c.l.b16 %v3809
      %v3858 = vunpack.c.l.b16 %v3810
      %v3859 = vunpack.c.l.b16 %v3811
      %v3860 = vunpack.c.l.b16 %v3812
      %v3861 = vunpack.c.l.b16 %v3813
      %v3862 = vunpack.c.l.b16 %v3814
      %v3863 = vunpack.c.l.b16 %v3815
      %v3864 = vunpack.c.l.b16 %v3816
      %v3865 = vunpack.c.l.b16 %v3817
      %v3866 = vunpack.c.l.b16 %v3818
      %v3867 = vunpack.c.l.b16 %v3819
      %v3868 = vpack.c.b16 %v3853, %v3852
      %v3869 = vpack.c.b16 %v3855, %v3854
      %v3870 = vpack.c.b16 %v3857, %v3856
      %v3871 = vpack.c.b16 %v3859, %v3858
      %v3872 = vpack.c.b16 %v3861, %v3860
      %v3873 = vpack.c.b16 %v3863, %v3862
      %v3874 = vpack.c.b16 %v3865, %v3864
      %v3875 = vpack.c.b16 %v3867, %v3866
      %3884 = vmatprep.subr.bf16.mxu0 0
      %3885 = vmatpush1.bf16.msra.mxu0 %v3875
      %3886 = vmatprep.subr.bf16.mxu0 0
      %3887 = vmatpush1.bf16.msra.mxu0 %v3874
      %3888 = vmatprep.subr.bf16.mxu0 0
      %3889 = vmatpush1.bf16.msra.mxu0 %v3873
      %3890 = vmatprep.subr.bf16.mxu0 0
      %3891 = vmatpush1.bf16.msra.mxu0 %v3872
      %3892 = vmatprep.subr.bf16.mxu0 0
      %3893 = vmatpush1.bf16.msra.mxu0 %v3871
      %3894 = vmatprep.subr.bf16.mxu0 0
      %3895 = vmatpush1.bf16.msra.mxu0 %v3870
      %3896 = vmatprep.subr.bf16.mxu0 0
      %3897 = vmatpush1.bf16.msra.mxu0 %v3869
      %3898 = vmatprep.subr.bf16.mxu0 0
      %3899 = vmatpush1.bf16.msra.mxu0 %v3868
      %3900 = vmatprep.subr.bf16.mxu0 0
      %3901 = vmatpush2.bf16.msra.mxu0 0
      %3902 = vmatprep.subr.bf16.mxu0 0
      %3903 = vmatpush2.bf16.msra.mxu0 0
      %3904 = vmatprep.subr.bf16.mxu0 0
      %3905 = vmatpush2.bf16.msra.mxu0 0
      %3906 = vmatprep.subr.bf16.mxu0 0
      %3907 = vmatpush2.bf16.msra.mxu0 0
      %3908 = vmatprep.subr.bf16.mxu0 0
      %3909 = vmatpush2.bf16.msra.mxu0 0
      %3910 = vmatprep.subr.bf16.mxu0 0
      %3911 = vmatpush2.bf16.msra.mxu0 0
      %3912 = vmatprep.subr.bf16.mxu0 0
      %3913 = vmatpush2.bf16.msra.mxu0 0
      %3914 = vmatprep.subr.bf16.mxu0 0
      %3915 = vmatpush2.bf16.msra.mxu0 0
      %3916 = vmatprep.mubr.bf16.mxu0 0
      %3917 = vmatmul.mubr.bf16.gmra.mxu0 %v3828
      %v3918 = vpop.f32.mrf.mxu0
      %v3919 = vadd.f32 0.0, %v3918
      %v3920 = vpop.f32.mrf.mxu0
      %v3921 = vpop.f32.mrf.mxu0
      %v3922 = vadd.f32 0.0, %v3921
      %v3923 = vpop.f32.mrf.mxu0
      %3924 = vmatprep.mubr.bf16.mxu0 0
      %3925 = vmatmul.mubr.bf16.gmra.mxu0 %v3829
      %v3926 = vpop.f32.mrf.mxu0
      %v3927 = vadd.f32 0.0, %v3926
      %v3928 = vpop.f32.mrf.mxu0
      %v3929 = vpop.f32.mrf.mxu0
      %v3930 = vadd.f32 0.0, %v3929
      %v3931 = vpop.f32.mrf.mxu0
      %3932 = vmatprep.mubr.bf16.mxu0 0
      %3933 = vmatmul.mubr.bf16.gmra.mxu0 %v3830
      %v3934 = vpop.f32.mrf.mxu0
      %v3935 = vadd.f32 0.0, %v3934
      %v3936 = vpop.f32.mrf.mxu0
      %v3937 = vpop.f32.mrf.mxu0
      %v3938 = vadd.f32 0.0, %v3937
      %v3939 = vpop.f32.mrf.mxu0
      %3940 = vmatprep.mubr.bf16.mxu0 0
      %3941 = vmatmul.mubr.bf16.gmra.mxu0 %v3831
      %v3942 = vpop.f32.mrf.mxu0
      %v3943 = vadd.f32 0.0, %v3942
      %v3944 = vpop.f32.mrf.mxu0
      %v3945 = vpop.f32.mrf.mxu0
      %v3946 = vadd.f32 0.0, %v3945
      %v3947 = vpop.f32.mrf.mxu0
      %3948 = vdwg.mxu0
      %v3949 = vadd.f32 %v3739, %v3919
      %v3950 = vadd.f32 %v3740, %v3922
      %v3951 = vadd.f32 %v3741, %v3927
      %v3952 = vadd.f32 %v3742, %v3930
      %v3953 = vadd.f32 %v3743, %v3935
      %v3954 = vadd.f32 %v3744, %v3938
      %v3955 = vadd.f32 %v3745, %v3943
      %v3956 = vadd.f32 %v3746, %v3946
      %v3957 = vld [vmem:[%s7] sm:$0x1]
      %v3959 = vlaneseq
      %v3960 = vshrl.u32 %v3959, 7
      %v3961 = vsub.s32 0, %v3960
      %v3962 = vrot.slane %v3957, %v3961
      %v3964 = vadd.f32 %v3949, %v3962
      %v3965 = vadd.f32 %v3950, %v3962
      %v3966 = vadd.f32 %v3951, %v3962
      %v3967 = vadd.f32 %v3952, %v3962
      %v3968 = vadd.f32 %v3953, %v3962
      %v3969 = vadd.f32 %v3954, %v3962
      %v3970 = vadd.f32 %v3955, %v3962
      %v3971 = vadd.f32 %v3956, %v3962
      %v3972 = vld [vmem:[%s387] sm:$0xf]
      %v3973 = vld [vmem:[%s387 + $0x8] sm:$0xf]
      %v3974 = vld [vmem:[%s387 + $0x10] sm:$0xf]
      %v3975 = vld [vmem:[%s387 + $0x18] sm:$0xf]
      %v3976 = vld [vmem:[%s387 + $0x20] sm:$0xf]
      %v3977 = vld [vmem:[%s387 + $0x28] sm:$0xf]
      %v3978 = vld [vmem:[%s387 + $0x30] sm:$0xf]
      %v3979 = vld [vmem:[%s387 + $0x38] sm:$0xf]
      %v3980 = vld [vmem:[%s8] sm:$0x3]
      %v3989 = vunpack.c.l.b16 %v3972
      %v3990 = vunpack.c.l.b16 %v3973
      %v3991 = vunpack.c.l.b16 %v3974
      %v3992 = vunpack.c.l.b16 %v3975
      %v3993 = vunpack.c.l.b16 %v3976
      %v3994 = vunpack.c.l.b16 %v3977
      %v3995 = vunpack.c.l.b16 %v3978
      %v3996 = vunpack.c.l.b16 %v3979
      %v3997 = vpack.c.b16 %v3990, %v3989
      %v3998 = vpack.c.b16 %v3992, %v3991
      %v3999 = vpack.c.b16 %v3994, %v3993
      %v4000 = vpack.c.b16 %v3996, %v3995
      %v4002 = vsel %vm433, %v3997, 0
      %v4005 = vsel %vm433, %v3998, 0
      %v4008 = vsel %vm433, %v3999, 0
      %v4011 = vsel %vm433, %v4000, 0
      %v4014 = vsel %vm446, %v3980, 0
      %4016 = vmatprep.subr.bf16.mxu0 0
      %4017 = vmatpush1.bf16.msra.mxu0 0
      %4018 = vmatprep.subr.bf16.mxu0 0
      %4019 = vmatpush1.bf16.msra.mxu0 0
      %4020 = vmatprep.subr.bf16.mxu0 0
      %4021 = vmatpush1.bf16.msra.mxu0 0
      %4022 = vmatprep.subr.bf16.mxu0 0
      %4023 = vmatpush1.bf16.msra.mxu0 0
      %4024 = vmatprep.subr.bf16.mxu0 0
      %4025 = vmatpush1.bf16.msra.mxu0 0
      %4026 = vmatprep.subr.bf16.mxu0 0
      %4027 = vmatpush1.bf16.msra.mxu0 0
      %4028 = vmatprep.subr.bf16.mxu0 0
      %4029 = vmatpush1.bf16.msra.mxu0 0
      %4030 = vmatprep.subr.bf16.mxu0 0
      %4031 = vmatpush1.bf16.msra.mxu0 %v4014
      %4032 = vmatprep.subr.bf16.mxu0 0
      %4033 = vmatpush2.bf16.msra.mxu0 0
      %4034 = vmatprep.subr.bf16.mxu0 0
      %4035 = vmatpush2.bf16.msra.mxu0 0
      %4036 = vmatprep.subr.bf16.mxu0 0
      %4037 = vmatpush2.bf16.msra.mxu0 0
      %4038 = vmatprep.subr.bf16.mxu0 0
      %4039 = vmatpush2.bf16.msra.mxu0 0
      %4040 = vmatprep.subr.bf16.mxu0 0
      %4041 = vmatpush2.bf16.msra.mxu0 0
      %4042 = vmatprep.subr.bf16.mxu0 0
      %4043 = vmatpush2.bf16.msra.mxu0 0
      %4044 = vmatprep.subr.bf16.mxu0 0
      %4045 = vmatpush2.bf16.msra.mxu0 0
      %4046 = vmatprep.subr.bf16.mxu0 0
      %4047 = vmatpush2.bf16.msra.mxu0 0
      %4048 = vmatprep.mubr.bf16.mxu0 0
      %4049 = vmatmul.mubr.bf16.gmra.mxu0 %v4002
      %v4050 = vpop.f32.mrf.mxu0
      %v4051 = vadd.f32 0.0, %v4050
      %v4052 = vpop.f32.mrf.mxu0
      %v4053 = vpop.f32.mrf.mxu0
      %v4054 = vadd.f32 0.0, %v4053
      %v4055 = vpop.f32.mrf.mxu0
      %4056 = vmatprep.mubr.bf16.mxu0 0
      %4057 = vmatmul.mubr.bf16.gmra.mxu0 %v4005
      %v4058 = vpop.f32.mrf.mxu0
      %v4059 = vadd.f32 0.0, %v4058
      %v4060 = vpop.f32.mrf.mxu0
      %v4061 = vpop.f32.mrf.mxu0
      %v4062 = vadd.f32 0.0, %v4061
      %v4063 = vpop.f32.mrf.mxu0
      %4064 = vmatprep.mubr.bf16.mxu0 0
      %4065 = vmatmul.mubr.bf16.gmra.mxu0 %v4008
      %v4066 = vpop.f32.mrf.mxu0
      %v4067 = vadd.f32 0.0, %v4066
      %v4068 = vpop.f32.mrf.mxu0
      %v4069 = vpop.f32.mrf.mxu0
      %v4070 = vadd.f32 0.0, %v4069
      %v4071 = vpop.f32.mrf.mxu0
      %4072 = vmatprep.mubr.bf16.mxu0 0
      %4073 = vmatmul.mubr.bf16.gmra.mxu0 %v4011
      %v4074 = vpop.f32.mrf.mxu0
      %v4075 = vadd.f32 0.0, %v4074
      %v4076 = vpop.f32.mrf.mxu0
      %v4077 = vpop.f32.mrf.mxu0
      %v4078 = vadd.f32 0.0, %v4077
      %v4079 = vpop.f32.mrf.mxu0
      %4080 = vdwg.mxu0
      %v4081 = vadd.f32 %v3964, %v4051
      %v4082 = vadd.f32 %v3965, %v4054
      %v4083 = vadd.f32 %v3966, %v4059
      %v4084 = vadd.f32 %v3967, %v4062
      %v4085 = vadd.f32 %v3968, %v4067
      %v4086 = vadd.f32 %v3969, %v4070
      %v4087 = vadd.f32 %v3970, %v4075
      %v4088 = vadd.f32 %v3971, %v4078
      %v4089 = vmax.f32 %v4081, 0.0
      %v4090 = vmax.f32 %v4082, 0.0
      %v4091 = vmax.f32 %v4083, 0.0
      %v4092 = vmax.f32 %v4084, 0.0
      %v4093 = vmax.f32 %v4085, 0.0
      %v4094 = vmax.f32 %v4086, 0.0
      %v4095 = vmax.f32 %v4087, 0.0
      %v4096 = vmax.f32 %v4088, 0.0
      %4097 = vst [vmem:[%s392] sm:$0xff] %v4089
      %4098 = vst [vmem:[%s392 + $0x8] sm:$0xff] %v4090
      %4099 = vst [vmem:[%s392 + $0x10] sm:$0xff] %v4091
      %4100 = vst [vmem:[%s392 + $0x18] sm:$0xff] %v4092
      %4101 = vst [vmem:[%s392 + $0x20] sm:$0xff] %v4093
      %4102 = vst [vmem:[%s392 + $0x28] sm:$0xff] %v4094
      %4103 = vst [vmem:[%s392 + $0x30] sm:$0xff] %v4095
      %4104 = vst [vmem:[%s392 + $0x38] sm:$0xff] %v4096
      %p4105 = scmp.lt.s32.totalorder %s20, 1
      %s4106 = scalar_select %p4105, %s20, 1
      %s4107 = smul.addr %s4106, 8
      %s4108 = smul.addr %s4107, 8
      %s4109 = scalar_lea.vmem %s9, %s4108
      // Predicated region
      $region57: #{basic_block_pallas.1} parent=55 // pred_check
        %p4110 = pneg %p247
      $region58: #{basic_block_pallas.1} parent=55 // pred_check_branch
        %4112 = sbr.rel (%p4110) target = $region60
      $region59: #{basic_block_pallas.1} parent=55 // pred_region
        _
      $region60: #{basic_block_pallas.1} parent=55 // pred_fallthru
        _
    $region56: #{basic_block_pallas.1} parent=5 // pred_fallthru
      _
    %p4113 = scmp.le.s32.totalorder 2, %s15
    // Predicated region
    $region61: #{basic_block_pallas.1} parent=5 // pred_check
      %p4114 = pneg %p4113
    $region62: #{basic_block_pallas.1} parent=5 // pred_check_branch
      %4116 = sbr.rel (%p4114) target = $region64
    $region63: #{basic_block_pallas.1} parent=5 // pred_region
      %s4117 = ssub.s32 %s15, 2
      // Predicated region
      $region65: #{basic_block_pallas.1} parent=63 // pred_check
        %p4118 = pneg %p253
      $region66: #{basic_block_pallas.1} parent=63 // pred_check_branch
        %4120 = sbr.rel (%p4118) target = $region68
      $region67: #{basic_block_pallas.1} parent=63 // pred_region
        %p4121 = scmp.lt.s32.totalorder %s21, 1
        %s4122 = scalar_select %p4121, %s21, 1
        %s4123 = smul.addr %s4122, 8
        %s4124 = smul.addr %s4123, 8
        %s4125 = scalar_lea.vmem %s9, %s4124
      $region68: #{basic_block_pallas.1} parent=63 // pred_fallthru
        _
    $region64: #{basic_block_pallas.1} parent=5 // pred_fallthru
      _
  $region6: #{basic_block_pallas.1} parent=0 // loop_footer
    %s19 = sadd.s32 1, %s15
  $region7: #{basic_block_pallas.1} parent=0 // loop_footer_branch
    %14 = sbr.rel target = $region3
  $region8: #{basic_block_pallas.1} parent=0 // loop_exit
    _

</llo_original>
